<compile_context>
chip_gen: v7x
topology: tpu7x:2x2x1
jax: 0.10.0
libtpu: 0.0.40
codegen_flags: <defaults>
</compile_context>

<pallas_src>
import functools
import numpy as np
import jax
import jax.numpy as jnp
from jax.experimental import pallas as pl
from jax.experimental.pallas import tpu as pltpu

EPS = 1e-5                      # nn.LayerNorm default eps
NEG_INF = -1e9                  # mask fill value
VMEM_LIMIT = 32 * 1024 * 1024   # safe on v5e/v6e/v7x; >= working set at these shapes


# ----------------------------------------------------------------------------
# in-kernel helpers
# ----------------------------------------------------------------------------
def _layernorm(z, g, b):
    mu = jnp.mean(z, axis=-1, keepdims=True)
    var = jnp.mean((z - mu) ** 2, axis=-1, keepdims=True)
    return (z - mu) * jax.lax.rsqrt(var + EPS) * g + b


def _mm(a, b):
    # bf16 MXU operands (weights are already bf16 -> cast is a no-op), f32 accumulation
    return jnp.dot(a.astype(jnp.bfloat16), b.astype(jnp.bfloat16),
                   preferred_element_type=jnp.float32)


# ----------------------------------------------------------------------------
# Shared attention core: per-head scores/softmax/context batched over B,
# concat-free output projection (per-head Wo slice accumulated), residual + LN.
# ----------------------------------------------------------------------------
def _attention_core(q_proj, kv_proj, bias, wo, bo, g, be, resid_flat,
                    o_ref, a_ref, *, n_heads, d_k, d_v, B, Lq, Lk, D):
    k_off = n_heads * d_k
    q3 = q_proj.reshape(B, Lq, n_heads * d_k)
    kv3 = kv_proj.reshape(B, Lk, n_heads * (d_k + d_v))

    y = jnp.zeros((B * Lq, D), jnp.float32)
    for h in range(n_heads):                       # static loop over heads (H small)
        qh = q3[:, :, h * d_k:(h + 1) * d_k].astype(jnp.bfloat16)        # (B,Lq,dk)
        kh = kv3[:, :, h * d_k:(h + 1) * d_k].astype(jnp.bfloat16)       # (B,Lk,dk)
        vh = kv3[:, :, k_off + h * d_v:k_off + (h + 1) * d_v].astype(jnp.bfloat16)

        # scores batched over the batch dim; 1/sqrt(dk) already folded into Wq
        s = jnp.einsum('bqd,bkd->bqk', qh, kh,
                       preferred_element_type=jnp.float32) + bias        # (B,Lq,Lk)
        s = s - jnp.max(s, axis=-1, keepdims=True)
        p = jnp.exp(s)
        p = p / jnp.sum(p, axis=-1, keepdims=True)      # EXACT softmax (rows sum to 1)
        a_ref[:, h, :, :] = p                           # attention map output

        ctx = jnp.einsum('bqk,bkd->bqd', p.astype(jnp.bfloat16), vh,
                         preferred_element_type=jnp.float32)             # (B,Lq,dv)
        # concat-free: project each head's context with its Wo slice and accumulate
        y = y + _mm(ctx.reshape(B * Lq, d_v), wo[h * d_v:(h + 1) * d_v, :])

    y = y + bo
    o = _layernorm(y + resid_flat, g, be)
    o_ref[...] = o.reshape(B, Lq, D)


# ----------------------------------------------------------------------------
# Self-attention sub-layer: fused Q|K|V projection -> attention -> out proj
#                           -> residual -> LayerNorm.  Whole batch, one step.
# ----------------------------------------------------------------------------
def _slf_mha_kernel(x_ref, bias_ref, wqkv_ref, bqkv_ref, wo_ref, bo_ref,
                    g_ref, be_ref, o_ref, a_ref, *, n_heads, d_k, d_v):
    B, Lq, D = x_ref.shape
    xf = x_ref[...].reshape(B * Lq, D)                       # fold batch*seq into M
    qkv = _mm(xf, wqkv_ref[...]) + bqkv_ref[...]             # (B*Lq, H*(2dk+dv))
    q_proj = qkv[:, :n_heads * d_k]
    kv_proj = qkv[:, n_heads * d_k:]
    _attention_core(q_proj, kv_proj, bias_ref[...], wo_ref[...], bo_ref[...],
                    g_ref[...], be_ref[...], xf, o_ref, a_ref,
                    n_heads=n_heads, d_k=d_k, d_v=d_v, B=B, Lq=Lq, Lk=Lq, D=D)


def pallas_self_mha(x, bias, p, n_heads, d_k, d_v):
    B, Lq, D = x.shape
    kern = functools.partial(_slf_mha_kernel, n_heads=n_heads, d_k=d_k, d_v=d_v)
    return pl.pallas_call(
        kern,
        out_shape=(jax.ShapeDtypeStruct((B, Lq, D), jnp.float32),
                   jax.ShapeDtypeStruct((B, n_heads, Lq, Lq), jnp.float32)),
        compiler_params=pltpu.CompilerParams(vmem_limit_bytes=VMEM_LIMIT),
    )(x, bias, p["wqkv"], p["bqkv"], p["wo"], p["bo"], p["ln_g"], p["ln_b"])


# ----------------------------------------------------------------------------
# Cross-attention sub-layer: Q projection + fused K|V projection.
# ----------------------------------------------------------------------------
def _cross_mha_kernel(q_ref, kv_ref, bias_ref, wq_ref, bq_ref, wkv_ref, bkv_ref,
                      wo_ref, bo_ref, g_ref, be_ref, o_ref, a_ref,
                      *, n_heads, d_k, d_v):
    B, Lq, D = q_ref.shape
    Lk = kv_ref.shape[1]
    qf = q_ref[...].reshape(B * Lq, D)
    kvf = kv_ref[...].reshape(B * Lk, D)
    q_proj = _mm(qf, wq_ref[...]) + bq_ref[...]              # (B*Lq, H*dk)
    kv_proj = _mm(kvf, wkv_ref[...]) + bkv_ref[...]          # (B*Lk, H*(dk+dv))
    _attention_core(q_proj, kv_proj, bias_ref[...], wo_ref[...], bo_ref[...],
                    g_ref[...], be_ref[...], qf, o_ref, a_ref,
                    n_heads=n_heads, d_k=d_k, d_v=d_v, B=B, Lq=Lq, Lk=Lk, D=D)


def pallas_cross_mha(q_in, kv_in, bias, p, n_heads, d_k, d_v):
    B, Lq, D = q_in.shape
    Lk = kv_in.shape[1]
    kern = functools.partial(_cross_mha_kernel, n_heads=n_heads, d_k=d_k, d_v=d_v)
    return pl.pallas_call(
        kern,
        out_shape=(jax.ShapeDtypeStruct((B, Lq, D), jnp.float32),
                   jax.ShapeDtypeStruct((B, n_heads, Lq, Lk), jnp.float32)),
        compiler_params=pltpu.CompilerParams(vmem_limit_bytes=VMEM_LIMIT),
    )(q_in, kv_in, bias, p["wq"], p["bq"], p["wkv"], p["bkv"],
      p["wo"], p["bo"], p["ln_g"], p["ln_b"])


# ----------------------------------------------------------------------------
# Fused FFN + residual + LayerNorm over the flattened (B*L, D) activation.
# ----------------------------------------------------------------------------
def _ffn_ln_kernel(x_ref, w1_ref, b1_ref, w2_ref, b2_ref, g_ref, be_ref, o_ref):
    x = x_ref[...]                                           # (bm, D) f32
    h = jnp.maximum(_mm(x, w1_ref[...]) + b1_ref[...], 0.0)
    y = _mm(h, w2_ref[...]) + b2_ref[...]
    o_ref[...] = _layernorm(y + x, g_ref[...], be_ref[...])


def pallas_ffn_ln(x, w1, b1, w2, b2, g, be, block_m=512):
    # block_m: sweep 512-1024 on v5e/v6e, 256-512 on v7x (64 MiB VMEM).
    B, L, D = x.shape
    Hh = w1.shape[1]
    M = B * L
    xf = x.reshape(M, D)
    bm = min(block_m, M)
    n_blocks = pl.cdiv(M, bm)
    Mp = n_blocks * bm
    if Mp != M:                                              # remainder handling via pad
        xf = jnp.pad(xf, ((0, Mp - M), (0, 0)))
    out = pl.pallas_call(
        _ffn_ln_kernel,
        out_shape=jax.ShapeDtypeStruct((Mp, D), jnp.float32),
        grid=(n_blocks,),
        in_specs=[
            pl.BlockSpec((bm, D), lambda i: (i, 0)),
            pl.BlockSpec((D, Hh), lambda i: (0, 0)),
            pl.BlockSpec((1, Hh), lambda i: (0, 0)),
            pl.BlockSpec((Hh, D), lambda i: (0, 0)),
            pl.BlockSpec((1, D), lambda i: (0, 0)),
            pl.BlockSpec((1, D), lambda i: (0, 0)),
            pl.BlockSpec((1, D), lambda i: (0, 0)),
        ],
        out_specs=pl.BlockSpec((bm, D), lambda i: (i, 0)),
        compiler_params=pltpu.CompilerParams(
            dimension_semantics=("parallel",),
            vmem_limit_bytes=VMEM_LIMIT),
    )(xf, w1, b1, w2, b2, g, be)
    return out[:M].reshape(B, L, D)


# ----------------------------------------------------------------------------
# Decoder glue (masks, embedding gather) in plain JAX; compute in kernels above
# ----------------------------------------------------------------------------
def padding_mask(seq_q, seq_k, pad_id=0):
    B, Lq = seq_q.shape
    Lk = seq_k.shape[1]
    return jnp.broadcast_to((seq_k == pad_id)[:, None, :], (B, Lq, Lk))


def subsequent_mask(seq):
    B, L = seq.shape
    m = jnp.triu(jnp.ones((L, L), dtype=bool), k=1)
    return jnp.broadcast_to(m[None], (B, L, L))


def mask_to_bias(mask):
    # compact additive bias (B, Lq, Lk); head broadcast happens in-kernel
    return jnp.where(mask, NEG_INF, 0.0).astype(jnp.float32)


def decoder_forward(params, tgt_seq, tgt_pos, src_seq, enc_outputs, cfg):
    n_heads, d_k, d_v = cfg["n_heads"], cfg["d_k"], cfg["d_v"]

    slf_bias = mask_to_bias(padding_mask(tgt_seq, tgt_seq) | subsequent_mask(tgt_seq))
    inter_bias = mask_to_bias(padding_mask(tgt_seq, src_seq))

    # TODO(synk): embedding / positional-table gathers stay in XLA (cheap gathers)
    output = params["emb"][tgt_seq] + params["pos"][tgt_pos]

    outputs, slf_attns, inter_attns = [], [], []
    for li, lp in enumerate(params["layers"]):
        enc_out = enc_outputs[li]
        output, slf_attn = pallas_self_mha(output, slf_bias,
                                           lp["slf"], n_heads, d_k, d_v)
        output, inter_attn = pallas_cross_mha(output, enc_out, inter_bias,
                                              lp["inter"], n_heads, d_k, d_v)
        output = pallas_ffn_ln(output, lp["ffn_w1"], lp["ffn_b1"],
                               lp["ffn_w2"], lp["ffn_b2"],
                               lp["ffn_ln_g"], lp["ffn_ln_b"])
        outputs.append(output)
        slf_attns.append(slf_attn)
        inter_attns.append(inter_attn)
    return outputs, slf_attns, inter_attns


# ----------------------------------------------------------------------------
# Deterministic parameter initialization (weights pre-cast to bf16,
# 1/sqrt(d_k) folded into Wq, fused Q|K|V for self-attention, fused K|V else).
# ----------------------------------------------------------------------------
def sinusoid_table(n_pos, d, padding_idx=0):
    pos = np.arange(n_pos)[:, None]
    i = np.arange(d)[None, :]
    angle = pos / np.power(10000.0, 2 * (i // 2) / d)
    tab = np.zeros((n_pos, d), dtype=np.float32)
    tab[:, 0::2] = np.sin(angle[:, 0::2])
    tab[:, 1::2] = np.cos(angle[:, 1::2])
    tab[padding_idx] = 0.0
    return jnp.asarray(tab)


def init_params(key, cfg):
    V, max_len = cfg["vocab_size"], cfg["max_len"]
    dm, de, dh = cfg["d_model"], cfg["d_emb"], cfg["d_hidden"]
    H, dk, dv, nl = cfg["n_heads"], cfg["d_k"], cfg["d_v"], cfg["n_layers"]
    scale = 1.0 / float(np.sqrt(dk))

    def normal(k, shape, s=0.02):
        return s * jax.random.normal(k, shape, dtype=jnp.float32)

    keys = jax.random.split(key, 1 + nl * 10)
    emb = normal(keys[0], (V, de)).at[cfg["pad_id"]].set(0.0)
    params = {"emb": emb, "pos": sinusoid_table(max_len + 1, de), "layers": []}

    ki = 1
    for _ in range(nl):
        k = keys[ki:ki + 10]; ki += 10
        # self-attention: fused Q|K|V weight; scale folded into Wq (bq is zero;
        # a non-zero bq would need the same folding since scale applies post-proj)
        wq = normal(k[0], (dm, H * dk)) * scale
        wk = normal(k[1], (dm, H * dk))
        wv = normal(k[2], (dm, H * dv))
        slf = {
            "wqkv": jnp.concatenate([wq, wk, wv], axis=1).astype(jnp.bfloat16),
            "bqkv": jnp.zeros((1, H * (2 * dk + dv)), jnp.float32),
            "wo": normal(k[3], (H * dv, dm)).astype(jnp.bfloat16),
            "bo": jnp.zeros((1, dm), jnp.float32),
            "ln_g": jnp.ones((1, dm), jnp.float32),
            "ln_b": jnp.zeros((1, dm), jnp.float32),
        }
        # cross-attention: separate Q projection, fused K|V projection
        wq2 = normal(k[4], (dm, H * dk)) * scale
        wk2 = normal(k[5], (dm, H * dk))
        wv2 = normal(k[6], (dm, H * dv))
        inter = {
            "wq": wq2.astype(jnp.bfloat16),
            "bq": jnp.zeros((1, H * dk), jnp.float32),
            "wkv": jnp.concatenate([wk2, wv2], axis=1).astype(jnp.bfloat16),
            "bkv": jnp.zeros((1, H * (dk + dv)), jnp.float32),
            "wo": normal(k[7], (H * dv, dm)).astype(jnp.bfloat16),
            "bo": jnp.zeros((1, dm), jnp.float32),
            "ln_g": jnp.ones((1, dm), jnp.float32),
            "ln_b": jnp.zeros((1, dm), jnp.float32),
        }
        layer = {
            "slf": slf, "inter": inter,
            "ffn_w1": normal(k[8], (dm, dh)).astype(jnp.bfloat16),
            "ffn_b1": jnp.zeros((1, dh), jnp.float32),
            "ffn_w2": normal(k[9], (dh, dm)).astype(jnp.bfloat16),
            "ffn_b2": jnp.zeros((1, dm), jnp.float32),
            "ffn_ln_g": jnp.ones((1, dm), jnp.float32),
            "ffn_ln_b": jnp.zeros((1, dm), jnp.float32),
        }
        params["layers"].append(layer)
    return params


# ----------------------------------------------------------------------------
if __name__ == "__main__":
    cfg = dict(vocab_size=50, max_len=16, n_layers=2, d_model=32, d_emb=32,
               d_hidden=64, n_heads=4, d_k=8, d_v=8, pad_id=0)
    B, Lt, Ls = 2, 8, 8

    key = jax.random.PRNGKey(0)
    k_par, k_enc = jax.random.split(key)
    params = init_params(k_par, cfg)

    tgt_seq = jnp.array([[5, 9, 3, 7, 2, 0, 0, 0],
                         [4, 8, 6, 1, 3, 9, 2, 0]], dtype=jnp.int32)
    src_seq = jnp.array([[7, 2, 5, 11, 0, 0, 0, 0],
                         [3, 6, 9, 12, 4, 1, 0, 0]], dtype=jnp.int32)
    pos_idx = jnp.arange(1, Lt + 1, dtype=jnp.int32)[None, :]
    tgt_pos = jnp.where(tgt_seq != cfg["pad_id"], pos_idx, 0)

    # one encoder output per decoder layer (as in `zip(self.layers, enc_outputs)`)
    enc_outputs = 0.1 * jax.random.normal(
        k_enc, (cfg["n_layers"], B, Ls, cfg["d_model"]), dtype=jnp.float32)

    fwd = jax.jit(functools.partial(decoder_forward, cfg=cfg))
    outputs, slf_attns, inter_attns = fwd(
        params, tgt_seq, tgt_pos, src_seq, enc_outputs)

    outs = jax.block_until_ready(jnp.stack(outputs))
    slfs = jax.block_until_ready(jnp.stack(slf_attns))
    ints = jax.block_until_ready(jnp.stack(inter_attns))

    assert outs.shape == (cfg["n_layers"], B, Lt, cfg["d_model"])
    assert slfs.shape == (cfg["n_layers"], B, cfg["n_heads"], Lt, Lt)
    assert ints.shape == (cfg["n_layers"], B, cfg["n_heads"], Lt, Ls)
    assert bool(jnp.all(jnp.isfinite(outs)))
    # exact softmax -> attention rows sum to 1
    assert bool(jnp.allclose(slfs.sum(-1), 1.0, atol=1e-3))
    assert bool(jnp.allclose(ints.sum(-1), 1.0, atol=1e-3))
    print("KERNEL_OK")
</pallas_src>

<mosaic_0001>
module attributes {stable_mosaic.version = 11 : i64} {
  func.func @_slf_mha_kernel(%arg0: memref<2x8x32xf32, #tpu.memory_space<vmem>>, %arg1: memref<2x8x8xf32, #tpu.memory_space<vmem>>, %arg2: memref<32x96xbf16, #tpu.memory_space<vmem>>, %arg3: memref<1x96xf32, #tpu.memory_space<vmem>>, %arg4: memref<32x32xbf16, #tpu.memory_space<vmem>>, %arg5: memref<1x32xf32, #tpu.memory_space<vmem>>, %arg6: memref<1x32xf32, #tpu.memory_space<vmem>>, %arg7: memref<1x32xf32, #tpu.memory_space<vmem>>, %arg8: memref<2x8x32xf32, #tpu.memory_space<vmem>>, %arg9: memref<2x4x8x8xf32, #tpu.memory_space<vmem>>) attributes {dimension_semantics = [], scalar_prefetch = 0 : i64, scratch_operands = 0 : i64, tpu.core_type = #tpu.core_type<tc>} {
    %c0 = arith.constant 0 : index
    %c0_0 = arith.constant 0 : index
    %c0_1 = arith.constant 0 : index
    %0 = vector.load %arg0[%c0, %c0_0, %c0_1] : memref<2x8x32xf32, #tpu.memory_space<vmem>>, vector<2x8x32xf32>
    %1 = vector.shape_cast %0 : vector<2x8x32xf32> to vector<16x32xf32>
    %c0_2 = arith.constant 0 : index
    %c0_3 = arith.constant 0 : index
    %2 = vector.load %arg2[%c0_2, %c0_3] : memref<32x96xbf16, #tpu.memory_space<vmem>>, vector<32x96xbf16>
    %3 = arith.truncf %1 : vector<16x32xf32> to vector<16x32xbf16>
    %cst = arith.constant dense<0.000000e+00> : vector<16x96xf32>
    %4 = tpu.matmul %3, %2, %cst {dimension_numbers = #tpu.dot_dimension_numbers<[1], [0], [0], [1], [0, 0, 1, 1], [], []>} : vector<16x32xbf16>, vector<32x96xbf16>, vector<16x96xf32> -> vector<16x96xf32>
    %c0_4 = arith.constant 0 : index
    %c0_5 = arith.constant 0 : index
    %5 = vector.load %arg3[%c0_4, %c0_5] : memref<1x96xf32, #tpu.memory_space<vmem>>, vector<1x96xf32>
    %6 = vector.broadcast %5 : vector<1x96xf32> to vector<16x96xf32>
    %7 = arith.addf %4, %6 : vector<16x96xf32>
    %8 = vector.extract_strided_slice %7 {offsets = [0, 0], sizes = [16, 32], strides = [1, 1]} : vector<16x96xf32> to vector<16x32xf32>
    %9 = vector.extract_strided_slice %7 {offsets = [0, 32], sizes = [16, 64], strides = [1, 1]} : vector<16x96xf32> to vector<16x64xf32>
    %c0_6 = arith.constant 0 : index
    %c0_7 = arith.constant 0 : index
    %c0_8 = arith.constant 0 : index
    %10 = vector.load %arg1[%c0_6, %c0_7, %c0_8] : memref<2x8x8xf32, #tpu.memory_space<vmem>>, vector<2x8x8xf32>
    %c0_9 = arith.constant 0 : index
    %c0_10 = arith.constant 0 : index
    %11 = vector.load %arg4[%c0_9, %c0_10] : memref<32x32xbf16, #tpu.memory_space<vmem>>, vector<32x32xbf16>
    %c0_11 = arith.constant 0 : index
    %c0_12 = arith.constant 0 : index
    %12 = vector.load %arg5[%c0_11, %c0_12] : memref<1x32xf32, #tpu.memory_space<vmem>>, vector<1x32xf32>
    %c0_13 = arith.constant 0 : index
    %c0_14 = arith.constant 0 : index
    %13 = vector.load %arg6[%c0_13, %c0_14] : memref<1x32xf32, #tpu.memory_space<vmem>>, vector<1x32xf32>
    %c0_15 = arith.constant 0 : index
    %c0_16 = arith.constant 0 : index
    %14 = vector.load %arg7[%c0_15, %c0_16] : memref<1x32xf32, #tpu.memory_space<vmem>>, vector<1x32xf32>
    %15 = vector.shape_cast %8 : vector<16x32xf32> to vector<2x8x32xf32>
    %16 = vector.shape_cast %9 : vector<16x64xf32> to vector<2x8x64xf32>
    %cst_17 = arith.constant 0.000000e+00 : f32
    %17 = vector.broadcast %cst_17 : f32 to vector<16x32xf32>
    %18 = vector.extract_strided_slice %15 {offsets = [0, 0, 0], sizes = [2, 8, 8], strides = [1, 1, 1]} : vector<2x8x32xf32> to vector<2x8x8xf32>
    %19 = arith.truncf %18 : vector<2x8x8xf32> to vector<2x8x8xbf16>
    %20 = vector.extract_strided_slice %16 {offsets = [0, 0, 0], sizes = [2, 8, 8], strides = [1, 1, 1]} : vector<2x8x64xf32> to vector<2x8x8xf32>
    %21 = arith.truncf %20 : vector<2x8x8xf32> to vector<2x8x8xbf16>
    %22 = vector.extract_strided_slice %16 {offsets = [0, 0, 32], sizes = [2, 8, 8], strides = [1, 1, 1]} : vector<2x8x64xf32> to vector<2x8x8xf32>
    %23 = arith.truncf %22 : vector<2x8x8xf32> to vector<2x8x8xbf16>
    "tpu.trace_start"() <{level = 10 : i32, message = "bqd,bkd->bqk"}> : () -> ()
    %cst_18 = arith.constant dense<0.000000e+00> : vector<2x8x8xf32>
    %24 = tpu.matmul %19, %21, %cst_18 {dimension_numbers = #tpu.dot_dimension_numbers<[2], [2], [1], [1], [0, 0, 0, 1, 1, 1], [0], [0]>} : vector<2x8x8xbf16>, vector<2x8x8xbf16>, vector<2x8x8xf32> -> vector<2x8x8xf32>
    "tpu.trace_stop"() : () -> ()
    %25 = arith.addf %24, %10 : vector<2x8x8xf32>
    %cst_19 = arith.constant dense<0xFF800000> : vector<2x8xf32>
    %26 = vector.multi_reduction <maximumf>, %25, %cst_19 [2] : vector<2x8x8xf32> to vector<2x8xf32>
    %27 = vector.shape_cast %26 : vector<2x8xf32> to vector<2x8x1xf32>
    %28 = vector.broadcast %27 : vector<2x8x1xf32> to vector<2x8x8xf32>
    %29 = arith.subf %25, %28 : vector<2x8x8xf32>
    %30 = math.exp %29 : vector<2x8x8xf32>
    %cst_20 = arith.constant dense<0.000000e+00> : vector<2x8xf32>
    %31 = vector.multi_reduction <add>, %30, %cst_20 [2] : vector<2x8x8xf32> to vector<2x8xf32>
    %32 = vector.shape_cast %31 : vector<2x8xf32> to vector<2x8x1xf32>
    %33 = vector.broadcast %32 : vector<2x8x1xf32> to vector<2x8x8xf32>
    %34 = arith.divf %30, %33 : vector<2x8x8xf32>
    %c0_21 = arith.constant 0 : index
    %c0_22 = arith.constant 0 : index
    %c0_23 = arith.constant 0 : index
    %c0_24 = arith.constant 0 : index
    %35 = vector.load %arg9[%c0_21, %c0_22, %c0_23, %c0_24] : memref<2x4x8x8xf32, #tpu.memory_space<vmem>>, vector<2x1x8x8xf32>
    %36 = vector.shape_cast %35 : vector<2x1x8x8xf32> to vector<2x8x8xf32>
    %37 = vector.shape_cast %34 : vector<2x8x8xf32> to vector<2x1x8x8xf32>
    tpu.vector_store %arg9[%c0_21, %c0_22, %c0_23, %c0_24], %37 {strides = array<i32>} : memref<2x4x8x8xf32, #tpu.memory_space<vmem>>, vector<2x1x8x8xf32>,
    %38 = arith.truncf %34 : vector<2x8x8xf32> to vector<2x8x8xbf16>
    "tpu.trace_start"() <{level = 10 : i32, message = "bqk,bkd->bqd"}> : () -> ()
    %cst_25 = arith.constant dense<0.000000e+00> : vector<2x8x8xf32>
    %39 = tpu.matmul %38, %23, %cst_25 {dimension_numbers = #tpu.dot_dimension_numbers<[2], [1], [1], [2], [0, 0, 0, 1, 1, 2], [0], [0]>} : vector<2x8x8xbf16>, vector<2x8x8xbf16>, vector<2x8x8xf32> -> vector<2x8x8xf32>
    "tpu.trace_stop"() : () -> ()
    %40 = vector.shape_cast %39 : vector<2x8x8xf32> to vector<16x8xf32>
    %41 = vector.extract_strided_slice %11 {offsets = [0, 0], sizes = [8, 32], strides = [1, 1]} : vector<32x32xbf16> to vector<8x32xbf16>
    %42 = arith.truncf %40 : vector<16x8xf32> to vector<16x8xbf16>
    %cst_26 = arith.constant dense<0.000000e+00> : vector<16x32xf32>
    %43 = tpu.matmul %42, %41, %cst_26 {dimension_numbers = #tpu.dot_dimension_numbers<[1], [0], [0], [1], [0, 0, 1, 1], [], []>} : vector<16x8xbf16>, vector<8x32xbf16>, vector<16x32xf32> -> vector<16x32xf32>
    %44 = arith.addf %17, %43 : vector<16x32xf32>
    %45 = vector.extract_strided_slice %15 {offsets = [0, 0, 8], sizes = [2, 8, 8], strides = [1, 1, 1]} : vector<2x8x32xf32> to vector<2x8x8xf32>
    %46 = arith.truncf %45 : vector<2x8x8xf32> to vector<2x8x8xbf16>
    %47 = vector.extract_strided_slice %16 {offsets = [0, 0, 8], sizes = [2, 8, 8], strides = [1, 1, 1]} : vector<2x8x64xf32> to vector<2x8x8xf32>
    %48 = arith.truncf %47 : vector<2x8x8xf32> to vector<2x8x8xbf16>
    %49 = vector.extract_strided_slice %16 {offsets = [0, 0, 40], sizes = [2, 8, 8], strides = [1, 1, 1]} : vector<2x8x64xf32> to vector<2x8x8xf32>
    %50 = arith.truncf %49 : vector<2x8x8xf32> to vector<2x8x8xbf16>
    "tpu.trace_start"() <{level = 10 : i32, message = "bqd,bkd->bqk"}> : () -> ()
    %cst_27 = arith.constant dense<0.000000e+00> : vector<2x8x8xf32>
    %51 = tpu.matmul %46, %48, %cst_27 {dimension_numbers = #tpu.dot_dimension_numbers<[2], [2], [1], [1], [0, 0, 0, 1, 1, 1], [0], [0]>} : vector<2x8x8xbf16>, vector<2x8x8xbf16>, vector<2x8x8xf32> -> vector<2x8x8xf32>
    "tpu.trace_stop"() : () -> ()
    %52 = arith.addf %51, %10 : vector<2x8x8xf32>
    %cst_28 = arith.constant dense<0xFF800000> : vector<2x8xf32>
    %53 = vector.multi_reduction <maximumf>, %52, %cst_28 [2] : vector<2x8x8xf32> to vector<2x8xf32>
    %54 = vector.shape_cast %53 : vector<2x8xf32> to vector<2x8x1xf32>
    %55 = vector.broadcast %54 : vector<2x8x1xf32> to vector<2x8x8xf32>
    %56 = arith.subf %52, %55 : vector<2x8x8xf32>
    %57 = math.exp %56 : vector<2x8x8xf32>
    %cst_29 = arith.constant dense<0.000000e+00> : vector<2x8xf32>
    %58 = vector.multi_reduction <add>, %57, %cst_29 [2] : vector<2x8x8xf32> to vector<2x8xf32>
    %59 = vector.shape_cast %58 : vector<2x8xf32> to vector<2x8x1xf32>
    %60 = vector.broadcast %59 : vector<2x8x1xf32> to vector<2x8x8xf32>
    %61 = arith.divf %57, %60 : vector<2x8x8xf32>
    %c0_30 = arith.constant 0 : index
    %c1 = arith.constant 1 : index
    %c0_31 = arith.constant 0 : index
    %c0_32 = arith.constant 0 : index
    %62 = vector.load %arg9[%c0_30, %c1, %c0_31, %c0_32] : memref<2x4x8x8xf32, #tpu.memory_space<vmem>>, vector<2x1x8x8xf32>
    %63 = vector.shape_cast %62 : vector<2x1x8x8xf32> to vector<2x8x8xf32>
    %64 = vector.shape_cast %61 : vector<2x8x8xf32> to vector<2x1x8x8xf32>
    tpu.vector_store %arg9[%c0_30, %c1, %c0_31, %c0_32], %64 {strides = array<i32>} : memref<2x4x8x8xf32, #tpu.memory_space<vmem>>, vector<2x1x8x8xf32>,
    %65 = arith.truncf %61 : vector<2x8x8xf32> to vector<2x8x8xbf16>
    "tpu.trace_start"() <{level = 10 : i32, message = "bqk,bkd->bqd"}> : () -> ()
    %cst_33 = arith.constant dense<0.000000e+00> : vector<2x8x8xf32>
    %66 = tpu.matmul %65, %50, %cst_33 {dimension_numbers = #tpu.dot_dimension_numbers<[2], [1], [1], [2], [0, 0, 0, 1, 1, 2], [0], [0]>} : vector<2x8x8xbf16>, vector<2x8x8xbf16>, vector<2x8x8xf32> -> vector<2x8x8xf32>
    "tpu.trace_stop"() : () -> ()
    %67 = vector.shape_cast %66 : vector<2x8x8xf32> to vector<16x8xf32>
    %68 = vector.extract_strided_slice %11 {offsets = [8, 0], sizes = [8, 32], strides = [1, 1]} : vector<32x32xbf16> to vector<8x32xbf16>
    %69 = arith.truncf %67 : vector<16x8xf32> to vector<16x8xbf16>
    %cst_34 = arith.constant dense<0.000000e+00> : vector<16x32xf32>
    %70 = tpu.matmul %69, %68, %cst_34 {dimension_numbers = #tpu.dot_dimension_numbers<[1], [0], [0], [1], [0, 0, 1, 1], [], []>} : vector<16x8xbf16>, vector<8x32xbf16>, vector<16x32xf32> -> vector<16x32xf32>
    %71 = arith.addf %44, %70 : vector<16x32xf32>
    %72 = vector.extract_strided_slice %15 {offsets = [0, 0, 16], sizes = [2, 8, 8], strides = [1, 1, 1]} : vector<2x8x32xf32> to vector<2x8x8xf32>
    %73 = arith.truncf %72 : vector<2x8x8xf32> to vector<2x8x8xbf16>
    %74 = vector.extract_strided_slice %16 {offsets = [0, 0, 16], sizes = [2, 8, 8], strides = [1, 1, 1]} : vector<2x8x64xf32> to vector<2x8x8xf32>
    %75 = arith.truncf %74 : vector<2x8x8xf32> to vector<2x8x8xbf16>
    %76 = vector.extract_strided_slice %16 {offsets = [0, 0, 48], sizes = [2, 8, 8], strides = [1, 1, 1]} : vector<2x8x64xf32> to vector<2x8x8xf32>
    %77 = arith.truncf %76 : vector<2x8x8xf32> to vector<2x8x8xbf16>
    "tpu.trace_start"() <{level = 10 : i32, message = "bqd,bkd->bqk"}> : () -> ()
    %cst_35 = arith.constant dense<0.000000e+00> : vector<2x8x8xf32>
    %78 = tpu.matmul %73, %75, %cst_35 {dimension_numbers = #tpu.dot_dimension_numbers<[2], [2], [1], [1], [0, 0, 0, 1, 1, 1], [0], [0]>} : vector<2x8x8xbf16>, vector<2x8x8xbf16>, vector<2x8x8xf32> -> vector<2x8x8xf32>
    "tpu.trace_stop"() : () -> ()
    %79 = arith.addf %78, %10 : vector<2x8x8xf32>
    %cst_36 = arith.constant dense<0xFF800000> : vector<2x8xf32>
    %80 = vector.multi_reduction <maximumf>, %79, %cst_36 [2] : vector<2x8x8xf32> to vector<2x8xf32>
    %81 = vector.shape_cast %80 : vector<2x8xf32> to vector<2x8x1xf32>
    %82 = vector.broadcast %81 : vector<2x8x1xf32> to vector<2x8x8xf32>
    %83 = arith.subf %79, %82 : vector<2x8x8xf32>
    %84 = math.exp %83 : vector<2x8x8xf32>
    %cst_37 = arith.constant dense<0.000000e+00> : vector<2x8xf32>
    %85 = vector.multi_reduction <add>, %84, %cst_37 [2] : vector<2x8x8xf32> to vector<2x8xf32>
    %86 = vector.shape_cast %85 : vector<2x8xf32> to vector<2x8x1xf32>
    %87 = vector.broadcast %86 : vector<2x8x1xf32> to vector<2x8x8xf32>
    %88 = arith.divf %84, %87 : vector<2x8x8xf32>
    %c0_38 = arith.constant 0 : index
    %c2 = arith.constant 2 : index
    %c0_39 = arith.constant 0 : index
    %c0_40 = arith.constant 0 : index
    %89 = vector.load %arg9[%c0_38, %c2, %c0_39, %c0_40] : memref<2x4x8x8xf32, #tpu.memory_space<vmem>>, vector<2x1x8x8xf32>
    %90 = vector.shape_cast %89 : vector<2x1x8x8xf32> to vector<2x8x8xf32>
    %91 = vector.shape_cast %88 : vector<2x8x8xf32> to vector<2x1x8x8xf32>
    tpu.vector_store %arg9[%c0_38, %c2, %c0_39, %c0_40], %91 {strides = array<i32>} : memref<2x4x8x8xf32, #tpu.memory_space<vmem>>, vector<2x1x8x8xf32>,
    %92 = arith.truncf %88 : vector<2x8x8xf32> to vector<2x8x8xbf16>
    "tpu.trace_start"() <{level = 10 : i32, message = "bqk,bkd->bqd"}> : () -> ()
    %cst_41 = arith.constant dense<0.000000e+00> : vector<2x8x8xf32>
    %93 = tpu.matmul %92, %77, %cst_41 {dimension_numbers = #tpu.dot_dimension_numbers<[2], [1], [1], [2], [0, 0, 0, 1, 1, 2], [0], [0]>} : vector<2x8x8xbf16>, vector<2x8x8xbf16>, vector<2x8x8xf32> -> vector<2x8x8xf32>
    "tpu.trace_stop"() : () -> ()
    %94 = vector.shape_cast %93 : vector<2x8x8xf32> to vector<16x8xf32>
    %95 = vector.extract_strided_slice %11 {offsets = [16, 0], sizes = [8, 32], strides = [1, 1]} : vector<32x32xbf16> to vector<8x32xbf16>
    %96 = arith.truncf %94 : vector<16x8xf32> to vector<16x8xbf16>
    %cst_42 = arith.constant dense<0.000000e+00> : vector<16x32xf32>
    %97 = tpu.matmul %96, %95, %cst_42 {dimension_numbers = #tpu.dot_dimension_numbers<[1], [0], [0], [1], [0, 0, 1, 1], [], []>} : vector<16x8xbf16>, vector<8x32xbf16>, vector<16x32xf32> -> vector<16x32xf32>
    %98 = arith.addf %71, %97 : vector<16x32xf32>
    %99 = vector.extract_strided_slice %15 {offsets = [0, 0, 24], sizes = [2, 8, 8], strides = [1, 1, 1]} : vector<2x8x32xf32> to vector<2x8x8xf32>
    %100 = arith.truncf %99 : vector<2x8x8xf32> to vector<2x8x8xbf16>
    %101 = vector.extract_strided_slice %16 {offsets = [0, 0, 24], sizes = [2, 8, 8], strides = [1, 1, 1]} : vector<2x8x64xf32> to vector<2x8x8xf32>
    %102 = arith.truncf %101 : vector<2x8x8xf32> to vector<2x8x8xbf16>
    %103 = vector.extract_strided_slice %16 {offsets = [0, 0, 56], sizes = [2, 8, 8], strides = [1, 1, 1]} : vector<2x8x64xf32> to vector<2x8x8xf32>
    %104 = arith.truncf %103 : vector<2x8x8xf32> to vector<2x8x8xbf16>
    "tpu.trace_start"() <{level = 10 : i32, message = "bqd,bkd->bqk"}> : () -> ()
    %cst_43 = arith.constant dense<0.000000e+00> : vector<2x8x8xf32>
    %105 = tpu.matmul %100, %102, %cst_43 {dimension_numbers = #tpu.dot_dimension_numbers<[2], [2], [1], [1], [0, 0, 0, 1, 1, 1], [0], [0]>} : vector<2x8x8xbf16>, vector<2x8x8xbf16>, vector<2x8x8xf32> -> vector<2x8x8xf32>
    "tpu.trace_stop"() : () -> ()
    %106 = arith.addf %105, %10 : vector<2x8x8xf32>
    %cst_44 = arith.constant dense<0xFF800000> : vector<2x8xf32>
    %107 = vector.multi_reduction <maximumf>, %106, %cst_44 [2] : vector<2x8x8xf32> to vector<2x8xf32>
    %108 = vector.shape_cast %107 : vector<2x8xf32> to vector<2x8x1xf32>
    %109 = vector.broadcast %108 : vector<2x8x1xf32> to vector<2x8x8xf32>
    %110 = arith.subf %106, %109 : vector<2x8x8xf32>
    %111 = math.exp %110 : vector<2x8x8xf32>
    %cst_45 = arith.constant dense<0.000000e+00> : vector<2x8xf32>
    %112 = vector.multi_reduction <add>, %111, %cst_45 [2] : vector<2x8x8xf32> to vector<2x8xf32>
    %113 = vector.shape_cast %112 : vector<2x8xf32> to vector<2x8x1xf32>
    %114 = vector.broadcast %113 : vector<2x8x1xf32> to vector<2x8x8xf32>
    %115 = arith.divf %111, %114 : vector<2x8x8xf32>
    %c0_46 = arith.constant 0 : index
    %c3 = arith.constant 3 : index
    %c0_47 = arith.constant 0 : index
    %c0_48 = arith.constant 0 : index
    %116 = vector.load %arg9[%c0_46, %c3, %c0_47, %c0_48] : memref<2x4x8x8xf32, #tpu.memory_space<vmem>>, vector<2x1x8x8xf32>
    %117 = vector.shape_cast %116 : vector<2x1x8x8xf32> to vector<2x8x8xf32>
    %118 = vector.shape_cast %115 : vector<2x8x8xf32> to vector<2x1x8x8xf32>
    tpu.vector_store %arg9[%c0_46, %c3, %c0_47, %c0_48], %118 {strides = array<i32>} : memref<2x4x8x8xf32, #tpu.memory_space<vmem>>, vector<2x1x8x8xf32>,
    %119 = arith.truncf %115 : vector<2x8x8xf32> to vector<2x8x8xbf16>
    "tpu.trace_start"() <{level = 10 : i32, message = "bqk,bkd->bqd"}> : () -> ()
    %cst_49 = arith.constant dense<0.000000e+00> : vector<2x8x8xf32>
    %120 = tpu.matmul %119, %104, %cst_49 {dimension_numbers = #tpu.dot_dimension_numbers<[2], [1], [1], [2], [0, 0, 0, 1, 1, 2], [0], [0]>} : vector<2x8x8xbf16>, vector<2x8x8xbf16>, vector<2x8x8xf32> -> vector<2x8x8xf32>
    "tpu.trace_stop"() : () -> ()
    %121 = vector.shape_cast %120 : vector<2x8x8xf32> to vector<16x8xf32>
    %122 = vector.extract_strided_slice %11 {offsets = [24, 0], sizes = [8, 32], strides = [1, 1]} : vector<32x32xbf16> to vector<8x32xbf16>
    %123 = arith.truncf %121 : vector<16x8xf32> to vector<16x8xbf16>
    %cst_50 = arith.constant dense<0.000000e+00> : vector<16x32xf32>
    %124 = tpu.matmul %123, %122, %cst_50 {dimension_numbers = #tpu.dot_dimension_numbers<[1], [0], [0], [1], [0, 0, 1, 1], [], []>} : vector<16x8xbf16>, vector<8x32xbf16>, vector<16x32xf32> -> vector<16x32xf32>
    %125 = arith.addf %98, %124 : vector<16x32xf32>
    %126 = vector.broadcast %12 : vector<1x32xf32> to vector<16x32xf32>
    %127 = arith.addf %125, %126 : vector<16x32xf32>
    %128 = arith.addf %127, %1 : vector<16x32xf32>
    %cst_51 = arith.constant dense<0.000000e+00> : vector<16xf32>
    %129 = vector.multi_reduction <add>, %128, %cst_51 [1] : vector<16x32xf32> to vector<16xf32>
    %130 = vector.shape_cast %129 : vector<16xf32> to vector<16x1xf32>
    %cst_52 = arith.constant 3.200000e+01 : f32
    %131 = vector.broadcast %cst_52 : f32 to vector<16x1xf32>
    %132 = arith.divf %130, %131 : vector<16x1xf32>
    %133 = vector.broadcast %132 : vector<16x1xf32> to vector<16x32xf32>
    %134 = arith.subf %128, %133 : vector<16x32xf32>
    %135 = arith.mulf %134, %134 : vector<16x32xf32>
    %cst_53 = arith.constant dense<0.000000e+00> : vector<16xf32>
    %136 = vector.multi_reduction <add>, %135, %cst_53 [1] : vector<16x32xf32> to vector<16xf32>
    %137 = vector.shape_cast %136 : vector<16xf32> to vector<16x1xf32>
    %cst_54 = arith.constant 3.200000e+01 : f32
    %138 = vector.broadcast %cst_54 : f32 to vector<16x1xf32>
    %139 = arith.divf %137, %138 : vector<16x1xf32>
    %140 = vector.broadcast %132 : vector<16x1xf32> to vector<16x32xf32>
    %141 = arith.subf %128, %140 : vector<16x32xf32>
    %cst_55 = arith.constant 9.99999974E-6 : f32
    %142 = vector.broadcast %cst_55 : f32 to vector<16x1xf32>
    %143 = arith.addf %139, %142 : vector<16x1xf32>
    %144 = math.rsqrt %143 : vector<16x1xf32>
    %145 = vector.broadcast %144 : vector<16x1xf32> to vector<16x32xf32>
    %146 = arith.mulf %141, %145 : vector<16x32xf32>
    %147 = vector.broadcast %13 : vector<1x32xf32> to vector<16x32xf32>
    %148 = arith.mulf %146, %147 : vector<16x32xf32>
    %149 = vector.broadcast %14 : vector<1x32xf32> to vector<16x32xf32>
    %150 = arith.addf %148, %149 : vector<16x32xf32>
    %151 = vector.shape_cast %150 : vector<16x32xf32> to vector<2x8x32xf32>
    %c0_56 = arith.constant 0 : index
    %c0_57 = arith.constant 0 : index
    %c0_58 = arith.constant 0 : index
    %152 = vector.load %arg8[%c0_56, %c0_57, %c0_58] : memref<2x8x32xf32, #tpu.memory_space<vmem>>, vector<2x8x32xf32>
    tpu.vector_store %arg8[%c0_56, %c0_57, %c0_58], %151 {strides = array<i32>} : memref<2x8x32xf32, #tpu.memory_space<vmem>>, vector<2x8x32xf32>,
    return
  }
}

module attributes {stable_mosaic.version = 11 : i64} {
  func.func @_cross_mha_kernel(%arg0: memref<2x8x32xf32, #tpu.memory_space<vmem>>, %arg1: memref<2x8x32xf32, #tpu.memory_space<vmem>>, %arg2: memref<2x8x8xf32, #tpu.memory_space<vmem>>, %arg3: memref<32x32xbf16, #tpu.memory_space<vmem>>, %arg4: memref<1x32xf32, #tpu.memory_space<vmem>>, %arg5: memref<32x64xbf16, #tpu.memory_space<vmem>>, %arg6: memref<1x64xf32, #tpu.memory_space<vmem>>, %arg7: memref<32x32xbf16, #tpu.memory_space<vmem>>, %arg8: memref<1x32xf32, #tpu.memory_space<vmem>>, %arg9: memref<1x32xf32, #tpu.memory_space<vmem>>, %arg10: memref<1x32xf32, #tpu.memory_space<vmem>>, %arg11: memref<2x8x32xf32, #tpu.memory_space<vmem>>, %arg12: memref<2x4x8x8xf32, #tpu.memory_space<vmem>>) attributes {dimension_semantics = [], scalar_prefetch = 0 : i64, scratch_operands = 0 : i64, tpu.core_type = #tpu.core_type<tc>} {
    %c0 = arith.constant 0 : index
    %c0_0 = arith.constant 0 : index
    %c0_1 = arith.constant 0 : index
    %0 = vector.load %arg0[%c0, %c0_0, %c0_1] : memref<2x8x32xf32, #tpu.memory_space<vmem>>, vector<2x8x32xf32>
    %1 = vector.shape_cast %0 : vector<2x8x32xf32> to vector<16x32xf32>
    %c0_2 = arith.constant 0 : index
    %c0_3 = arith.constant 0 : index
    %c0_4 = arith.constant 0 : index
    %2 = vector.load %arg1[%c0_2, %c0_3, %c0_4] : memref<2x8x32xf32, #tpu.memory_space<vmem>>, vector<2x8x32xf32>
    %3 = vector.shape_cast %2 : vector<2x8x32xf32> to vector<16x32xf32>
    %c0_5 = arith.constant 0 : index
    %c0_6 = arith.constant 0 : index
    %4 = vector.load %arg3[%c0_5, %c0_6] : memref<32x32xbf16, #tpu.memory_space<vmem>>, vector<32x32xbf16>
    %5 = arith.truncf %1 : vector<16x32xf32> to vector<16x32xbf16>
    %cst = arith.constant dense<0.000000e+00> : vector<16x32xf32>
    %6 = tpu.matmul %5, %4, %cst {dimension_numbers = #tpu.dot_dimension_numbers<[1], [0], [0], [1], [0, 0, 1, 1], [], []>} : vector<16x32xbf16>, vector<32x32xbf16>, vector<16x32xf32> -> vector<16x32xf32>
    %c0_7 = arith.constant 0 : index
    %c0_8 = arith.constant 0 : index
    %7 = vector.load %arg4[%c0_7, %c0_8] : memref<1x32xf32, #tpu.memory_space<vmem>>, vector<1x32xf32>
    %8 = vector.broadcast %7 : vector<1x32xf32> to vector<16x32xf32>
    %9 = arith.addf %6, %8 : vector<16x32xf32>
    %c0_9 = arith.constant 0 : index
    %c0_10 = arith.constant 0 : index
    %10 = vector.load %arg5[%c0_9, %c0_10] : memref<32x64xbf16, #tpu.memory_space<vmem>>, vector<32x64xbf16>
    %11 = arith.truncf %3 : vector<16x32xf32> to vector<16x32xbf16>
    %cst_11 = arith.constant dense<0.000000e+00> : vector<16x64xf32>
    %12 = tpu.matmul %11, %10, %cst_11 {dimension_numbers = #tpu.dot_dimension_numbers<[1], [0], [0], [1], [0, 0, 1, 1], [], []>} : vector<16x32xbf16>, vector<32x64xbf16>, vector<16x64xf32> -> vector<16x64xf32>
    %c0_12 = arith.constant 0 : index
    %c0_13 = arith.constant 0 : index
    %13 = vector.load %arg6[%c0_12, %c0_13] : memref<1x64xf32, #tpu.memory_space<vmem>>, vector<1x64xf32>
    %14 = vector.broadcast %13 : vector<1x64xf32> to vector<16x64xf32>
    %15 = arith.addf %12, %14 : vector<16x64xf32>
    %c0_14 = arith.constant 0 : index
    %c0_15 = arith.constant 0 : index
    %c0_16 = arith.constant 0 : index
    %16 = vector.load %arg2[%c0_14, %c0_15, %c0_16] : memref<2x8x8xf32, #tpu.memory_space<vmem>>, vector<2x8x8xf32>
    %c0_17 = arith.constant 0 : index
    %c0_18 = arith.constant 0 : index
    %17 = vector.load %arg7[%c0_17, %c0_18] : memref<32x32xbf16, #tpu.memory_space<vmem>>, vector<32x32xbf16>
    %c0_19 = arith.constant 0 : index
    %c0_20 = arith.constant 0 : index
    %18 = vector.load %arg8[%c0_19, %c0_20] : memref<1x32xf32, #tpu.memory_space<vmem>>, vector<1x32xf32>
    %c0_21 = arith.constant 0 : index
    %c0_22 = arith.constant 0 : index
    %19 = vector.load %arg9[%c0_21, %c0_22] : memref<1x32xf32, #tpu.memory_space<vmem>>, vector<1x32xf32>
    %c0_23 = arith.constant 0 : index
    %c0_24 = arith.constant 0 : index
    %20 = vector.load %arg10[%c0_23, %c0_24] : memref<1x32xf32, #tpu.memory_space<vmem>>, vector<1x32xf32>
    %21 = vector.shape_cast %9 : vector<16x32xf32> to vector<2x8x32xf32>
    %22 = vector.shape_cast %15 : vector<16x64xf32> to vector<2x8x64xf32>
    %cst_25 = arith.constant 0.000000e+00 : f32
    %23 = vector.broadcast %cst_25 : f32 to vector<16x32xf32>
    %24 = vector.extract_strided_slice %21 {offsets = [0, 0, 0], sizes = [2, 8, 8], strides = [1, 1, 1]} : vector<2x8x32xf32> to vector<2x8x8xf32>
    %25 = arith.truncf %24 : vector<2x8x8xf32> to vector<2x8x8xbf16>
    %26 = vector.extract_strided_slice %22 {offsets = [0, 0, 0], sizes = [2, 8, 8], strides = [1, 1, 1]} : vector<2x8x64xf32> to vector<2x8x8xf32>
    %27 = arith.truncf %26 : vector<2x8x8xf32> to vector<2x8x8xbf16>
    %28 = vector.extract_strided_slice %22 {offsets = [0, 0, 32], sizes = [2, 8, 8], strides = [1, 1, 1]} : vector<2x8x64xf32> to vector<2x8x8xf32>
    %29 = arith.truncf %28 : vector<2x8x8xf32> to vector<2x8x8xbf16>
    "tpu.trace_start"() <{level = 10 : i32, message = "bqd,bkd->bqk"}> : () -> ()
    %cst_26 = arith.constant dense<0.000000e+00> : vector<2x8x8xf32>
    %30 = tpu.matmul %25, %27, %cst_26 {dimension_numbers = #tpu.dot_dimension_numbers<[2], [2], [1], [1], [0, 0, 0, 1, 1, 1], [0], [0]>} : vector<2x8x8xbf16>, vector<2x8x8xbf16>, vector<2x8x8xf32> -> vector<2x8x8xf32>
    "tpu.trace_stop"() : () -> ()
    %31 = arith.addf %30, %16 : vector<2x8x8xf32>
    %cst_27 = arith.constant dense<0xFF800000> : vector<2x8xf32>
    %32 = vector.multi_reduction <maximumf>, %31, %cst_27 [2] : vector<2x8x8xf32> to vector<2x8xf32>
    %33 = vector.shape_cast %32 : vector<2x8xf32> to vector<2x8x1xf32>
    %34 = vector.broadcast %33 : vector<2x8x1xf32> to vector<2x8x8xf32>
    %35 = arith.subf %31, %34 : vector<2x8x8xf32>
    %36 = math.exp %35 : vector<2x8x8xf32>
    %cst_28 = arith.constant dense<0.000000e+00> : vector<2x8xf32>
    %37 = vector.multi_reduction <add>, %36, %cst_28 [2] : vector<2x8x8xf32> to vector<2x8xf32>
    %38 = vector.shape_cast %37 : vector<2x8xf32> to vector<2x8x1xf32>
    %39 = vector.broadcast %38 : vector<2x8x1xf32> to vector<2x8x8xf32>
    %40 = arith.divf %36, %39 : vector<2x8x8xf32>
    %c0_29 = arith.constant 0 : index
    %c0_30 = arith.constant 0 : index
    %c0_31 = arith.constant 0 : index
    %c0_32 = arith.constant 0 : index
    %41 = vector.load %arg12[%c0_29, %c0_30, %c0_31, %c0_32] : memref<2x4x8x8xf32, #tpu.memory_space<vmem>>, vector<2x1x8x8xf32>
    %42 = vector.shape_cast %41 : vector<2x1x8x8xf32> to vector<2x8x8xf32>
    %43 = vector.shape_cast %40 : vector<2x8x8xf32> to vector<2x1x8x8xf32>
    tpu.vector_store %arg12[%c0_29, %c0_30, %c0_31, %c0_32], %43 {strides = array<i32>} : memref<2x4x8x8xf32, #tpu.memory_space<vmem>>, vector<2x1x8x8xf32>,
    %44 = arith.truncf %40 : vector<2x8x8xf32> to vector<2x8x8xbf16>
    "tpu.trace_start"() <{level = 10 : i32, message = "bqk,bkd->bqd"}> : () -> ()
    %cst_33 = arith.constant dense<0.000000e+00> : vector<2x8x8xf32>
    %45 = tpu.matmul %44, %29, %cst_33 {dimension_numbers = #tpu.dot_dimension_numbers<[2], [1], [1], [2], [0, 0, 0, 1, 1, 2], [0], [0]>} : vector<2x8x8xbf16>, vector<2x8x8xbf16>, vector<2x8x8xf32> -> vector<2x8x8xf32>
    "tpu.trace_stop"() : () -> ()
    %46 = vector.shape_cast %45 : vector<2x8x8xf32> to vector<16x8xf32>
    %47 = vector.extract_strided_slice %17 {offsets = [0, 0], sizes = [8, 32], strides = [1, 1]} : vector<32x32xbf16> to vector<8x32xbf16>
    %48 = arith.truncf %46 : vector<16x8xf32> to vector<16x8xbf16>
    %cst_34 = arith.constant dense<0.000000e+00> : vector<16x32xf32>
    %49 = tpu.matmul %48, %47, %cst_34 {dimension_numbers = #tpu.dot_dimension_numbers<[1], [0], [0], [1], [0, 0, 1, 1], [], []>} : vector<16x8xbf16>, vector<8x32xbf16>, vector<16x32xf32> -> vector<16x32xf32>
    %50 = arith.addf %23, %49 : vector<16x32xf32>
    %51 = vector.extract_strided_slice %21 {offsets = [0, 0, 8], sizes = [2, 8, 8], strides = [1, 1, 1]} : vector<2x8x32xf32> to vector<2x8x8xf32>
    %52 = arith.truncf %51 : vector<2x8x8xf32> to vector<2x8x8xbf16>
    %53 = vector.extract_strided_slice %22 {offsets = [0, 0, 8], sizes = [2, 8, 8], strides = [1, 1, 1]} : vector<2x8x64xf32> to vector<2x8x8xf32>
    %54 = arith.truncf %53 : vector<2x8x8xf32> to vector<2x8x8xbf16>
    %55 = vector.extract_strided_slice %22 {offsets = [0, 0, 40], sizes = [2, 8, 8], strides = [1, 1, 1]} : vector<2x8x64xf32> to vector<2x8x8xf32>
    %56 = arith.truncf %55 : vector<2x8x8xf32> to vector<2x8x8xbf16>
    "tpu.trace_start"() <{level = 10 : i32, message = "bqd,bkd->bqk"}> : () -> ()
    %cst_35 = arith.constant dense<0.000000e+00> : vector<2x8x8xf32>
    %57 = tpu.matmul %52, %54, %cst_35 {dimension_numbers = #tpu.dot_dimension_numbers<[2], [2], [1], [1], [0, 0, 0, 1, 1, 1], [0], [0]>} : vector<2x8x8xbf16>, vector<2x8x8xbf16>, vector<2x8x8xf32> -> vector<2x8x8xf32>
    "tpu.trace_stop"() : () -> ()
    %58 = arith.addf %57, %16 : vector<2x8x8xf32>
    %cst_36 = arith.constant dense<0xFF800000> : vector<2x8xf32>
    %59 = vector.multi_reduction <maximumf>, %58, %cst_36 [2] : vector<2x8x8xf32> to vector<2x8xf32>
    %60 = vector.shape_cast %59 : vector<2x8xf32> to vector<2x8x1xf32>
    %61 = vector.broadcast %60 : vector<2x8x1xf32> to vector<2x8x8xf32>
    %62 = arith.subf %58, %61 : vector<2x8x8xf32>
    %63 = math.exp %62 : vector<2x8x8xf32>
    %cst_37 = arith.constant dense<0.000000e+00> : vector<2x8xf32>
    %64 = vector.multi_reduction <add>, %63, %cst_37 [2] : vector<2x8x8xf32> to vector<2x8xf32>
    %65 = vector.shape_cast %64 : vector<2x8xf32> to vector<2x8x1xf32>
    %66 = vector.broadcast %65 : vector<2x8x1xf32> to vector<2x8x8xf32>
    %67 = arith.divf %63, %66 : vector<2x8x8xf32>
    %c0_38 = arith.constant 0 : index
    %c1 = arith.constant 1 : index
    %c0_39 = arith.constant 0 : index
    %c0_40 = arith.constant 0 : index
    %68 = vector.load %arg12[%c0_38, %c1, %c0_39, %c0_40] : memref<2x4x8x8xf32, #tpu.memory_space<vmem>>, vector<2x1x8x8xf32>
    %69 = vector.shape_cast %68 : vector<2x1x8x8xf32> to vector<2x8x8xf32>
    %70 = vector.shape_cast %67 : vector<2x8x8xf32> to vector<2x1x8x8xf32>
    tpu.vector_store %arg12[%c0_38, %c1, %c0_39, %c0_40], %70 {strides = array<i32>} : memref<2x4x8x8xf32, #tpu.memory_space<vmem>>, vector<2x1x8x8xf32>,
    %71 = arith.truncf %67 : vector<2x8x8xf32> to vector<2x8x8xbf16>
    "tpu.trace_start"() <{level = 10 : i32, message = "bqk,bkd->bqd"}> : () -> ()
    %cst_41 = arith.constant dense<0.000000e+00> : vector<2x8x8xf32>
    %72 = tpu.matmul %71, %56, %cst_41 {dimension_numbers = #tpu.dot_dimension_numbers<[2], [1], [1], [2], [0, 0, 0, 1, 1, 2], [0], [0]>} : vector<2x8x8xbf16>, vector<2x8x8xbf16>, vector<2x8x8xf32> -> vector<2x8x8xf32>
    "tpu.trace_stop"() : () -> ()
    %73 = vector.shape_cast %72 : vector<2x8x8xf32> to vector<16x8xf32>
    %74 = vector.extract_strided_slice %17 {offsets = [8, 0], sizes = [8, 32], strides = [1, 1]} : vector<32x32xbf16> to vector<8x32xbf16>
    %75 = arith.truncf %73 : vector<16x8xf32> to vector<16x8xbf16>
    %cst_42 = arith.constant dense<0.000000e+00> : vector<16x32xf32>
    %76 = tpu.matmul %75, %74, %cst_42 {dimension_numbers = #tpu.dot_dimension_numbers<[1], [0], [0], [1], [0, 0, 1, 1], [], []>} : vector<16x8xbf16>, vector<8x32xbf16>, vector<16x32xf32> -> vector<16x32xf32>
    %77 = arith.addf %50, %76 : vector<16x32xf32>
    %78 = vector.extract_strided_slice %21 {offsets = [0, 0, 16], sizes = [2, 8, 8], strides = [1, 1, 1]} : vector<2x8x32xf32> to vector<2x8x8xf32>
    %79 = arith.truncf %78 : vector<2x8x8xf32> to vector<2x8x8xbf16>
    %80 = vector.extract_strided_slice %22 {offsets = [0, 0, 16], sizes = [2, 8, 8], strides = [1, 1, 1]} : vector<2x8x64xf32> to vector<2x8x8xf32>
    %81 = arith.truncf %80 : vector<2x8x8xf32> to vector<2x8x8xbf16>
    %82 = vector.extract_strided_slice %22 {offsets = [0, 0, 48], sizes = [2, 8, 8], strides = [1, 1, 1]} : vector<2x8x64xf32> to vector<2x8x8xf32>
    %83 = arith.truncf %82 : vector<2x8x8xf32> to vector<2x8x8xbf16>
    "tpu.trace_start"() <{level = 10 : i32, message = "bqd,bkd->bqk"}> : () -> ()
    %cst_43 = arith.constant dense<0.000000e+00> : vector<2x8x8xf32>
    %84 = tpu.matmul %79, %81, %cst_43 {dimension_numbers = #tpu.dot_dimension_numbers<[2], [2], [1], [1], [0, 0, 0, 1, 1, 1], [0], [0]>} : vector<2x8x8xbf16>, vector<2x8x8xbf16>, vector<2x8x8xf32> -> vector<2x8x8xf32>
    "tpu.trace_stop"() : () -> ()
    %85 = arith.addf %84, %16 : vector<2x8x8xf32>
    %cst_44 = arith.constant dense<0xFF800000> : vector<2x8xf32>
    %86 = vector.multi_reduction <maximumf>, %85, %cst_44 [2] : vector<2x8x8xf32> to vector<2x8xf32>
    %87 = vector.shape_cast %86 : vector<2x8xf32> to vector<2x8x1xf32>
    %88 = vector.broadcast %87 : vector<2x8x1xf32> to vector<2x8x8xf32>
    %89 = arith.subf %85, %88 : vector<2x8x8xf32>
    %90 = math.exp %89 : vector<2x8x8xf32>
    %cst_45 = arith.constant dense<0.000000e+00> : vector<2x8xf32>
    %91 = vector.multi_reduction <add>, %90, %cst_45 [2] : vector<2x8x8xf32> to vector<2x8xf32>
    %92 = vector.shape_cast %91 : vector<2x8xf32> to vector<2x8x1xf32>
    %93 = vector.broadcast %92 : vector<2x8x1xf32> to vector<2x8x8xf32>
    %94 = arith.divf %90, %93 : vector<2x8x8xf32>
    %c0_46 = arith.constant 0 : index
    %c2 = arith.constant 2 : index
    %c0_47 = arith.constant 0 : index
    %c0_48 = arith.constant 0 : index
    %95 = vector.load %arg12[%c0_46, %c2, %c0_47, %c0_48] : memref<2x4x8x8xf32, #tpu.memory_space<vmem>>, vector<2x1x8x8xf32>
    %96 = vector.shape_cast %95 : vector<2x1x8x8xf32> to vector<2x8x8xf32>
    %97 = vector.shape_cast %94 : vector<2x8x8xf32> to vector<2x1x8x8xf32>
    tpu.vector_store %arg12[%c0_46, %c2, %c0_47, %c0_48], %97 {strides = array<i32>} : memref<2x4x8x8xf32, #tpu.memory_space<vmem>>, vector<2x1x8x8xf32>,
    %98 = arith.truncf %94 : vector<2x8x8xf32> to vector<2x8x8xbf16>
    "tpu.trace_start"() <{level = 10 : i32, message = "bqk,bkd->bqd"}> : () -> ()
    %cst_49 = arith.constant dense<0.000000e+00> : vector<2x8x8xf32>
    %99 = tpu.matmul %98, %83, %cst_49 {dimension_numbers = #tpu.dot_dimension_numbers<[2], [1], [1], [2], [0, 0, 0, 1, 1, 2], [0], [0]>} : vector<2x8x8xbf16>, vector<2x8x8xbf16>, vector<2x8x8xf32> -> vector<2x8x8xf32>
    "tpu.trace_stop"() : () -> ()
    %100 = vector.shape_cast %99 : vector<2x8x8xf32> to vector<16x8xf32>
    %101 = vector.extract_strided_slice %17 {offsets = [16, 0], sizes = [8, 32], strides = [1, 1]} : vector<32x32xbf16> to vector<8x32xbf16>
    %102 = arith.truncf %100 : vector<16x8xf32> to vector<16x8xbf16>
    %cst_50 = arith.constant dense<0.000000e+00> : vector<16x32xf32>
    %103 = tpu.matmul %102, %101, %cst_50 {dimension_numbers = #tpu.dot_dimension_numbers<[1], [0], [0], [1], [0, 0, 1, 1], [], []>} : vector<16x8xbf16>, vector<8x32xbf16>, vector<16x32xf32> -> vector<16x32xf32>
    %104 = arith.addf %77, %103 : vector<16x32xf32>
    %105 = vector.extract_strided_slice %21 {offsets = [0, 0, 24], sizes = [2, 8, 8], strides = [1, 1, 1]} : vector<2x8x32xf32> to vector<2x8x8xf32>
    %106 = arith.truncf %105 : vector<2x8x8xf32> to vector<2x8x8xbf16>
    %107 = vector.extract_strided_slice %22 {offsets = [0, 0, 24], sizes = [2, 8, 8], strides = [1, 1, 1]} : vector<2x8x64xf32> to vector<2x8x8xf32>
    %108 = arith.truncf %107 : vector<2x8x8xf32> to vector<2x8x8xbf16>
    %109 = vector.extract_strided_slice %22 {offsets = [0, 0, 56], sizes = [2, 8, 8], strides = [1, 1, 1]} : vector<2x8x64xf32> to vector<2x8x8xf32>
    %110 = arith.truncf %109 : vector<2x8x8xf32> to vector<2x8x8xbf16>
    "tpu.trace_start"() <{level = 10 : i32, message = "bqd,bkd->bqk"}> : () -> ()
    %cst_51 = arith.constant dense<0.000000e+00> : vector<2x8x8xf32>
    %111 = tpu.matmul %106, %108, %cst_51 {dimension_numbers = #tpu.dot_dimension_numbers<[2], [2], [1], [1], [0, 0, 0, 1, 1, 1], [0], [0]>} : vector<2x8x8xbf16>, vector<2x8x8xbf16>, vector<2x8x8xf32> -> vector<2x8x8xf32>
    "tpu.trace_stop"() : () -> ()
    %112 = arith.addf %111, %16 : vector<2x8x8xf32>
    %cst_52 = arith.constant dense<0xFF800000> : vector<2x8xf32>
    %113 = vector.multi_reduction <maximumf>, %112, %cst_52 [2] : vector<2x8x8xf32> to vector<2x8xf32>
    %114 = vector.shape_cast %113 : vector<2x8xf32> to vector<2x8x1xf32>
    %115 = vector.broadcast %114 : vector<2x8x1xf32> to vector<2x8x8xf32>
    %116 = arith.subf %112, %115 : vector<2x8x8xf32>
    %117 = math.exp %116 : vector<2x8x8xf32>
    %cst_53 = arith.constant dense<0.000000e+00> : vector<2x8xf32>
    %118 = vector.multi_reduction <add>, %117, %cst_53 [2] : vector<2x8x8xf32> to vector<2x8xf32>
    %119 = vector.shape_cast %118 : vector<2x8xf32> to vector<2x8x1xf32>
    %120 = vector.broadcast %119 : vector<2x8x1xf32> to vector<2x8x8xf32>
    %121 = arith.divf %117, %120 : vector<2x8x8xf32>
    %c0_54 = arith.constant 0 : index
    %c3 = arith.constant 3 : index
    %c0_55 = arith.constant 0 : index
    %c0_56 = arith.constant 0 : index
    %122 = vector.load %arg12[%c0_54, %c3, %c0_55, %c0_56] : memref<2x4x8x8xf32, #tpu.memory_space<vmem>>, vector<2x1x8x8xf32>
    %123 = vector.shape_cast %122 : vector<2x1x8x8xf32> to vector<2x8x8xf32>
    %124 = vector.shape_cast %121 : vector<2x8x8xf32> to vector<2x1x8x8xf32>
    tpu.vector_store %arg12[%c0_54, %c3, %c0_55, %c0_56], %124 {strides = array<i32>} : memref<2x4x8x8xf32, #tpu.memory_space<vmem>>, vector<2x1x8x8xf32>,
    %125 = arith.truncf %121 : vector<2x8x8xf32> to vector<2x8x8xbf16>
    "tpu.trace_start"() <{level = 10 : i32, message = "bqk,bkd->bqd"}> : () -> ()
    %cst_57 = arith.constant dense<0.000000e+00> : vector<2x8x8xf32>
    %126 = tpu.matmul %125, %110, %cst_57 {dimension_numbers = #tpu.dot_dimension_numbers<[2], [1], [1], [2], [0, 0, 0, 1, 1, 2], [0], [0]>} : vector<2x8x8xbf16>, vector<2x8x8xbf16>, vector<2x8x8xf32> -> vector<2x8x8xf32>
    "tpu.trace_stop"() : () -> ()
    %127 = vector.shape_cast %126 : vector<2x8x8xf32> to vector<16x8xf32>
    %128 = vector.extract_strided_slice %17 {offsets = [24, 0], sizes = [8, 32], strides = [1, 1]} : vector<32x32xbf16> to vector<8x32xbf16>
    %129 = arith.truncf %127 : vector<16x8xf32> to vector<16x8xbf16>
    %cst_58 = arith.constant dense<0.000000e+00> : vector<16x32xf32>
    %130 = tpu.matmul %129, %128, %cst_58 {dimension_numbers = #tpu.dot_dimension_numbers<[1], [0], [0], [1], [0, 0, 1, 1], [], []>} : vector<16x8xbf16>, vector<8x32xbf16>, vector<16x32xf32> -> vector<16x32xf32>
    %131 = arith.addf %104, %130 : vector<16x32xf32>
    %132 = vector.broadcast %18 : vector<1x32xf32> to vector<16x32xf32>
    %133 = arith.addf %131, %132 : vector<16x32xf32>
    %134 = arith.addf %133, %1 : vector<16x32xf32>
    %cst_59 = arith.constant dense<0.000000e+00> : vector<16xf32>
    %135 = vector.multi_reduction <add>, %134, %cst_59 [1] : vector<16x32xf32> to vector<16xf32>
    %136 = vector.shape_cast %135 : vector<16xf32> to vector<16x1xf32>
    %cst_60 = arith.constant 3.200000e+01 : f32
    %137 = vector.broadcast %cst_60 : f32 to vector<16x1xf32>
    %138 = arith.divf %136, %137 : vector<16x1xf32>
    %139 = vector.broadcast %138 : vector<16x1xf32> to vector<16x32xf32>
    %140 = arith.subf %134, %139 : vector<16x32xf32>
    %141 = arith.mulf %140, %140 : vector<16x32xf32>
    %cst_61 = arith.constant dense<0.000000e+00> : vector<16xf32>
    %142 = vector.multi_reduction <add>, %141, %cst_61 [1] : vector<16x32xf32> to vector<16xf32>
    %143 = vector.shape_cast %142 : vector<16xf32> to vector<16x1xf32>
    %cst_62 = arith.constant 3.200000e+01 : f32
    %144 = vector.broadcast %cst_62 : f32 to vector<16x1xf32>
    %145 = arith.divf %143, %144 : vector<16x1xf32>
    %146 = vector.broadcast %138 : vector<16x1xf32> to vector<16x32xf32>
    %147 = arith.subf %134, %146 : vector<16x32xf32>
    %cst_63 = arith.constant 9.99999974E-6 : f32
    %148 = vector.broadcast %cst_63 : f32 to vector<16x1xf32>
    %149 = arith.addf %145, %148 : vector<16x1xf32>
    %150 = math.rsqrt %149 : vector<16x1xf32>
    %151 = vector.broadcast %150 : vector<16x1xf32> to vector<16x32xf32>
    %152 = arith.mulf %147, %151 : vector<16x32xf32>
    %153 = vector.broadcast %19 : vector<1x32xf32> to vector<16x32xf32>
    %154 = arith.mulf %152, %153 : vector<16x32xf32>
    %155 = vector.broadcast %20 : vector<1x32xf32> to vector<16x32xf32>
    %156 = arith.addf %154, %155 : vector<16x32xf32>
    %157 = vector.shape_cast %156 : vector<16x32xf32> to vector<2x8x32xf32>
    %c0_64 = arith.constant 0 : index
    %c0_65 = arith.constant 0 : index
    %c0_66 = arith.constant 0 : index
    %158 = vector.load %arg11[%c0_64, %c0_65, %c0_66] : memref<2x8x32xf32, #tpu.memory_space<vmem>>, vector<2x8x32xf32>
    tpu.vector_store %arg11[%c0_64, %c0_65, %c0_66], %157 {strides = array<i32>} : memref<2x8x32xf32, #tpu.memory_space<vmem>>, vector<2x8x32xf32>,
    return
  }
}

module attributes {stable_mosaic.version = 11 : i64} {
  func.func @_ffn_ln_kernel(%arg0: i32, %arg1: memref<16x32xf32, #tpu.memory_space<vmem>>, %arg2: memref<32x64xbf16, #tpu.memory_space<vmem>>, %arg3: memref<1x64xf32, #tpu.memory_space<vmem>>, %arg4: memref<64x32xbf16, #tpu.memory_space<vmem>>, %arg5: memref<1x32xf32, #tpu.memory_space<vmem>>, %arg6: memref<1x32xf32, #tpu.memory_space<vmem>>, %arg7: memref<1x32xf32, #tpu.memory_space<vmem>>, %arg8: memref<16x32xf32, #tpu.memory_space<vmem>>) attributes {dimension_semantics = [#tpu.dimension_semantics<parallel>], iteration_bounds = array<i64: 1>, scalar_prefetch = 0 : i64, scratch_operands = 0 : i64, tpu.core_type = #tpu.core_type<tc>, window_params = [{transform_indices = @transform_0, window_bounds = array<i64: 16, 32>}, {pipeline_mode = #tpu.pipeline_mode<synchronous>, transform_indices = @transform_1, window_bounds = array<i64: 32, 64>}, {pipeline_mode = #tpu.pipeline_mode<synchronous>, transform_indices = @transform_2, window_bounds = array<i64: 1, 64>}, {pipeline_mode = #tpu.pipeline_mode<synchronous>, transform_indices = @transform_3, window_bounds = array<i64: 64, 32>}, {pipeline_mode = #tpu.pipeline_mode<synchronous>, transform_indices = @transform_4, window_bounds = array<i64: 1, 32>}, {pipeline_mode = #tpu.pipeline_mode<synchronous>, transform_indices = @transform_5, window_bounds = array<i64: 1, 32>}, {pipeline_mode = #tpu.pipeline_mode<synchronous>, transform_indices = @transform_6, window_bounds = array<i64: 1, 32>}, {transform_indices = @transform_7, window_bounds = array<i64: 16, 32>}]} {
    %c0 = arith.constant 0 : index
    %c0_0 = arith.constant 0 : index
    %0 = vector.load %arg1[%c0, %c0_0] : memref<16x32xf32, #tpu.memory_space<vmem>>, vector<16x32xf32>
    %c0_1 = arith.constant 0 : index
    %c0_2 = arith.constant 0 : index
    %1 = vector.load %arg2[%c0_1, %c0_2] : memref<32x64xbf16, #tpu.memory_space<vmem>>, vector<32x64xbf16>
    %2 = arith.truncf %0 : vector<16x32xf32> to vector<16x32xbf16>
    %cst = arith.constant dense<0.000000e+00> : vector<16x64xf32>
    %3 = tpu.matmul %2, %1, %cst {dimension_numbers = #tpu.dot_dimension_numbers<[1], [0], [0], [1], [0, 0, 1, 1], [], []>} : vector<16x32xbf16>, vector<32x64xbf16>, vector<16x64xf32> -> vector<16x64xf32>
    %c0_3 = arith.constant 0 : index
    %c0_4 = arith.constant 0 : index
    %4 = vector.load %arg3[%c0_3, %c0_4] : memref<1x64xf32, #tpu.memory_space<vmem>>, vector<1x64xf32>
    %5 = vector.broadcast %4 : vector<1x64xf32> to vector<16x64xf32>
    %6 = arith.addf %3, %5 : vector<16x64xf32>
    %cst_5 = arith.constant 0.000000e+00 : f32
    %7 = vector.broadcast %cst_5 : f32 to vector<16x64xf32>
    %8 = arith.maximumf %6, %7 : vector<16x64xf32>
    %c0_6 = arith.constant 0 : index
    %c0_7 = arith.constant 0 : index
    %9 = vector.load %arg4[%c0_6, %c0_7] : memref<64x32xbf16, #tpu.memory_space<vmem>>, vector<64x32xbf16>
    %10 = arith.truncf %8 : vector<16x64xf32> to vector<16x64xbf16>
    %cst_8 = arith.constant dense<0.000000e+00> : vector<16x32xf32>
    %11 = tpu.matmul %10, %9, %cst_8 {dimension_numbers = #tpu.dot_dimension_numbers<[1], [0], [0], [1], [0, 0, 1, 1], [], []>} : vector<16x64xbf16>, vector<64x32xbf16>, vector<16x32xf32> -> vector<16x32xf32>
    %c0_9 = arith.constant 0 : index
    %c0_10 = arith.constant 0 : index
    %12 = vector.load %arg5[%c0_9, %c0_10] : memref<1x32xf32, #tpu.memory_space<vmem>>, vector<1x32xf32>
    %13 = vector.broadcast %12 : vector<1x32xf32> to vector<16x32xf32>
    %14 = arith.addf %11, %13 : vector<16x32xf32>
    %15 = arith.addf %14, %0 : vector<16x32xf32>
    %c0_11 = arith.constant 0 : index
    %c0_12 = arith.constant 0 : index
    %16 = vector.load %arg6[%c0_11, %c0_12] : memref<1x32xf32, #tpu.memory_space<vmem>>, vector<1x32xf32>
    %c0_13 = arith.constant 0 : index
    %c0_14 = arith.constant 0 : index
    %17 = vector.load %arg7[%c0_13, %c0_14] : memref<1x32xf32, #tpu.memory_space<vmem>>, vector<1x32xf32>
    %cst_15 = arith.constant dense<0.000000e+00> : vector<16xf32>
    %18 = vector.multi_reduction <add>, %15, %cst_15 [1] : vector<16x32xf32> to vector<16xf32>
    %19 = vector.shape_cast %18 : vector<16xf32> to vector<16x1xf32>
    %cst_16 = arith.constant 3.200000e+01 : f32
    %20 = vector.broadcast %cst_16 : f32 to vector<16x1xf32>
    %21 = arith.divf %19, %20 : vector<16x1xf32>
    %22 = vector.broadcast %21 : vector<16x1xf32> to vector<16x32xf32>
    %23 = arith.subf %15, %22 : vector<16x32xf32>
    %24 = arith.mulf %23, %23 : vector<16x32xf32>
    %cst_17 = arith.constant dense<0.000000e+00> : vector<16xf32>
    %25 = vector.multi_reduction <add>, %24, %cst_17 [1] : vector<16x32xf32> to vector<16xf32>
    %26 = vector.shape_cast %25 : vector<16xf32> to vector<16x1xf32>
    %cst_18 = arith.constant 3.200000e+01 : f32
    %27 = vector.broadcast %cst_18 : f32 to vector<16x1xf32>
    %28 = arith.divf %26, %27 : vector<16x1xf32>
    %29 = vector.broadcast %21 : vector<16x1xf32> to vector<16x32xf32>
    %30 = arith.subf %15, %29 : vector<16x32xf32>
    %cst_19 = arith.constant 9.99999974E-6 : f32
    %31 = vector.broadcast %cst_19 : f32 to vector<16x1xf32>
    %32 = arith.addf %28, %31 : vector<16x1xf32>
    %33 = math.rsqrt %32 : vector<16x1xf32>
    %34 = vector.broadcast %33 : vector<16x1xf32> to vector<16x32xf32>
    %35 = arith.mulf %30, %34 : vector<16x32xf32>
    %36 = vector.broadcast %16 : vector<1x32xf32> to vector<16x32xf32>
    %37 = arith.mulf %35, %36 : vector<16x32xf32>
    %38 = vector.broadcast %17 : vector<1x32xf32> to vector<16x32xf32>
    %39 = arith.addf %37, %38 : vector<16x32xf32>
    %c0_20 = arith.constant 0 : index
    %c0_21 = arith.constant 0 : index
    %40 = vector.load %arg8[%c0_20, %c0_21] : memref<16x32xf32, #tpu.memory_space<vmem>>, vector<16x32xf32>
    tpu.vector_store %arg8[%c0_20, %c0_21], %39 {strides = array<i32>} : memref<16x32xf32, #tpu.memory_space<vmem>>, vector<16x32xf32>,
    return
  }
  func.func @transform_0(%arg0: i32) -> (i32, i32) {
    %c0_i32 = arith.constant 0 : i32
    %c0_i32_0 = arith.constant 0 : i32
    return %arg0, %c0_i32 : i32, i32
  }
  func.func @transform_1(%arg0: i32) -> (i32, i32) {
    %c0_i32 = arith.constant 0 : i32
    %c0_i32_0 = arith.constant 0 : i32
    %c0_i32_1 = arith.constant 0 : i32
    return %c0_i32, %c0_i32_0 : i32, i32
  }
  func.func @transform_2(%arg0: i32) -> (i32, i32) {
    %c0_i32 = arith.constant 0 : i32
    %c0_i32_0 = arith.constant 0 : i32
    %c0_i32_1 = arith.constant 0 : i32
    return %c0_i32, %c0_i32_0 : i32, i32
  }
  func.func @transform_3(%arg0: i32) -> (i32, i32) {
    %c0_i32 = arith.constant 0 : i32
    %c0_i32_0 = arith.constant 0 : i32
    %c0_i32_1 = arith.constant 0 : i32
    return %c0_i32, %c0_i32_0 : i32, i32
  }
  func.func @transform_4(%arg0: i32) -> (i32, i32) {
    %c0_i32 = arith.constant 0 : i32
    %c0_i32_0 = arith.constant 0 : i32
    %c0_i32_1 = arith.constant 0 : i32
    return %c0_i32, %c0_i32_0 : i32, i32
  }
  func.func @transform_5(%arg0: i32) -> (i32, i32) {
    %c0_i32 = arith.constant 0 : i32
    %c0_i32_0 = arith.constant 0 : i32
    %c0_i32_1 = arith.constant 0 : i32
    return %c0_i32, %c0_i32_0 : i32, i32
  }
  func.func @transform_6(%arg0: i32) -> (i32, i32) {
    %c0_i32 = arith.constant 0 : i32
    %c0_i32_0 = arith.constant 0 : i32
    %c0_i32_1 = arith.constant 0 : i32
    return %c0_i32, %c0_i32_0 : i32, i32
  }
  func.func @transform_7(%arg0: i32) -> (i32, i32) {
    %c0_i32 = arith.constant 0 : i32
    %c0_i32_0 = arith.constant 0 : i32
    return %arg0, %c0_i32 : i32, i32
  }
}

module attributes {stable_mosaic.version = 11 : i64} {
  func.func @_ffn_ln_kernel(%arg0: i32, %arg1: memref<16x32xf32, #tpu.memory_space<vmem>>, %arg2: memref<32x64xbf16, #tpu.memory_space<vmem>>, %arg3: memref<1x64xf32, #tpu.memory_space<vmem>>, %arg4: memref<64x32xbf16, #tpu.memory_space<vmem>>, %arg5: memref<1x32xf32, #tpu.memory_space<vmem>>, %arg6: memref<1x32xf32, #tpu.memory_space<vmem>>, %arg7: memref<1x32xf32, #tpu.memory_space<vmem>>, %arg8: memref<16x32xf32, #tpu.memory_space<vmem>>) attributes {dimension_semantics = [#tpu.dimension_semantics<parallel>], iteration_bounds = array<i64: 1>, scalar_prefetch = 0 : i64, scratch_operands = 0 : i64, tpu.core_type = #tpu.core_type<tc>, window_params = [{transform_indices = @transform_0, window_bounds = array<i64: 16, 32>}, {pipeline_mode = #tpu.pipeline_mode<synchronous>, transform_indices = @transform_1, window_bounds = array<i64: 32, 64>}, {pipeline_mode = #tpu.pipeline_mode<synchronous>, transform_indices = @transform_2, window_bounds = array<i64: 1, 64>}, {pipeline_mode = #tpu.pipeline_mode<synchronous>, transform_indices = @transform_3, window_bounds = array<i64: 64, 32>}, {pipeline_mode = #tpu.pipeline_mode<synchronous>, transform_indices = @transform_4, window_bounds = array<i64: 1, 32>}, {pipeline_mode = #tpu.pipeline_mode<synchronous>, transform_indices = @transform_5, window_bounds = array<i64: 1, 32>}, {pipeline_mode = #tpu.pipeline_mode<synchronous>, transform_indices = @transform_6, window_bounds = array<i64: 1, 32>}, {transform_indices = @transform_7, window_bounds = array<i64: 16, 32>}]} {
    %c0 = arith.constant 0 : index
    %c0_0 = arith.constant 0 : index
    %0 = vector.load %arg1[%c0, %c0_0] : memref<16x32xf32, #tpu.memory_space<vmem>>, vector<16x32xf32>
    %c0_1 = arith.constant 0 : index
    %c0_2 = arith.constant 0 : index
    %1 = vector.load %arg2[%c0_1, %c0_2] : memref<32x64xbf16, #tpu.memory_space<vmem>>, vector<32x64xbf16>
    %2 = arith.truncf %0 : vector<16x32xf32> to vector<16x32xbf16>
    %cst = arith.constant dense<0.000000e+00> : vector<16x64xf32>
    %3 = tpu.matmul %2, %1, %cst {dimension_numbers = #tpu.dot_dimension_numbers<[1], [0], [0], [1], [0, 0, 1, 1], [], []>} : vector<16x32xbf16>, vector<32x64xbf16>, vector<16x64xf32> -> vector<16x64xf32>
    %c0_3 = arith.constant 0 : index
    %c0_4 = arith.constant 0 : index
    %4 = vector.load %arg3[%c0_3, %c0_4] : memref<1x64xf32, #tpu.memory_space<vmem>>, vector<1x64xf32>
    %5 = vector.broadcast %4 : vector<1x64xf32> to vector<16x64xf32>
    %6 = arith.addf %3, %5 : vector<16x64xf32>
    %cst_5 = arith.constant 0.000000e+00 : f32
    %7 = vector.broadcast %cst_5 : f32 to vector<16x64xf32>
    %8 = arith.maximumf %6, %7 : vector<16x64xf32>
    %c0_6 = arith.constant 0 : index
    %c0_7 = arith.constant 0 : index
    %9 = vector.load %arg4[%c0_6, %c0_7] : memref<64x32xbf16, #tpu.memory_space<vmem>>, vector<64x32xbf16>
    %10 = arith.truncf %8 : vector<16x64xf32> to vector<16x64xbf16>
    %cst_8 = arith.constant dense<0.000000e+00> : vector<16x32xf32>
    %11 = tpu.matmul %10, %9, %cst_8 {dimension_numbers = #tpu.dot_dimension_numbers<[1], [0], [0], [1], [0, 0, 1, 1], [], []>} : vector<16x64xbf16>, vector<64x32xbf16>, vector<16x32xf32> -> vector<16x32xf32>
    %c0_9 = arith.constant 0 : index
    %c0_10 = arith.constant 0 : index
    %12 = vector.load %arg5[%c0_9, %c0_10] : memref<1x32xf32, #tpu.memory_space<vmem>>, vector<1x32xf32>
    %13 = vector.broadcast %12 : vector<1x32xf32> to vector<16x32xf32>
    %14 = arith.addf %11, %13 : vector<16x32xf32>
    %15 = arith.addf %14, %0 : vector<16x32xf32>
    %c0_11 = arith.constant 0 : index
    %c0_12 = arith.constant 0 : index
    %16 = vector.load %arg6[%c0_11, %c0_12] : memref<1x32xf32, #tpu.memory_space<vmem>>, vector<1x32xf32>
    %c0_13 = arith.constant 0 : index
    %c0_14 = arith.constant 0 : index
    %17 = vector.load %arg7[%c0_13, %c0_14] : memref<1x32xf32, #tpu.memory_space<vmem>>, vector<1x32xf32>
    %cst_15 = arith.constant dense<0.000000e+00> : vector<16xf32>
    %18 = vector.multi_reduction <add>, %15, %cst_15 [1] : vector<16x32xf32> to vector<16xf32>
    %19 = vector.shape_cast %18 : vector<16xf32> to vector<16x1xf32>
    %cst_16 = arith.constant 3.200000e+01 : f32
    %20 = vector.broadcast %cst_16 : f32 to vector<16x1xf32>
    %21 = arith.divf %19, %20 : vector<16x1xf32>
    %22 = vector.broadcast %21 : vector<16x1xf32> to vector<16x32xf32>
    %23 = arith.subf %15, %22 : vector<16x32xf32>
    %24 = arith.mulf %23, %23 : vector<16x32xf32>
    %cst_17 = arith.constant dense<0.000000e+00> : vector<16xf32>
    %25 = vector.multi_reduction <add>, %24, %cst_17 [1] : vector<16x32xf32> to vector<16xf32>
    %26 = vector.shape_cast %25 : vector<16xf32> to vector<16x1xf32>
    %cst_18 = arith.constant 3.200000e+01 : f32
    %27 = vector.broadcast %cst_18 : f32 to vector<16x1xf32>
    %28 = arith.divf %26, %27 : vector<16x1xf32>
    %29 = vector.broadcast %21 : vector<16x1xf32> to vector<16x32xf32>
    %30 = arith.subf %15, %29 : vector<16x32xf32>
    %cst_19 = arith.constant 9.99999974E-6 : f32
    %31 = vector.broadcast %cst_19 : f32 to vector<16x1xf32>
    %32 = arith.addf %28, %31 : vector<16x1xf32>
    %33 = math.rsqrt %32 : vector<16x1xf32>
    %34 = vector.broadcast %33 : vector<16x1xf32> to vector<16x32xf32>
    %35 = arith.mulf %30, %34 : vector<16x32xf32>
    %36 = vector.broadcast %16 : vector<1x32xf32> to vector<16x32xf32>
    %37 = arith.mulf %35, %36 : vector<16x32xf32>
    %38 = vector.broadcast %17 : vector<1x32xf32> to vector<16x32xf32>
    %39 = arith.addf %37, %38 : vector<16x32xf32>
    %c0_20 = arith.constant 0 : index
    %c0_21 = arith.constant 0 : index
    %40 = vector.load %arg8[%c0_20, %c0_21] : memref<16x32xf32, #tpu.memory_space<vmem>>, vector<16x32xf32>
    tpu.vector_store %arg8[%c0_20, %c0_21], %39 {strides = array<i32>} : memref<16x32xf32, #tpu.memory_space<vmem>>, vector<16x32xf32>,
    return
  }
  func.func @transform_0(%arg0: i32) -> (i32, i32) {
    %c0_i32 = arith.constant 0 : i32
    %c0_i32_0 = arith.constant 0 : i32
    return %arg0, %c0_i32 : i32, i32
  }
  func.func @transform_1(%arg0: i32) -> (i32, i32) {
    %c0_i32 = arith.constant 0 : i32
    %c0_i32_0 = arith.constant 0 : i32
    %c0_i32_1 = arith.constant 0 : i32
    return %c0_i32, %c0_i32_0 : i32, i32
  }
  func.func @transform_2(%arg0: i32) -> (i32, i32) {
    %c0_i32 = arith.constant 0 : i32
    %c0_i32_0 = arith.constant 0 : i32
    %c0_i32_1 = arith.constant 0 : i32
    return %c0_i32, %c0_i32_0 : i32, i32
  }
  func.func @transform_3(%arg0: i32) -> (i32, i32) {
    %c0_i32 = arith.constant 0 : i32
    %c0_i32_0 = arith.constant 0 : i32
    %c0_i32_1 = arith.constant 0 : i32
    return %c0_i32, %c0_i32_0 : i32, i32
  }
  func.func @transform_4(%arg0: i32) -> (i32, i32) {
    %c0_i32 = arith.constant 0 : i32
    %c0_i32_0 = arith.constant 0 : i32
    %c0_i32_1 = arith.constant 0 : i32
    return %c0_i32, %c0_i32_0 : i32, i32
  }
  func.func @transform_5(%arg0: i32) -> (i32, i32) {
    %c0_i32 = arith.constant 0 : i32
    %c0_i32_0 = arith.constant 0 : i32
    %c0_i32_1 = arith.constant 0 : i32
    return %c0_i32, %c0_i32_0 : i32, i32
  }
  func.func @transform_6(%arg0: i32) -> (i32, i32) {
    %c0_i32 = arith.constant 0 : i32
    %c0_i32_0 = arith.constant 0 : i32
    %c0_i32_1 = arith.constant 0 : i32
    return %c0_i32, %c0_i32_0 : i32, i32
  }
  func.func @transform_7(%arg0: i32) -> (i32, i32) {
    %c0_i32 = arith.constant 0 : i32
    %c0_i32_0 = arith.constant 0 : i32
    return %arg0, %c0_i32 : i32, i32
  }
}

</mosaic_0001>

<llo_original>
// kernel: decoder_forward.8
$region0: #{decoder_forward.8}
  #allocation0 [shape = 'u32[]', space=smem, size = 0x4, offset = 0x4, fixed_abs, tag = 'smem constant byte address 0x4 - core index']
  #allocation1 [shape = 'u32[144,128]{1,0:T(1,128)}', space=vmem, size = 0x12000, scoped, tag = 'internal scratch']
  %s0 = inlined_call_operand.vmem [shape: f32[16,32], index: 0, kind: input, shape index: {}]
  %s1 = inlined_call_operand.vmem [shape: bf16[32,64], index: 1, kind: input, shape index: {}]
  %s2 = inlined_call_operand.vmem [shape: f32[1,64], index: 2, kind: input, shape index: {}]
  %s3 = inlined_call_operand.vmem [shape: bf16[64,32], index: 3, kind: input, shape index: {}]
  %s4 = inlined_call_operand.vmem [shape: f32[1,32], index: 4, kind: input, shape index: {}]
  %s5 = inlined_call_operand.vmem [shape: f32[1,32], index: 5, kind: input, shape index: {}]
  %s6 = inlined_call_operand.vmem [shape: f32[1,32], index: 6, kind: input, shape index: {}]
  %s7 = inlined_call_operand.vmem [shape: f32[16,32], index: 7, kind: output, shape index: {}]
  %s8 = sld [smem:[#allocation0]]
  $region38: #{decoder_forward.8} parent=0
    _
  %s10 = ssub.s32 1, %s8
  %s11 = scalar_select 0, %s10, %s8
  // Predicated region
  $region2: #{decoder_forward.8} parent=0 // pred_check
    _
  $region3: #{decoder_forward.8} parent=0 // pred_check_branch
    %13 = sbr.rel (0) target = $region5
  $region4: #{decoder_forward.8} parent=0 // pred_region
    _
  $region5: #{decoder_forward.8} parent=0 // pred_fallthru
    _
  // Predicated region
  $region6: #{decoder_forward.8} parent=0 // pred_check
    _
  $region7: #{decoder_forward.8} parent=0 // pred_check_branch
    %15 = sbr.rel (0) target = $region9
  $region8: #{decoder_forward.8} parent=0 // pred_region
    _
  $region9: #{decoder_forward.8} parent=0 // pred_fallthru
    _
  // Predicated region
  $region10: #{decoder_forward.8} parent=0 // pred_check
    _
  $region11: #{decoder_forward.8} parent=0 // pred_check_branch
    %17 = sbr.rel (0) target = $region13
  $region12: #{decoder_forward.8} parent=0 // pred_region
    _
  $region13: #{decoder_forward.8} parent=0 // pred_fallthru
    _
  // Predicated region
  $region14: #{decoder_forward.8} parent=0 // pred_check
    _
  $region15: #{decoder_forward.8} parent=0 // pred_check_branch
    %19 = sbr.rel (0) target = $region17
  $region16: #{decoder_forward.8} parent=0 // pred_region
    _
  $region17: #{decoder_forward.8} parent=0 // pred_fallthru
    _
  // Predicated region
  $region18: #{decoder_forward.8} parent=0 // pred_check
    _
  $region19: #{decoder_forward.8} parent=0 // pred_check_branch
    %21 = sbr.rel (0) target = $region21
  $region20: #{decoder_forward.8} parent=0 // pred_region
    _
  $region21: #{decoder_forward.8} parent=0 // pred_fallthru
    _
  // Predicated region
  $region22: #{decoder_forward.8} parent=0 // pred_check
    _
  $region23: #{decoder_forward.8} parent=0 // pred_check_branch
    %23 = sbr.rel (0) target = $region25
  $region24: #{decoder_forward.8} parent=0 // pred_region
    _
  $region25: #{decoder_forward.8} parent=0 // pred_fallthru
    _
  // Predicated region
  $region26: #{decoder_forward.8} parent=0 // pred_check
    _
  $region27: #{decoder_forward.8} parent=0 // pred_check_branch
    %25 = sbr.rel (0) target = $region29
  $region28: #{decoder_forward.8} parent=0 // pred_region
    _
  $region29: #{decoder_forward.8} parent=0 // pred_fallthru
    _
  %v27 = vld [vmem:[%s0] sm:$0xff]
  %v28 = vld [vmem:[%s0 + $0x8] sm:$0xff]
  %v29 = vld [vmem:[%s1] sm:$0xf]
  %v30 = vld [vmem:[%s1 + $0x4] sm:$0xf]
  %v31 = vld [vmem:[%s1 + $0x8] sm:$0xf]
  %v32 = vld [vmem:[%s1 + $0xc] sm:$0xf]
  %v33 = vpack.c.bf16 %v28, %v27
  %v34 = vld [vmem:[%s2] sm:$0x1]
  %v36 = vlaneseq
  %v37 = vshrl.u32 %v36, 7
  %v38 = vsub.s32 0, %v37
  %v39 = vrot.slane %v34, %v38
  %v45 = vunpack.c.l.b16 %v29
  %v46 = vunpack.c.l.b16 %v30
  %v47 = vunpack.c.l.b16 %v31
  %v48 = vunpack.c.l.b16 %v32
  %v49 = vpack.c.b16 %v46, %v45
  %v50 = vpack.c.b16 %v48, %v47
  %vm53 = vcmask 261120
  %v55 = vsel %vm53, %v33, 0
  %57 = vmatprep.subr.bf16.mxu0 0
  %58 = vmatpush1.bf16.msra.mxu0 %v49
  %59 = vmatprep.subr.bf16.mxu0 0
  %60 = vmatpush1.bf16.msra.mxu0 %v50
  %61 = vmatprep.subr.bf16.mxu0 0
  %62 = vmatpush1.bf16.msra.mxu0 0
  %63 = vmatprep.subr.bf16.mxu0 0
  %64 = vmatpush1.bf16.msra.mxu0 0
  %65 = vmatprep.subr.bf16.mxu0 0
  %66 = vmatpush1.bf16.msra.mxu0 0
  %67 = vmatprep.subr.bf16.mxu0 0
  %68 = vmatpush1.bf16.msra.mxu0 0
  %69 = vmatprep.subr.bf16.mxu0 0
  %70 = vmatpush1.bf16.msra.mxu0 0
  %71 = vmatprep.subr.bf16.mxu0 0
  %72 = vmatpush1.bf16.msra.mxu0 0
  %73 = vmatprep.subr.bf16.mxu0 0
  %74 = vmatpush1.bf16.msra.mxu0 0
  %75 = vmatprep.subr.bf16.mxu0 0
  %76 = vmatpush1.bf16.msra.mxu0 0
  %77 = vmatprep.subr.bf16.mxu0 0
  %78 = vmatpush1.bf16.msra.mxu0 0
  %79 = vmatprep.subr.bf16.mxu0 0
  %80 = vmatpush1.bf16.msra.mxu0 0
  %81 = vmatprep.subr.bf16.mxu0 0
  %82 = vmatpush1.bf16.msra.mxu0 0
  %83 = vmatprep.subr.bf16.mxu0 0
  %84 = vmatpush1.bf16.msra.mxu0 0
  %85 = vmatprep.subr.bf16.mxu0 0
  %86 = vmatpush1.bf16.msra.mxu0 0
  %87 = vmatprep.subr.bf16.mxu0 0
  %88 = vmatpush1.bf16.msra.mxu0 0
  %89 = vmatprep.mubr.bf16.mxu0 0
  %90 = vmatmul.mubr.bf16.gmra.mrb[0].mxu0 %v55
  %v91 = vpop.f32.mrb[0].mxu0
  %v92 = vadd.f32 %v39, %v91
  %v93 = vpop.f32.mrb[0].mxu0
  %v94 = vpop.f32.mrb[0].mxu0
  %v95 = vadd.f32 %v39, %v94
  %v96 = vpop.f32.mrb[0].mxu0
  %97 = vdwg.mxu0
  %v98 = vmax.f32 %v92, 0.0
  %v99 = vmax.f32 %v95, 0.0
  %v100 = vld [vmem:[%s3] sm:$0xf]
  %v101 = vld [vmem:[%s3 + $0x4] sm:$0xf]
  %v102 = vld [vmem:[%s3 + $0x8] sm:$0xf]
  %v103 = vld [vmem:[%s3 + $0xc] sm:$0xf]
  %v104 = vld [vmem:[%s3 + $0x10] sm:$0xf]
  %v105 = vld [vmem:[%s3 + $0x14] sm:$0xf]
  %v106 = vld [vmem:[%s3 + $0x18] sm:$0xf]
  %v107 = vld [vmem:[%s3 + $0x1c] sm:$0xf]
  %v108 = vpack.c.bf16 %v99, %v98
  %v109 = vld [vmem:[%s4] sm:$0x1]
  %v111 = vlaneseq
  %v112 = vshrl.u32 %v111, 7
  %v113 = vsub.s32 0, %v112
  %v114 = vrot.slane %v109, %v113
  %v124 = vunpack.c.l.b16 %v100
  %v125 = vunpack.c.l.b16 %v101
  %v126 = vunpack.c.l.b16 %v102
  %v127 = vunpack.c.l.b16 %v103
  %v128 = vunpack.c.l.b16 %v104
  %v129 = vunpack.c.l.b16 %v105
  %v130 = vunpack.c.l.b16 %v106
  %v131 = vunpack.c.l.b16 %v107
  %v132 = vpack.c.b16 %v125, %v124
  %v133 = vpack.c.b16 %v127, %v126
  %v134 = vpack.c.b16 %v129, %v128
  %v135 = vpack.c.b16 %v131, %v130
  %vm140 = vcmask 523264
  %v142 = vsel %vm140, %v108, 0
  %144 = vmatprep.subr.bf16.mxu0 0
  %145 = vmatpush1.bf16.msra.mxu0 %v132
  %146 = vmatprep.subr.bf16.mxu0 0
  %147 = vmatpush1.bf16.msra.mxu0 %v133
  %148 = vmatprep.subr.bf16.mxu0 0
  %149 = vmatpush1.bf16.msra.mxu0 %v134
  %150 = vmatprep.subr.bf16.mxu0 0
  %151 = vmatpush1.bf16.msra.mxu0 %v135
  %152 = vmatprep.subr.bf16.mxu0 0
  %153 = vmatpush1.bf16.msra.mxu0 0
  %154 = vmatprep.subr.bf16.mxu0 0
  %155 = vmatpush1.bf16.msra.mxu0 0
  %156 = vmatprep.subr.bf16.mxu0 0
  %157 = vmatpush1.bf16.msra.mxu0 0
  %158 = vmatprep.subr.bf16.mxu0 0
  %159 = vmatpush1.bf16.msra.mxu0 0
  %160 = vmatprep.subr.bf16.mxu0 0
  %161 = vmatpush1.bf16.msra.mxu0 0
  %162 = vmatprep.subr.bf16.mxu0 0
  %163 = vmatpush1.bf16.msra.mxu0 0
  %164 = vmatprep.subr.bf16.mxu0 0
  %165 = vmatpush1.bf16.msra.mxu0 0
  %166 = vmatprep.subr.bf16.mxu0 0
  %167 = vmatpush1.bf16.msra.mxu0 0
  %168 = vmatprep.subr.bf16.mxu0 0
  %169 = vmatpush1.bf16.msra.mxu0 0
  %170 = vmatprep.subr.bf16.mxu0 0
  %171 = vmatpush1.bf16.msra.mxu0 0
  %172 = vmatprep.subr.bf16.mxu0 0
  %173 = vmatpush1.bf16.msra.mxu0 0
  %174 = vmatprep.subr.bf16.mxu0 0
  %175 = vmatpush1.bf16.msra.mxu0 0
  %176 = vmatprep.mubr.bf16.mxu0 0
  %177 = vmatmul.mubr.bf16.gmra.mrb[0].mxu0 %v142
  %v178 = vpop.f32.mrb[0].mxu0
  %v179 = vadd.f32 %v114, %v178
  %v180 = vpop.f32.mrb[0].mxu0
  %v181 = vpop.f32.mrb[0].mxu0
  %v182 = vadd.f32 %v114, %v181
  %v183 = vpop.f32.mrb[0].mxu0
  %184 = vdwg.mxu0
  %v185 = vadd.f32 %v179, %v27
  %v186 = vadd.f32 %v182, %v28
  %v187 = vld [vmem:[%s5] sm:$0x1]
  %v188 = vld [vmem:[%s6] sm:$0x1]
  %v189 = vsel %vm53, %v185, 0.0
  %190 = vadd.xlane.f32.xlu0 %v189
  %v191 = vpop.xlane.xlu0 %190
  %v192 = vsel %vm53, %v186, 0.0
  %193 = vadd.xlane.f32.xlu0 %v192
  %v194 = vpop.xlane.xlu0 %193
  %v195 = vrcp.pop 32.0
  %v196 = vmul.f32 %v191, %v195
  %v197 = vmul.f32 %v194, %v195
  %v198 = vsub.f32 %v185, %v196
  %v199 = vsub.f32 %v186, %v197
  %v200 = vmul.f32 %v198, %v198
  %v201 = vmul.f32 %v199, %v199
  %v202 = vsel %vm53, %v200, 0.0
  %203 = vadd.xlane.f32.xlu0 %v202
  %v204 = vpop.xlane.xlu0 %203
  %v205 = vsel %vm53, %v201, 0.0
  %206 = vadd.xlane.f32.xlu0 %v205
  %v207 = vpop.xlane.xlu0 %206
  %v208 = vmul.f32 %v204, %v195
  %v209 = vmul.f32 %v207, %v195
  %v210 = vadd.f32 %v208, 1e-05
  %v211 = vadd.f32 %v209, 1e-05
  %v212 = vrsqrt.pop %v210
  %v213 = vrsqrt.pop %v211
  %v214 = vmul.f32 %v198, %v212
  %v215 = vmul.f32 %v199, %v213
  %v217 = vlaneseq
  %v218 = vshrl.u32 %v217, 7
  %v219 = vsub.s32 0, %v218
  %v220 = vrot.slane %v187, %v219
  %v222 = vmul.f32 %v214, %v220
  %v223 = vmul.f32 %v215, %v220
  %v225 = vlaneseq
  %v226 = vshrl.u32 %v225, 7
  %v227 = vsub.s32 0, %v226
  %v228 = vrot.slane %v188, %v227
  %v230 = vadd.f32 %v222, %v228
  %v231 = vadd.f32 %v223, %v228
  %232 = vst.msk [vmem:[%s7] sm:$0xff] %vm53, %v230
  %233 = vst.msk [vmem:[%s7 + $0x8] sm:$0xff] %vm53, %v231
  // Predicated region
  $region30: #{decoder_forward.8} parent=0 // pred_check
    _
  $region31: #{decoder_forward.8} parent=0 // pred_check_branch
    %235 = sbr.rel (0) target = $region33
  $region32: #{decoder_forward.8} parent=0 // pred_region
    _
  $region33: #{decoder_forward.8} parent=0 // pred_fallthru
    _
  // Predicated region
  $region34: #{decoder_forward.8} parent=0 // pred_check
    _
  $region35: #{decoder_forward.8} parent=0 // pred_check_branch
    %237 = sbr.rel (0) target = $region37
  $region36: #{decoder_forward.8} parent=0 // pred_region
    _
  $region37: #{decoder_forward.8} parent=0 // pred_fallthru
    _

// kernel: decoder_forward.11
$region0: #{decoder_forward.11}
  #allocation0 [shape = 'u32[]', space=smem, size = 0x4, offset = 0x4, fixed_abs, tag = 'smem constant byte address 0x4 - core index']
  #allocation1 [shape = 'u32[144,128]{1,0:T(1,128)}', space=vmem, size = 0x12000, scoped, tag = 'internal scratch']
  %s0 = inlined_call_operand.vmem [shape: f32[16,32], index: 0, kind: input, shape index: {}]
  %s1 = inlined_call_operand.vmem [shape: bf16[32,64], index: 1, kind: input, shape index: {}]
  %s2 = inlined_call_operand.vmem [shape: f32[1,64], index: 2, kind: input, shape index: {}]
  %s3 = inlined_call_operand.vmem [shape: bf16[64,32], index: 3, kind: input, shape index: {}]
  %s4 = inlined_call_operand.vmem [shape: f32[1,32], index: 4, kind: input, shape index: {}]
  %s5 = inlined_call_operand.vmem [shape: f32[1,32], index: 5, kind: input, shape index: {}]
  %s6 = inlined_call_operand.vmem [shape: f32[1,32], index: 6, kind: input, shape index: {}]
  %s7 = inlined_call_operand.hbm [shape: f32[16,32], index: 7, kind: output, shape index: {}]
  %s8 = sld [smem:[#allocation0]]
  $region38: #{decoder_forward.11} parent=0
    _
  %s10 = ssub.s32 1, %s8
  %s11 = scalar_select 0, %s10, %s8
  $region1: #{decoder_forward.11} parent=0
    #allocation2 [shape = 'u8[8192]{0}', space=vmem, size = 0x2000, scoped, tag = 'output window, operand 0, single buffered']
    #allocation3 [shape = 's32[1]{0}', space=sflag, size = 0x4, scoped, tag = 'scoped memory for decoder_forward.11']
    %12 = vsyncpa [#allocation3], 0
    // Predicated region
    $region2: #{decoder_forward.11} parent=1 // pred_check
      _
    $region3: #{decoder_forward.11} parent=1 // pred_check_branch
      %14 = sbr.rel (0) target = $region5
    $region4: #{decoder_forward.11} parent=1 // pred_region
      _
    $region5: #{decoder_forward.11} parent=1 // pred_fallthru
      _
    // Predicated region
    $region6: #{decoder_forward.11} parent=1 // pred_check
      _
    $region7: #{decoder_forward.11} parent=1 // pred_check_branch
      %16 = sbr.rel (0) target = $region9
    $region8: #{decoder_forward.11} parent=1 // pred_region
      _
    $region9: #{decoder_forward.11} parent=1 // pred_fallthru
      _
    // Predicated region
    $region10: #{decoder_forward.11} parent=1 // pred_check
      _
    $region11: #{decoder_forward.11} parent=1 // pred_check_branch
      %18 = sbr.rel (0) target = $region13
    $region12: #{decoder_forward.11} parent=1 // pred_region
      _
    $region13: #{decoder_forward.11} parent=1 // pred_fallthru
      _
    // Predicated region
    $region14: #{decoder_forward.11} parent=1 // pred_check
      _
    $region15: #{decoder_forward.11} parent=1 // pred_check_branch
      %20 = sbr.rel (0) target = $region17
    $region16: #{decoder_forward.11} parent=1 // pred_region
      _
    $region17: #{decoder_forward.11} parent=1 // pred_fallthru
      _
    // Predicated region
    $region18: #{decoder_forward.11} parent=1 // pred_check
      _
    $region19: #{decoder_forward.11} parent=1 // pred_check_branch
      %22 = sbr.rel (0) target = $region21
    $region20: #{decoder_forward.11} parent=1 // pred_region
      _
    $region21: #{decoder_forward.11} parent=1 // pred_fallthru
      _
    // Predicated region
    $region22: #{decoder_forward.11} parent=1 // pred_check
      _
    $region23: #{decoder_forward.11} parent=1 // pred_check_branch
      %24 = sbr.rel (0) target = $region25
    $region24: #{decoder_forward.11} parent=1 // pred_region
      _
    $region25: #{decoder_forward.11} parent=1 // pred_fallthru
      _
    // Predicated region
    $region26: #{decoder_forward.11} parent=1 // pred_check
      _
    $region27: #{decoder_forward.11} parent=1 // pred_check_branch
      %26 = sbr.rel (0) target = $region29
    $region28: #{decoder_forward.11} parent=1 // pred_region
      _
    $region29: #{decoder_forward.11} parent=1 // pred_fallthru
      _
    %v28 = vld [vmem:[%s0] sm:$0xff]
    %v29 = vld [vmem:[%s0 + $0x8] sm:$0xff]
    %v30 = vld [vmem:[%s1] sm:$0xf]
    %v31 = vld [vmem:[%s1 + $0x4] sm:$0xf]
    %v32 = vld [vmem:[%s1 + $0x8] sm:$0xf]
    %v33 = vld [vmem:[%s1 + $0xc] sm:$0xf]
    %v34 = vpack.c.bf16 %v29, %v28
    %v35 = vld [vmem:[%s2] sm:$0x1]
    %v37 = vlaneseq
    %v38 = vshrl.u32 %v37, 7
    %v39 = vsub.s32 0, %v38
    %v40 = vrot.slane %v35, %v39
    %v46 = vunpack.c.l.b16 %v30
    %v47 = vunpack.c.l.b16 %v31
    %v48 = vunpack.c.l.b16 %v32
    %v49 = vunpack.c.l.b16 %v33
    %v50 = vpack.c.b16 %v47, %v46
    %v51 = vpack.c.b16 %v49, %v48
    %vm54 = vcmask 261120
    %v56 = vsel %vm54, %v34, 0
    %58 = vmatprep.subr.bf16.mxu0 0
    %59 = vmatpush1.bf16.msra.mxu0 %v50
    %60 = vmatprep.subr.bf16.mxu0 0
    %61 = vmatpush1.bf16.msra.mxu0 %v51
    %62 = vmatprep.subr.bf16.mxu0 0
    %63 = vmatpush1.bf16.msra.mxu0 0
    %64 = vmatprep.subr.bf16.mxu0 0
    %65 = vmatpush1.bf16.msra.mxu0 0
    %66 = vmatprep.subr.bf16.mxu0 0
    %67 = vmatpush1.bf16.msra.mxu0 0
    %68 = vmatprep.subr.bf16.mxu0 0
    %69 = vmatpush1.bf16.msra.mxu0 0
    %70 = vmatprep.subr.bf16.mxu0 0
    %71 = vmatpush1.bf16.msra.mxu0 0
    %72 = vmatprep.subr.bf16.mxu0 0
    %73 = vmatpush1.bf16.msra.mxu0 0
    %74 = vmatprep.subr.bf16.mxu0 0
    %75 = vmatpush1.bf16.msra.mxu0 0
    %76 = vmatprep.subr.bf16.mxu0 0
    %77 = vmatpush1.bf16.msra.mxu0 0
    %78 = vmatprep.subr.bf16.mxu0 0
    %79 = vmatpush1.bf16.msra.mxu0 0
    %80 = vmatprep.subr.bf16.mxu0 0
    %81 = vmatpush1.bf16.msra.mxu0 0
    %82 = vmatprep.subr.bf16.mxu0 0
    %83 = vmatpush1.bf16.msra.mxu0 0
    %84 = vmatprep.subr.bf16.mxu0 0
    %85 = vmatpush1.bf16.msra.mxu0 0
    %86 = vmatprep.subr.bf16.mxu0 0
    %87 = vmatpush1.bf16.msra.mxu0 0
    %88 = vmatprep.subr.bf16.mxu0 0
    %89 = vmatpush1.bf16.msra.mxu0 0
    %90 = vmatprep.mubr.bf16.mxu0 0
    %91 = vmatmul.mubr.bf16.gmra.mrb[0].mxu0 %v56
    %v92 = vpop.f32.mrb[0].mxu0
    %v93 = vadd.f32 %v40, %v92
    %v94 = vpop.f32.mrb[0].mxu0
    %v95 = vpop.f32.mrb[0].mxu0
    %v96 = vadd.f32 %v40, %v95
    %v97 = vpop.f32.mrb[0].mxu0
    %98 = vdwg.mxu0
    %v99 = vmax.f32 %v93, 0.0
    %v100 = vmax.f32 %v96, 0.0
    %v101 = vld [vmem:[%s3] sm:$0xf]
    %v102 = vld [vmem:[%s3 + $0x4] sm:$0xf]
    %v103 = vld [vmem:[%s3 + $0x8] sm:$0xf]
    %v104 = vld [vmem:[%s3 + $0xc] sm:$0xf]
    %v105 = vld [vmem:[%s3 + $0x10] sm:$0xf]
    %v106 = vld [vmem:[%s3 + $0x14] sm:$0xf]
    %v107 = vld [vmem:[%s3 + $0x18] sm:$0xf]
    %v108 = vld [vmem:[%s3 + $0x1c] sm:$0xf]
    %v109 = vpack.c.bf16 %v100, %v99
    %v110 = vld [vmem:[%s4] sm:$0x1]
    %v112 = vlaneseq
    %v113 = vshrl.u32 %v112, 7
    %v114 = vsub.s32 0, %v113
    %v115 = vrot.slane %v110, %v114
    %v125 = vunpack.c.l.b16 %v101
    %v126 = vunpack.c.l.b16 %v102
    %v127 = vunpack.c.l.b16 %v103
    %v128 = vunpack.c.l.b16 %v104
    %v129 = vunpack.c.l.b16 %v105
    %v130 = vunpack.c.l.b16 %v106
    %v131 = vunpack.c.l.b16 %v107
    %v132 = vunpack.c.l.b16 %v108
    %v133 = vpack.c.b16 %v126, %v125
    %v134 = vpack.c.b16 %v128, %v127
    %v135 = vpack.c.b16 %v130, %v129
    %v136 = vpack.c.b16 %v132, %v131
    %vm141 = vcmask 523264
    %v143 = vsel %vm141, %v109, 0
    %145 = vmatprep.subr.bf16.mxu0 0
    %146 = vmatpush1.bf16.msra.mxu0 %v133
    %147 = vmatprep.subr.bf16.mxu0 0
    %148 = vmatpush1.bf16.msra.mxu0 %v134
    %149 = vmatprep.subr.bf16.mxu0 0
    %150 = vmatpush1.bf16.msra.mxu0 %v135
    %151 = vmatprep.subr.bf16.mxu0 0
    %152 = vmatpush1.bf16.msra.mxu0 %v136
    %153 = vmatprep.subr.bf16.mxu0 0
    %154 = vmatpush1.bf16.msra.mxu0 0
    %155 = vmatprep.subr.bf16.mxu0 0
    %156 = vmatpush1.bf16.msra.mxu0 0
    %157 = vmatprep.subr.bf16.mxu0 0
    %158 = vmatpush1.bf16.msra.mxu0 0
    %159 = vmatprep.subr.bf16.mxu0 0
    %160 = vmatpush1.bf16.msra.mxu0 0
    %161 = vmatprep.subr.bf16.mxu0 0
    %162 = vmatpush1.bf16.msra.mxu0 0
    %163 = vmatprep.subr.bf16.mxu0 0
    %164 = vmatpush1.bf16.msra.mxu0 0
    %165 = vmatprep.subr.bf16.mxu0 0
    %166 = vmatpush1.bf16.msra.mxu0 0
    %167 = vmatprep.subr.bf16.mxu0 0
    %168 = vmatpush1.bf16.msra.mxu0 0
    %169 = vmatprep.subr.bf16.mxu0 0
    %170 = vmatpush1.bf16.msra.mxu0 0
    %171 = vmatprep.subr.bf16.mxu0 0
    %172 = vmatpush1.bf16.msra.mxu0 0
    %173 = vmatprep.subr.bf16.mxu0 0
    %174 = vmatpush1.bf16.msra.mxu0 0
    %175 = vmatprep.subr.bf16.mxu0 0
    %176 = vmatpush1.bf16.msra.mxu0 0
    %177 = vmatprep.mubr.bf16.mxu0 0
    %178 = vmatmul.mubr.bf16.gmra.mrb[0].mxu0 %v143
    %v179 = vpop.f32.mrb[0].mxu0
    %v180 = vadd.f32 %v115, %v179
    %v181 = vpop.f32.mrb[0].mxu0
    %v182 = vpop.f32.mrb[0].mxu0
    %v183 = vadd.f32 %v115, %v182
    %v184 = vpop.f32.mrb[0].mxu0
    %185 = vdwg.mxu0
    %v186 = vadd.f32 %v180, %v28
    %v187 = vadd.f32 %v183, %v29
    %v188 = vld [vmem:[%s5] sm:$0x1]
    %v189 = vld [vmem:[%s6] sm:$0x1]
    %v190 = vsel %vm54, %v186, 0.0
    %191 = vadd.xlane.f32.xlu0 %v190
    %v192 = vpop.xlane.xlu0 %191
    %v193 = vsel %vm54, %v187, 0.0
    %194 = vadd.xlane.f32.xlu0 %v193
    %v195 = vpop.xlane.xlu0 %194
    %v196 = vrcp.pop 32.0
    %v197 = vmul.f32 %v192, %v196
    %v198 = vmul.f32 %v195, %v196
    %v199 = vsub.f32 %v186, %v197
    %v200 = vsub.f32 %v187, %v198
    %v201 = vmul.f32 %v199, %v199
    %v202 = vmul.f32 %v200, %v200
    %v203 = vsel %vm54, %v201, 0.0
    %204 = vadd.xlane.f32.xlu0 %v203
    %v205 = vpop.xlane.xlu0 %204
    %v206 = vsel %vm54, %v202, 0.0
    %207 = vadd.xlane.f32.xlu0 %v206
    %v208 = vpop.xlane.xlu0 %207
    %v209 = vmul.f32 %v205, %v196
    %v210 = vmul.f32 %v208, %v196
    %v211 = vadd.f32 %v209, 1e-05
    %v212 = vadd.f32 %v210, 1e-05
    %v213 = vrsqrt.pop %v211
    %v214 = vrsqrt.pop %v212
    %v215 = vmul.f32 %v199, %v213
    %v216 = vmul.f32 %v200, %v214
    %v218 = vlaneseq
    %v219 = vshrl.u32 %v218, 7
    %v220 = vsub.s32 0, %v219
    %v221 = vrot.slane %v188, %v220
    %v223 = vmul.f32 %v215, %v221
    %v224 = vmul.f32 %v216, %v221
    %v226 = vlaneseq
    %v227 = vshrl.u32 %v226, 7
    %v228 = vsub.s32 0, %v227
    %v229 = vrot.slane %v189, %v228
    %v231 = vadd.f32 %v223, %v229
    %v232 = vadd.f32 %v224, %v229
    %233 = vst.msk [vmem:[#allocation2] sm:$0xff] %vm54, %v231
    %234 = vst.msk [vmem:[#allocation2 + $0x8] sm:$0xff] %vm54, %v232
    // Predicated region
    $region30: #{decoder_forward.11} parent=1 // pred_check
      _
    $region31: #{decoder_forward.11} parent=1 // pred_check_branch
      %236 = sbr.rel (0) target = $region33
    $region32: #{decoder_forward.11} parent=1 // pred_region
      %s238 = ssub.s32 256, 256
      %239 = vsyncadd [#allocation3], %s238
      %s240 = sshll.u32 [#allocation2], 4
      %s241 = int_to_ptr.vmem [resolvable:$true] %s240
      %246 = dma.vmem_to_hbm [thread:$0]  %s241, 256, %s7, [#allocation3], 128, 128, 8
    $region33: #{decoder_forward.11} parent=1 // pred_fallthru
      _
    // Predicated region
    $region34: #{decoder_forward.11} parent=1 // pred_check
      _
    $region35: #{decoder_forward.11} parent=1 // pred_check_branch
      %248 = sbr.rel (0) target = $region37
    $region36: #{decoder_forward.11} parent=1 // pred_region
      %249 = dma.done [#allocation3], 256
    $region37: #{decoder_forward.11} parent=1 // pred_fallthru
      _
    %250 = vsyncpa [#allocation3], 1

// kernel: decoder_forward.6
$region0: #{decoder_forward.6}
  #allocation0 [shape = 'u32[]', space=smem, size = 0x4, offset = 0x4, fixed_abs, tag = 'smem constant byte address 0x4 - core index']
  #allocation1 [shape = 'u32[144,128]{1,0:T(1,128)}', space=vmem, size = 0x12000, scoped, tag = 'internal scratch']
  %s0 = inlined_call_operand.vmem [shape: f32[2,8,32], index: 0, kind: input, shape index: {}]
  %s1 = inlined_call_operand.vmem [shape: f32[2,8,8], index: 1, kind: input, shape index: {}]
  %s2 = inlined_call_operand.vmem [shape: bf16[32,96], index: 2, kind: input, shape index: {}]
  %s3 = inlined_call_operand.vmem [shape: f32[1,96], index: 3, kind: input, shape index: {}]
  %s4 = inlined_call_operand.vmem [shape: bf16[32,32], index: 4, kind: input, shape index: {}]
  %s5 = inlined_call_operand.vmem [shape: f32[1,32], index: 5, kind: input, shape index: {}]
  %s6 = inlined_call_operand.vmem [shape: f32[1,32], index: 6, kind: input, shape index: {}]
  %s7 = inlined_call_operand.vmem [shape: f32[1,32], index: 7, kind: input, shape index: {}]
  %s8 = inlined_call_operand.vmem [shape: f32[2,8,32], index: 8, kind: output, shape index: {0}]
  %s9 = inlined_call_operand.hbm [shape: f32[2,4,8,8], index: 9, kind: output, shape index: {1}]
  %10 = xla_tuple %s8, %s9
  %s11 = sld [smem:[#allocation0]]
  $region50: #{decoder_forward.6} parent=0
    _
  %s13 = ssub.s32 1, %s11
  %s14 = scalar_select 0, %s13, %s11
  $region1: #{decoder_forward.6} parent=0
    #allocation2 [shape = 'u8[32768]{0}', space=vmem, size = 0x8000, scoped, tag = 'output window, operand 1, single buffered']
    #allocation3 [shape = 's32[1]{0}', space=sflag, size = 0x4, scoped, tag = 'scoped memory for decoder_forward.6']
    %15 = vsyncpa [#allocation3], 0
    // Predicated region
    $region2: #{decoder_forward.6} parent=1 // pred_check
      _
    $region3: #{decoder_forward.6} parent=1 // pred_check_branch
      %17 = sbr.rel (0) target = $region5
    $region4: #{decoder_forward.6} parent=1 // pred_region
      _
    $region5: #{decoder_forward.6} parent=1 // pred_fallthru
      _
    // Predicated region
    $region6: #{decoder_forward.6} parent=1 // pred_check
      _
    $region7: #{decoder_forward.6} parent=1 // pred_check_branch
      %19 = sbr.rel (0) target = $region9
    $region8: #{decoder_forward.6} parent=1 // pred_region
      _
    $region9: #{decoder_forward.6} parent=1 // pred_fallthru
      _
    // Predicated region
    $region10: #{decoder_forward.6} parent=1 // pred_check
      _
    $region11: #{decoder_forward.6} parent=1 // pred_check_branch
      %21 = sbr.rel (0) target = $region13
    $region12: #{decoder_forward.6} parent=1 // pred_region
      _
    $region13: #{decoder_forward.6} parent=1 // pred_fallthru
      _
    // Predicated region
    $region14: #{decoder_forward.6} parent=1 // pred_check
      _
    $region15: #{decoder_forward.6} parent=1 // pred_check_branch
      %23 = sbr.rel (0) target = $region17
    $region16: #{decoder_forward.6} parent=1 // pred_region
      _
    $region17: #{decoder_forward.6} parent=1 // pred_fallthru
      _
    // Predicated region
    $region18: #{decoder_forward.6} parent=1 // pred_check
      _
    $region19: #{decoder_forward.6} parent=1 // pred_check_branch
      %25 = sbr.rel (0) target = $region21
    $region20: #{decoder_forward.6} parent=1 // pred_region
      _
    $region21: #{decoder_forward.6} parent=1 // pred_fallthru
      _
    // Predicated region
    $region22: #{decoder_forward.6} parent=1 // pred_check
      _
    $region23: #{decoder_forward.6} parent=1 // pred_check_branch
      %27 = sbr.rel (0) target = $region25
    $region24: #{decoder_forward.6} parent=1 // pred_region
      _
    $region25: #{decoder_forward.6} parent=1 // pred_fallthru
      _
    // Predicated region
    $region26: #{decoder_forward.6} parent=1 // pred_check
      _
    $region27: #{decoder_forward.6} parent=1 // pred_check_branch
      %29 = sbr.rel (0) target = $region29
    $region28: #{decoder_forward.6} parent=1 // pred_region
      _
    $region29: #{decoder_forward.6} parent=1 // pred_fallthru
      _
    // Predicated region
    $region30: #{decoder_forward.6} parent=1 // pred_check
      _
    $region31: #{decoder_forward.6} parent=1 // pred_check_branch
      %31 = sbr.rel (0) target = $region33
    $region32: #{decoder_forward.6} parent=1 // pred_region
      _
    $region33: #{decoder_forward.6} parent=1 // pred_fallthru
      _
    %v33 = vld [vmem:[%s0] sm:$0xff]
    %v34 = vld [vmem:[%s0 + $0x8] sm:$0xff]
    %v35 = vld [vmem:[%s2] sm:$0xf]
    %v36 = vld [vmem:[%s2 + $0x4] sm:$0xf]
    %v37 = vld [vmem:[%s2 + $0x8] sm:$0xf]
    %v38 = vld [vmem:[%s2 + $0xc] sm:$0xf]
    %v39 = vpack.c.bf16 %v34, %v33
    %v40 = vld [vmem:[%s3] sm:$0x1]
    %v42 = vlaneseq
    %v43 = vshrl.u32 %v42, 7
    %v44 = vsub.s32 0, %v43
    %v45 = vrot.slane %v40, %v44
    %v51 = vunpack.c.l.b16 %v35
    %v52 = vunpack.c.l.b16 %v36
    %v53 = vunpack.c.l.b16 %v37
    %v54 = vunpack.c.l.b16 %v38
    %v55 = vpack.c.b16 %v52, %v51
    %v56 = vpack.c.b16 %v54, %v53
    %vm59 = vcmask 261120
    %v61 = vsel %vm59, %v39, 0
    %63 = vmatprep.subr.bf16.mxu0 0
    %64 = vmatpush1.bf16.msra.mxu0 %v55
    %65 = vmatprep.subr.bf16.mxu0 0
    %66 = vmatpush1.bf16.msra.mxu0 %v56
    %67 = vmatprep.subr.bf16.mxu0 0
    %68 = vmatpush1.bf16.msra.mxu0 0
    %69 = vmatprep.subr.bf16.mxu0 0
    %70 = vmatpush1.bf16.msra.mxu0 0
    %71 = vmatprep.subr.bf16.mxu0 0
    %72 = vmatpush1.bf16.msra.mxu0 0
    %73 = vmatprep.subr.bf16.mxu0 0
    %74 = vmatpush1.bf16.msra.mxu0 0
    %75 = vmatprep.subr.bf16.mxu0 0
    %76 = vmatpush1.bf16.msra.mxu0 0
    %77 = vmatprep.subr.bf16.mxu0 0
    %78 = vmatpush1.bf16.msra.mxu0 0
    %79 = vmatprep.subr.bf16.mxu0 0
    %80 = vmatpush1.bf16.msra.mxu0 0
    %81 = vmatprep.subr.bf16.mxu0 0
    %82 = vmatpush1.bf16.msra.mxu0 0
    %83 = vmatprep.subr.bf16.mxu0 0
    %84 = vmatpush1.bf16.msra.mxu0 0
    %85 = vmatprep.subr.bf16.mxu0 0
    %86 = vmatpush1.bf16.msra.mxu0 0
    %87 = vmatprep.subr.bf16.mxu0 0
    %88 = vmatpush1.bf16.msra.mxu0 0
    %89 = vmatprep.subr.bf16.mxu0 0
    %90 = vmatpush1.bf16.msra.mxu0 0
    %91 = vmatprep.subr.bf16.mxu0 0
    %92 = vmatpush1.bf16.msra.mxu0 0
    %93 = vmatprep.subr.bf16.mxu0 0
    %94 = vmatpush1.bf16.msra.mxu0 0
    %95 = vmatprep.mubr.bf16.mxu0 0
    %96 = vmatmul.mubr.bf16.gmra.mrb[0].mxu0 %v61
    %v97 = vpop.f32.mrb[0].mxu0
    %v98 = vadd.f32 %v45, %v97
    %v99 = vpop.f32.mrb[0].mxu0
    %v100 = vpop.f32.mrb[0].mxu0
    %v101 = vadd.f32 %v45, %v100
    %v102 = vpop.f32.mrb[0].mxu0
    %103 = vdwg.mxu0
    %v104 = vld [vmem:[%s1] sm:$0xff]
    %v105 = vld [vmem:[%s1 + $0x8] sm:$0xff]
    %v106 = vld [vmem:[%s4] sm:$0xf]
    %v107 = vld [vmem:[%s4 + $0x4] sm:$0xf]
    %v108 = vld [vmem:[%s4 + $0x8] sm:$0xf]
    %v109 = vld [vmem:[%s4 + $0xc] sm:$0xf]
    %v110 = vld [vmem:[%s5] sm:$0x1]
    %v111 = vld [vmem:[%s6] sm:$0x1]
    %v112 = vld [vmem:[%s7] sm:$0x1]
    %v113 = vpack.c.bf16 %v98, %v98
    %v114 = vpack.c.bf16 %v101, %v101
    %116 = vrot.lane.b32.xlu0 %v113, 96
    %v117 = vpop.permute.xlu0 %116
    %vm118 = vcmask 64512
    %v120 = vsel %vm118, %v113, 0
    %v123 = vsel %vm118, %v117, 0
    %125 = vmatprep.subr.bf16.mxu0 0
    %126 = vmatpush1.bf16.xpose.msra.mxu0 %v123
    %127 = vmatprep.subr.bf16.mxu0 0
    %128 = vmatpush1.bf16.xpose.msra.mxu0 0
    %129 = vmatprep.subr.bf16.mxu0 0
    %130 = vmatpush1.bf16.xpose.msra.mxu0 0
    %131 = vmatprep.subr.bf16.mxu0 0
    %132 = vmatpush1.bf16.xpose.msra.mxu0 0
    %133 = vmatprep.subr.bf16.mxu0 0
    %134 = vmatpush1.bf16.xpose.msra.mxu0 0
    %135 = vmatprep.subr.bf16.mxu0 0
    %136 = vmatpush1.bf16.xpose.msra.mxu0 0
    %137 = vmatprep.subr.bf16.mxu0 0
    %138 = vmatpush1.bf16.xpose.msra.mxu0 0
    %139 = vmatprep.subr.bf16.mxu0 0
    %140 = vmatpush1.bf16.xpose.msra.mxu0 0
    %141 = vmatprep.subr.bf16.mxu0 0
    %142 = vmatpush1.bf16.xpose.msra.mxu0 0
    %143 = vmatprep.subr.bf16.mxu0 0
    %144 = vmatpush1.bf16.xpose.msra.mxu0 0
    %145 = vmatprep.subr.bf16.mxu0 0
    %146 = vmatpush1.bf16.xpose.msra.mxu0 0
    %147 = vmatprep.subr.bf16.mxu0 0
    %148 = vmatpush1.bf16.xpose.msra.mxu0 0
    %149 = vmatprep.subr.bf16.mxu0 0
    %150 = vmatpush1.bf16.xpose.msra.mxu0 0
    %151 = vmatprep.subr.bf16.mxu0 0
    %152 = vmatpush1.bf16.xpose.msra.mxu0 0
    %153 = vmatprep.subr.bf16.mxu0 0
    %154 = vmatpush1.bf16.xpose.msra.mxu0 0
    %155 = vmatprep.subr.bf16.mxu0 0
    %156 = vmatpush1.bf16.xpose.msra.mxu0 0
    %157 = vmatprep.mubr.bf16.mxu0 0
    %158 = vmatmul.mubr.bf16.gmra.mrb[0].mxu0 %v120
    %v159 = vpop.f32.mrb[0].mxu0
    %v160 = vadd.f32 %v104, %v159
    %v161 = vpop.f32.mrb[0].mxu0
    %v162 = vpop.f32.mrb[0].mxu0
    %v163 = vpop.f32.mrb[0].mxu0
    %164 = vdwg.mxu0
    %166 = vrot.lane.b32.xlu0 %v114, 96
    %v167 = vpop.permute.xlu0 %166
    %v169 = vsel %vm118, %v114, 0
    %v172 = vsel %vm118, %v167, 0
    %174 = vmatprep.subr.bf16.mxu0 0
    %175 = vmatpush1.bf16.xpose.msra.mxu0 %v172
    %176 = vmatprep.subr.bf16.mxu0 0
    %177 = vmatpush1.bf16.xpose.msra.mxu0 0
    %178 = vmatprep.subr.bf16.mxu0 0
    %179 = vmatpush1.bf16.xpose.msra.mxu0 0
    %180 = vmatprep.subr.bf16.mxu0 0
    %181 = vmatpush1.bf16.xpose.msra.mxu0 0
    %182 = vmatprep.subr.bf16.mxu0 0
    %183 = vmatpush1.bf16.xpose.msra.mxu0 0
    %184 = vmatprep.subr.bf16.mxu0 0
    %185 = vmatpush1.bf16.xpose.msra.mxu0 0
    %186 = vmatprep.subr.bf16.mxu0 0
    %187 = vmatpush1.bf16.xpose.msra.mxu0 0
    %188 = vmatprep.subr.bf16.mxu0 0
    %189 = vmatpush1.bf16.xpose.msra.mxu0 0
    %190 = vmatprep.subr.bf16.mxu0 0
    %191 = vmatpush1.bf16.xpose.msra.mxu0 0
    %192 = vmatprep.subr.bf16.mxu0 0
    %193 = vmatpush1.bf16.xpose.msra.mxu0 0
    %194 = vmatprep.subr.bf16.mxu0 0
    %195 = vmatpush1.bf16.xpose.msra.mxu0 0
    %196 = vmatprep.subr.bf16.mxu0 0
    %197 = vmatpush1.bf16.xpose.msra.mxu0 0
    %198 = vmatprep.subr.bf16.mxu0 0
    %199 = vmatpush1.bf16.xpose.msra.mxu0 0
    %200 = vmatprep.subr.bf16.mxu0 0
    %201 = vmatpush1.bf16.xpose.msra.mxu0 0
    %202 = vmatprep.subr.bf16.mxu0 0
    %203 = vmatpush1.bf16.xpose.msra.mxu0 0
    %204 = vmatprep.subr.bf16.mxu0 0
    %205 = vmatpush1.bf16.xpose.msra.mxu0 0
    %206 = vmatprep.mubr.bf16.mxu0 0
    %207 = vmatmul.mubr.bf16.gmra.mrb[0].mxu0 %v169
    %v208 = vpop.f32.mrb[0].mxu0
    %v209 = vadd.f32 %v105, %v208
    %v210 = vpop.f32.mrb[0].mxu0
    %v211 = vpop.f32.mrb[0].mxu0
    %v212 = vpop.f32.mrb[0].mxu0
    %213 = vdwg.mxu0
    %v214 = vsel %vm118, %v160, -inf
    %215 = vmax.xlane.f32.xlu0 %v214
    %v216 = vpop.xlane.xlu0 %215
    %v217 = vsel %vm118, %v209, -inf
    %218 = vmax.xlane.f32.xlu0 %v217
    %v219 = vpop.xlane.xlu0 %218
    %v220 = vsub.f32 %v160, %v216
    %v221 = vsub.f32 %v209, %v219
    %v222 = vmul.f32 %v220, 1.442695
    %v223 = vpow.pop %v222
    %v224 = vmul.f32 %v221, 1.442695
    %v225 = vpow.pop %v224
    %v226 = vsel %vm118, %v223, 0.0
    %227 = vadd.xlane.f32.xlu0 %v226
    %v228 = vpop.xlane.xlu0 %227
    %v229 = vsel %vm118, %v225, 0.0
    %230 = vadd.xlane.f32.xlu0 %v229
    %v231 = vpop.xlane.xlu0 %230
    %v232 = vrcp.pop %v228
    %v233 = vmul.f32 %v223, %v232
    %v234 = vrcp.pop %v231
    %v235 = vmul.f32 %v225, %v234
    %236 = vst.msk [vmem:[#allocation2] sm:$0xff] %vm118, %v233
    %237 = vst.msk [vmem:[#allocation2 + $0x20] sm:$0xff] %vm118, %v235
    %v238 = vpack.c.bf16 %v233, %v233
    %v239 = vpack.c.bf16 %v235, %v235
    %240 = vrot.lane.b32.xlu0 %v113, 64
    %v241 = vpop.permute.xlu0 %240
    %v243 = vsel %vm118, %v238, 0
    %vm245 = vcmask 1043456
    %v247 = vsel %vm245, %v241, 0
    %249 = vmatprep.subr.bf16.mxu0 0
    %250 = vmatpush1.bf16.msra.mxu0 %v247
    %251 = vmatprep.subr.bf16.mxu0 0
    %252 = vmatpush1.bf16.msra.mxu0 0
    %253 = vmatprep.subr.bf16.mxu0 0
    %254 = vmatpush1.bf16.msra.mxu0 0
    %255 = vmatprep.subr.bf16.mxu0 0
    %256 = vmatpush1.bf16.msra.mxu0 0
    %257 = vmatprep.subr.bf16.mxu0 0
    %258 = vmatpush1.bf16.msra.mxu0 0
    %259 = vmatprep.subr.bf16.mxu0 0
    %260 = vmatpush1.bf16.msra.mxu0 0
    %261 = vmatprep.subr.bf16.mxu0 0
    %262 = vmatpush1.bf16.msra.mxu0 0
    %263 = vmatprep.subr.bf16.mxu0 0
    %264 = vmatpush1.bf16.msra.mxu0 0
    %265 = vmatprep.subr.bf16.mxu0 0
    %266 = vmatpush1.bf16.msra.mxu0 0
    %267 = vmatprep.subr.bf16.mxu0 0
    %268 = vmatpush1.bf16.msra.mxu0 0
    %269 = vmatprep.subr.bf16.mxu0 0
    %270 = vmatpush1.bf16.msra.mxu0 0
    %271 = vmatprep.subr.bf16.mxu0 0
    %272 = vmatpush1.bf16.msra.mxu0 0
    %273 = vmatprep.subr.bf16.mxu0 0
    %274 = vmatpush1.bf16.msra.mxu0 0
    %275 = vmatprep.subr.bf16.mxu0 0
    %276 = vmatpush1.bf16.msra.mxu0 0
    %277 = vmatprep.subr.bf16.mxu0 0
    %278 = vmatpush1.bf16.msra.mxu0 0
    %279 = vmatprep.subr.bf16.mxu0 0
    %280 = vmatpush1.bf16.msra.mxu0 0
    %281 = vmatprep.mubr.bf16.mxu0 0
    %282 = vmatmul.mubr.bf16.gmra.mrb[0].mxu0 %v243
    %v283 = vpop.f32.mrb[0].mxu0
    %v284 = vadd.f32 0.0, %v283
    %v285 = vpop.f32.mrb[0].mxu0
    %v286 = vpop.f32.mrb[0].mxu0
    %v287 = vpop.f32.mrb[0].mxu0
    %288 = vdwg.mxu0
    %289 = vrot.lane.b32.xlu0 %v114, 64
    %v290 = vpop.permute.xlu0 %289
    %v292 = vsel %vm118, %v239, 0
    %v295 = vsel %vm245, %v290, 0
    %297 = vmatprep.subr.bf16.mxu0 0
    %298 = vmatpush1.bf16.msra.mxu0 %v295
    %299 = vmatprep.subr.bf16.mxu0 0
    %300 = vmatpush1.bf16.msra.mxu0 0
    %301 = vmatprep.subr.bf16.mxu0 0
    %302 = vmatpush1.bf16.msra.mxu0 0
    %303 = vmatprep.subr.bf16.mxu0 0
    %304 = vmatpush1.bf16.msra.mxu0 0
    %305 = vmatprep.subr.bf16.mxu0 0
    %306 = vmatpush1.bf16.msra.mxu0 0
    %307 = vmatprep.subr.bf16.mxu0 0
    %308 = vmatpush1.bf16.msra.mxu0 0
    %309 = vmatprep.subr.bf16.mxu0 0
    %310 = vmatpush1.bf16.msra.mxu0 0
    %311 = vmatprep.subr.bf16.mxu0 0
    %312 = vmatpush1.bf16.msra.mxu0 0
    %313 = vmatprep.subr.bf16.mxu0 0
    %314 = vmatpush1.bf16.msra.mxu0 0
    %315 = vmatprep.subr.bf16.mxu0 0
    %316 = vmatpush1.bf16.msra.mxu0 0
    %317 = vmatprep.subr.bf16.mxu0 0
    %318 = vmatpush1.bf16.msra.mxu0 0
    %319 = vmatprep.subr.bf16.mxu0 0
    %320 = vmatpush1.bf16.msra.mxu0 0
    %321 = vmatprep.subr.bf16.mxu0 0
    %322 = vmatpush1.bf16.msra.mxu0 0
    %323 = vmatprep.subr.bf16.mxu0 0
    %324 = vmatpush1.bf16.msra.mxu0 0
    %325 = vmatprep.subr.bf16.mxu0 0
    %326 = vmatpush1.bf16.msra.mxu0 0
    %327 = vmatprep.subr.bf16.mxu0 0
    %328 = vmatpush1.bf16.msra.mxu0 0
    %329 = vmatprep.mubr.bf16.mxu0 0
    %330 = vmatmul.mubr.bf16.gmra.mrb[0].mxu0 %v292
    %v331 = vpop.f32.mrb[0].mxu0
    %v332 = vadd.f32 0.0, %v331
    %v333 = vpop.f32.mrb[0].mxu0
    %v334 = vpop.f32.mrb[0].mxu0
    %v335 = vpop.f32.mrb[0].mxu0
    %336 = vdwg.mxu0
    %v337 = vpack.c.bf16 %v332, %v284
    %338 = vrot.lane.b32.xlu0 %v113, 120
    %v339 = vpop.permute.xlu0 %338
    %340 = vrot.lane.b32.xlu0 %v113, 88
    %v341 = vpop.permute.xlu0 %340
    %v343 = vsel %vm118, %v339, 0
    %v346 = vsel %vm118, %v341, 0
    %348 = vmatprep.subr.bf16.mxu0 0
    %349 = vmatpush1.bf16.xpose.msra.mxu0 %v346
    %350 = vmatprep.subr.bf16.mxu0 0
    %351 = vmatpush1.bf16.xpose.msra.mxu0 0
    %352 = vmatprep.subr.bf16.mxu0 0
    %353 = vmatpush1.bf16.xpose.msra.mxu0 0
    %354 = vmatprep.subr.bf16.mxu0 0
    %355 = vmatpush1.bf16.xpose.msra.mxu0 0
    %356 = vmatprep.subr.bf16.mxu0 0
    %357 = vmatpush1.bf16.xpose.msra.mxu0 0
    %358 = vmatprep.subr.bf16.mxu0 0
    %359 = vmatpush1.bf16.xpose.msra.mxu0 0
    %360 = vmatprep.subr.bf16.mxu0 0
    %361 = vmatpush1.bf16.xpose.msra.mxu0 0
    %362 = vmatprep.subr.bf16.mxu0 0
    %363 = vmatpush1.bf16.xpose.msra.mxu0 0
    %364 = vmatprep.subr.bf16.mxu0 0
    %365 = vmatpush1.bf16.xpose.msra.mxu0 0
    %366 = vmatprep.subr.bf16.mxu0 0
    %367 = vmatpush1.bf16.xpose.msra.mxu0 0
    %368 = vmatprep.subr.bf16.mxu0 0
    %369 = vmatpush1.bf16.xpose.msra.mxu0 0
    %370 = vmatprep.subr.bf16.mxu0 0
    %371 = vmatpush1.bf16.xpose.msra.mxu0 0
    %372 = vmatprep.subr.bf16.mxu0 0
    %373 = vmatpush1.bf16.xpose.msra.mxu0 0
    %374 = vmatprep.subr.bf16.mxu0 0
    %375 = vmatpush1.bf16.xpose.msra.mxu0 0
    %376 = vmatprep.subr.bf16.mxu0 0
    %377 = vmatpush1.bf16.xpose.msra.mxu0 0
    %378 = vmatprep.subr.bf16.mxu0 0
    %379 = vmatpush1.bf16.xpose.msra.mxu0 0
    %380 = vmatprep.mubr.bf16.mxu0 0
    %381 = vmatmul.mubr.bf16.gmra.mrb[0].mxu0 %v343
    %v382 = vpop.f32.mrb[0].mxu0
    %v383 = vadd.f32 %v104, %v382
    %v384 = vpop.f32.mrb[0].mxu0
    %v385 = vpop.f32.mrb[0].mxu0
    %v386 = vpop.f32.mrb[0].mxu0
    %387 = vdwg.mxu0
    %388 = vrot.lane.b32.xlu0 %v114, 120
    %v389 = vpop.permute.xlu0 %388
    %390 = vrot.lane.b32.xlu0 %v114, 88
    %v391 = vpop.permute.xlu0 %390
    %v393 = vsel %vm118, %v389, 0
    %v396 = vsel %vm118, %v391, 0
    %398 = vmatprep.subr.bf16.mxu0 0
    %399 = vmatpush1.bf16.xpose.msra.mxu0 %v396
    %400 = vmatprep.subr.bf16.mxu0 0
    %401 = vmatpush1.bf16.xpose.msra.mxu0 0
    %402 = vmatprep.subr.bf16.mxu0 0
    %403 = vmatpush1.bf16.xpose.msra.mxu0 0
    %404 = vmatprep.subr.bf16.mxu0 0
    %405 = vmatpush1.bf16.xpose.msra.mxu0 0
    %406 = vmatprep.subr.bf16.mxu0 0
    %407 = vmatpush1.bf16.xpose.msra.mxu0 0
    %408 = vmatprep.subr.bf16.mxu0 0
    %409 = vmatpush1.bf16.xpose.msra.mxu0 0
    %410 = vmatprep.subr.bf16.mxu0 0
    %411 = vmatpush1.bf16.xpose.msra.mxu0 0
    %412 = vmatprep.subr.bf16.mxu0 0
    %413 = vmatpush1.bf16.xpose.msra.mxu0 0
    %414 = vmatprep.subr.bf16.mxu0 0
    %415 = vmatpush1.bf16.xpose.msra.mxu0 0
    %416 = vmatprep.subr.bf16.mxu0 0
    %417 = vmatpush1.bf16.xpose.msra.mxu0 0
    %418 = vmatprep.subr.bf16.mxu0 0
    %419 = vmatpush1.bf16.xpose.msra.mxu0 0
    %420 = vmatprep.subr.bf16.mxu0 0
    %421 = vmatpush1.bf16.xpose.msra.mxu0 0
    %422 = vmatprep.subr.bf16.mxu0 0
    %423 = vmatpush1.bf16.xpose.msra.mxu0 0
    %424 = vmatprep.subr.bf16.mxu0 0
    %425 = vmatpush1.bf16.xpose.msra.mxu0 0
    %426 = vmatprep.subr.bf16.mxu0 0
    %427 = vmatpush1.bf16.xpose.msra.mxu0 0
    %428 = vmatprep.subr.bf16.mxu0 0
    %429 = vmatpush1.bf16.xpose.msra.mxu0 0
    %430 = vmatprep.mubr.bf16.mxu0 0
    %431 = vmatmul.mubr.bf16.gmra.mrb[0].mxu0 %v393
    %v432 = vpop.f32.mrb[0].mxu0
    %v433 = vadd.f32 %v105, %v432
    %v434 = vpop.f32.mrb[0].mxu0
    %v435 = vpop.f32.mrb[0].mxu0
    %v436 = vpop.f32.mrb[0].mxu0
    %437 = vdwg.mxu0
    %v438 = vsel %vm118, %v383, -inf
    %439 = vmax.xlane.f32.xlu0 %v438
    %v440 = vpop.xlane.xlu0 %439
    %v441 = vsel %vm118, %v433, -inf
    %442 = vmax.xlane.f32.xlu0 %v441
    %v443 = vpop.xlane.xlu0 %442
    %v444 = vsub.f32 %v383, %v440
    %v445 = vsub.f32 %v433, %v443
    %v446 = vmul.f32 %v444, 1.442695
    %v447 = vpow.pop %v446
    %v448 = vmul.f32 %v445, 1.442695
    %v449 = vpow.pop %v448
    %v450 = vsel %vm118, %v447, 0.0
    %451 = vadd.xlane.f32.xlu0 %v450
    %v452 = vpop.xlane.xlu0 %451
    %v453 = vsel %vm118, %v449, 0.0
    %454 = vadd.xlane.f32.xlu0 %v453
    %v455 = vpop.xlane.xlu0 %454
    %v456 = vrcp.pop %v452
    %v457 = vmul.f32 %v447, %v456
    %v458 = vrcp.pop %v455
    %v459 = vmul.f32 %v449, %v458
    %s460 = scalar_lea.vmem [#allocation2], 8
    %461 = vst.msk [vmem:[%s460] sm:$0xff] %vm118, %v457
    %462 = vst.msk [vmem:[%s460 + $0x20] sm:$0xff] %vm118, %v459
    %v463 = vpack.c.bf16 %v457, %v457
    %v464 = vpack.c.bf16 %v459, %v459
    %465 = vrot.lane.b32.xlu0 %v113, 56
    %v466 = vpop.permute.xlu0 %465
    %v468 = vsel %vm118, %v463, 0
    %v471 = vsel %vm245, %v466, 0
    %473 = vmatprep.subr.bf16.mxu0 0
    %474 = vmatpush1.bf16.msra.mxu0 %v471
    %475 = vmatprep.subr.bf16.mxu0 0
    %476 = vmatpush1.bf16.msra.mxu0 0
    %477 = vmatprep.subr.bf16.mxu0 0
    %478 = vmatpush1.bf16.msra.mxu0 0
    %479 = vmatprep.subr.bf16.mxu0 0
    %480 = vmatpush1.bf16.msra.mxu0 0
    %481 = vmatprep.subr.bf16.mxu0 0
    %482 = vmatpush1.bf16.msra.mxu0 0
    %483 = vmatprep.subr.bf16.mxu0 0
    %484 = vmatpush1.bf16.msra.mxu0 0
    %485 = vmatprep.subr.bf16.mxu0 0
    %486 = vmatpush1.bf16.msra.mxu0 0
    %487 = vmatprep.subr.bf16.mxu0 0
    %488 = vmatpush1.bf16.msra.mxu0 0
    %489 = vmatprep.subr.bf16.mxu0 0
    %490 = vmatpush1.bf16.msra.mxu0 0
    %491 = vmatprep.subr.bf16.mxu0 0
    %492 = vmatpush1.bf16.msra.mxu0 0
    %493 = vmatprep.subr.bf16.mxu0 0
    %494 = vmatpush1.bf16.msra.mxu0 0
    %495 = vmatprep.subr.bf16.mxu0 0
    %496 = vmatpush1.bf16.msra.mxu0 0
    %497 = vmatprep.subr.bf16.mxu0 0
    %498 = vmatpush1.bf16.msra.mxu0 0
    %499 = vmatprep.subr.bf16.mxu0 0
    %500 = vmatpush1.bf16.msra.mxu0 0
    %501 = vmatprep.subr.bf16.mxu0 0
    %502 = vmatpush1.bf16.msra.mxu0 0
    %503 = vmatprep.subr.bf16.mxu0 0
    %504 = vmatpush1.bf16.msra.mxu0 0
    %505 = vmatprep.mubr.bf16.mxu0 0
    %506 = vmatmul.mubr.bf16.gmra.mrb[0].mxu0 %v468
    %v507 = vpop.f32.mrb[0].mxu0
    %v508 = vadd.f32 0.0, %v507
    %v509 = vpop.f32.mrb[0].mxu0
    %v510 = vpop.f32.mrb[0].mxu0
    %v511 = vpop.f32.mrb[0].mxu0
    %512 = vdwg.mxu0
    %513 = vrot.lane.b32.xlu0 %v114, 56
    %v514 = vpop.permute.xlu0 %513
    %v516 = vsel %vm118, %v464, 0
    %v519 = vsel %vm245, %v514, 0
    %521 = vmatprep.subr.bf16.mxu0 0
    %522 = vmatpush1.bf16.msra.mxu0 %v519
    %523 = vmatprep.subr.bf16.mxu0 0
    %524 = vmatpush1.bf16.msra.mxu0 0
    %525 = vmatprep.subr.bf16.mxu0 0
    %526 = vmatpush1.bf16.msra.mxu0 0
    %527 = vmatprep.subr.bf16.mxu0 0
    %528 = vmatpush1.bf16.msra.mxu0 0
    %529 = vmatprep.subr.bf16.mxu0 0
    %530 = vmatpush1.bf16.msra.mxu0 0
    %531 = vmatprep.subr.bf16.mxu0 0
    %532 = vmatpush1.bf16.msra.mxu0 0
    %533 = vmatprep.subr.bf16.mxu0 0
    %534 = vmatpush1.bf16.msra.mxu0 0
    %535 = vmatprep.subr.bf16.mxu0 0
    %536 = vmatpush1.bf16.msra.mxu0 0
    %537 = vmatprep.subr.bf16.mxu0 0
    %538 = vmatpush1.bf16.msra.mxu0 0
    %539 = vmatprep.subr.bf16.mxu0 0
    %540 = vmatpush1.bf16.msra.mxu0 0
    %541 = vmatprep.subr.bf16.mxu0 0
    %542 = vmatpush1.bf16.msra.mxu0 0
    %543 = vmatprep.subr.bf16.mxu0 0
    %544 = vmatpush1.bf16.msra.mxu0 0
    %545 = vmatprep.subr.bf16.mxu0 0
    %546 = vmatpush1.bf16.msra.mxu0 0
    %547 = vmatprep.subr.bf16.mxu0 0
    %548 = vmatpush1.bf16.msra.mxu0 0
    %549 = vmatprep.subr.bf16.mxu0 0
    %550 = vmatpush1.bf16.msra.mxu0 0
    %551 = vmatprep.subr.bf16.mxu0 0
    %552 = vmatpush1.bf16.msra.mxu0 0
    %553 = vmatprep.mubr.bf16.mxu0 0
    %554 = vmatmul.mubr.bf16.gmra.mrb[0].mxu0 %v516
    %v555 = vpop.f32.mrb[0].mxu0
    %v556 = vadd.f32 0.0, %v555
    %v557 = vpop.f32.mrb[0].mxu0
    %v558 = vpop.f32.mrb[0].mxu0
    %v559 = vpop.f32.mrb[0].mxu0
    %560 = vdwg.mxu0
    %v561 = vpack.c.bf16 %v556, %v508
    %v563 = vsel %vm118, %v561, 0
    %v566 = vsel %vm245, %v107, 0
    %568 = vmatprep.subr.bf16.mxu0 0
    %569 = vmatpush1.bf16.msra.mxu0 %v566
    %570 = vmatprep.subr.bf16.mxu0 0
    %571 = vmatpush1.bf16.msra.mxu0 0
    %572 = vmatprep.subr.bf16.mxu0 0
    %573 = vmatpush1.bf16.msra.mxu0 0
    %574 = vmatprep.subr.bf16.mxu0 0
    %575 = vmatpush1.bf16.msra.mxu0 0
    %576 = vmatprep.subr.bf16.mxu0 0
    %577 = vmatpush1.bf16.msra.mxu0 0
    %578 = vmatprep.subr.bf16.mxu0 0
    %579 = vmatpush1.bf16.msra.mxu0 0
    %580 = vmatprep.subr.bf16.mxu0 0
    %581 = vmatpush1.bf16.msra.mxu0 0
    %582 = vmatprep.subr.bf16.mxu0 0
    %583 = vmatpush1.bf16.msra.mxu0 0
    %584 = vmatprep.subr.bf16.mxu0 0
    %585 = vmatpush1.bf16.msra.mxu0 0
    %586 = vmatprep.subr.bf16.mxu0 0
    %587 = vmatpush1.bf16.msra.mxu0 0
    %588 = vmatprep.subr.bf16.mxu0 0
    %589 = vmatpush1.bf16.msra.mxu0 0
    %590 = vmatprep.subr.bf16.mxu0 0
    %591 = vmatpush1.bf16.msra.mxu0 0
    %592 = vmatprep.subr.bf16.mxu0 0
    %593 = vmatpush1.bf16.msra.mxu0 0
    %594 = vmatprep.subr.bf16.mxu0 0
    %595 = vmatpush1.bf16.msra.mxu0 0
    %596 = vmatprep.subr.bf16.mxu0 0
    %597 = vmatpush1.bf16.msra.mxu0 0
    %598 = vmatprep.subr.bf16.mxu0 0
    %599 = vmatpush1.bf16.msra.mxu0 0
    %600 = vmatprep.mubr.bf16.mxu0 0
    %601 = vmatmul.mubr.bf16.gmra.mrb[0].mxu0 %v563
    %v602 = vpop.f32.mrb[0].mxu0
    %v603 = vadd.f32 0.0, %v602
    %v604 = vpop.f32.mrb[0].mxu0
    %v605 = vpop.f32.mrb[0].mxu0
    %v606 = vadd.f32 0.0, %v605
    %v607 = vpop.f32.mrb[0].mxu0
    %608 = vdwg.mxu0
    %v610 = vsel %vm118, %v337, 0
    %v613 = vsel %vm245, %v106, 0
    %615 = vmatprep.subr.bf16.mxu0 0
    %616 = vmatpush1.bf16.msra.mxu0 %v613
    %617 = vmatprep.subr.bf16.mxu0 0
    %618 = vmatpush1.bf16.msra.mxu0 0
    %619 = vmatprep.subr.bf16.mxu0 0
    %620 = vmatpush1.bf16.msra.mxu0 0
    %621 = vmatprep.subr.bf16.mxu0 0
    %622 = vmatpush1.bf16.msra.mxu0 0
    %623 = vmatprep.subr.bf16.mxu0 0
    %624 = vmatpush1.bf16.msra.mxu0 0
    %625 = vmatprep.subr.bf16.mxu0 0
    %626 = vmatpush1.bf16.msra.mxu0 0
    %627 = vmatprep.subr.bf16.mxu0 0
    %628 = vmatpush1.bf16.msra.mxu0 0
    %629 = vmatprep.subr.bf16.mxu0 0
    %630 = vmatpush1.bf16.msra.mxu0 0
    %631 = vmatprep.subr.bf16.mxu0 0
    %632 = vmatpush1.bf16.msra.mxu0 0
    %633 = vmatprep.subr.bf16.mxu0 0
    %634 = vmatpush1.bf16.msra.mxu0 0
    %635 = vmatprep.subr.bf16.mxu0 0
    %636 = vmatpush1.bf16.msra.mxu0 0
    %637 = vmatprep.subr.bf16.mxu0 0
    %638 = vmatpush1.bf16.msra.mxu0 0
    %639 = vmatprep.subr.bf16.mxu0 0
    %640 = vmatpush1.bf16.msra.mxu0 0
    %641 = vmatprep.subr.bf16.mxu0 0
    %642 = vmatpush1.bf16.msra.mxu0 0
    %643 = vmatprep.subr.bf16.mxu0 0
    %644 = vmatpush1.bf16.msra.mxu0 0
    %645 = vmatprep.subr.bf16.mxu0 0
    %646 = vmatpush1.bf16.msra.mxu0 0
    %647 = vmatprep.mubr.bf16.mxu0 0
    %648 = vmatmul.mubr.bf16.gmra.mrb[0].mxu0 %v610
    %v649 = vpop.f32.mrb[0].mxu0
    %v650 = vadd.f32 %v603, %v649
    %v651 = vpop.f32.mrb[0].mxu0
    %v652 = vpop.f32.mrb[0].mxu0
    %v653 = vadd.f32 %v606, %v652
    %v654 = vpop.f32.mrb[0].mxu0
    %655 = vdwg.mxu0
    %656 = vrot.lane.b32.xlu0 %v113, 112
    %v657 = vpop.permute.xlu0 %656
    %658 = vrot.lane.b32.xlu0 %v113, 80
    %v659 = vpop.permute.xlu0 %658
    %v661 = vsel %vm118, %v657, 0
    %v664 = vsel %vm118, %v659, 0
    %666 = vmatprep.subr.bf16.mxu0 0
    %667 = vmatpush1.bf16.xpose.msra.mxu0 %v664
    %668 = vmatprep.subr.bf16.mxu0 0
    %669 = vmatpush1.bf16.xpose.msra.mxu0 0
    %670 = vmatprep.subr.bf16.mxu0 0
    %671 = vmatpush1.bf16.xpose.msra.mxu0 0
    %672 = vmatprep.subr.bf16.mxu0 0
    %673 = vmatpush1.bf16.xpose.msra.mxu0 0
    %674 = vmatprep.subr.bf16.mxu0 0
    %675 = vmatpush1.bf16.xpose.msra.mxu0 0
    %676 = vmatprep.subr.bf16.mxu0 0
    %677 = vmatpush1.bf16.xpose.msra.mxu0 0
    %678 = vmatprep.subr.bf16.mxu0 0
    %679 = vmatpush1.bf16.xpose.msra.mxu0 0
    %680 = vmatprep.subr.bf16.mxu0 0
    %681 = vmatpush1.bf16.xpose.msra.mxu0 0
    %682 = vmatprep.subr.bf16.mxu0 0
    %683 = vmatpush1.bf16.xpose.msra.mxu0 0
    %684 = vmatprep.subr.bf16.mxu0 0
    %685 = vmatpush1.bf16.xpose.msra.mxu0 0
    %686 = vmatprep.subr.bf16.mxu0 0
    %687 = vmatpush1.bf16.xpose.msra.mxu0 0
    %688 = vmatprep.subr.bf16.mxu0 0
    %689 = vmatpush1.bf16.xpose.msra.mxu0 0
    %690 = vmatprep.subr.bf16.mxu0 0
    %691 = vmatpush1.bf16.xpose.msra.mxu0 0
    %692 = vmatprep.subr.bf16.mxu0 0
    %693 = vmatpush1.bf16.xpose.msra.mxu0 0
    %694 = vmatprep.subr.bf16.mxu0 0
    %695 = vmatpush1.bf16.xpose.msra.mxu0 0
    %696 = vmatprep.subr.bf16.mxu0 0
    %697 = vmatpush1.bf16.xpose.msra.mxu0 0
    %698 = vmatprep.mubr.bf16.mxu0 0
    %699 = vmatmul.mubr.bf16.gmra.mrb[0].mxu0 %v661
    %v700 = vpop.f32.mrb[0].mxu0
    %v701 = vadd.f32 %v104, %v700
    %v702 = vpop.f32.mrb[0].mxu0
    %v703 = vpop.f32.mrb[0].mxu0
    %v704 = vpop.f32.mrb[0].mxu0
    %705 = vdwg.mxu0
    %706 = vrot.lane.b32.xlu0 %v114, 112
    %v707 = vpop.permute.xlu0 %706
    %708 = vrot.lane.b32.xlu0 %v114, 80
    %v709 = vpop.permute.xlu0 %708
    %v711 = vsel %vm118, %v707, 0
    %v714 = vsel %vm118, %v709, 0
    %716 = vmatprep.subr.bf16.mxu0 0
    %717 = vmatpush1.bf16.xpose.msra.mxu0 %v714
    %718 = vmatprep.subr.bf16.mxu0 0
    %719 = vmatpush1.bf16.xpose.msra.mxu0 0
    %720 = vmatprep.subr.bf16.mxu0 0
    %721 = vmatpush1.bf16.xpose.msra.mxu0 0
    %722 = vmatprep.subr.bf16.mxu0 0
    %723 = vmatpush1.bf16.xpose.msra.mxu0 0
    %724 = vmatprep.subr.bf16.mxu0 0
    %725 = vmatpush1.bf16.xpose.msra.mxu0 0
    %726 = vmatprep.subr.bf16.mxu0 0
    %727 = vmatpush1.bf16.xpose.msra.mxu0 0
    %728 = vmatprep.subr.bf16.mxu0 0
    %729 = vmatpush1.bf16.xpose.msra.mxu0 0
    %730 = vmatprep.subr.bf16.mxu0 0
    %731 = vmatpush1.bf16.xpose.msra.mxu0 0
    %732 = vmatprep.subr.bf16.mxu0 0
    %733 = vmatpush1.bf16.xpose.msra.mxu0 0
    %734 = vmatprep.subr.bf16.mxu0 0
    %735 = vmatpush1.bf16.xpose.msra.mxu0 0
    %736 = vmatprep.subr.bf16.mxu0 0
    %737 = vmatpush1.bf16.xpose.msra.mxu0 0
    %738 = vmatprep.subr.bf16.mxu0 0
    %739 = vmatpush1.bf16.xpose.msra.mxu0 0
    %740 = vmatprep.subr.bf16.mxu0 0
    %741 = vmatpush1.bf16.xpose.msra.mxu0 0
    %742 = vmatprep.subr.bf16.mxu0 0
    %743 = vmatpush1.bf16.xpose.msra.mxu0 0
    %744 = vmatprep.subr.bf16.mxu0 0
    %745 = vmatpush1.bf16.xpose.msra.mxu0 0
    %746 = vmatprep.subr.bf16.mxu0 0
    %747 = vmatpush1.bf16.xpose.msra.mxu0 0
    %748 = vmatprep.mubr.bf16.mxu0 0
    %749 = vmatmul.mubr.bf16.gmra.mrb[0].mxu0 %v711
    %v750 = vpop.f32.mrb[0].mxu0
    %v751 = vadd.f32 %v105, %v750
    %v752 = vpop.f32.mrb[0].mxu0
    %v753 = vpop.f32.mrb[0].mxu0
    %v754 = vpop.f32.mrb[0].mxu0
    %755 = vdwg.mxu0
    %v756 = vsel %vm118, %v701, -inf
    %757 = vmax.xlane.f32.xlu0 %v756
    %v758 = vpop.xlane.xlu0 %757
    %v759 = vsel %vm118, %v751, -inf
    %760 = vmax.xlane.f32.xlu0 %v759
    %v761 = vpop.xlane.xlu0 %760
    %v762 = vsub.f32 %v701, %v758
    %v763 = vsub.f32 %v751, %v761
    %v764 = vmul.f32 %v762, 1.442695
    %v765 = vpow.pop %v764
    %v766 = vmul.f32 %v763, 1.442695
    %v767 = vpow.pop %v766
    %v768 = vsel %vm118, %v765, 0.0
    %769 = vadd.xlane.f32.xlu0 %v768
    %v770 = vpop.xlane.xlu0 %769
    %v771 = vsel %vm118, %v767, 0.0
    %772 = vadd.xlane.f32.xlu0 %v771
    %v773 = vpop.xlane.xlu0 %772
    %v774 = vrcp.pop %v770
    %v775 = vmul.f32 %v765, %v774
    %v776 = vrcp.pop %v773
    %v777 = vmul.f32 %v767, %v776
    %s778 = scalar_lea.vmem [#allocation2], 16
    %779 = vst.msk [vmem:[%s778] sm:$0xff] %vm118, %v775
    %780 = vst.msk [vmem:[%s778 + $0x20] sm:$0xff] %vm118, %v777
    %v781 = vpack.c.bf16 %v775, %v775
    %v782 = vpack.c.bf16 %v777, %v777
    %783 = vrot.lane.b32.xlu0 %v113, 48
    %v784 = vpop.permute.xlu0 %783
    %v786 = vsel %vm118, %v781, 0
    %v789 = vsel %vm245, %v784, 0
    %791 = vmatprep.subr.bf16.mxu0 0
    %792 = vmatpush1.bf16.msra.mxu0 %v789
    %793 = vmatprep.subr.bf16.mxu0 0
    %794 = vmatpush1.bf16.msra.mxu0 0
    %795 = vmatprep.subr.bf16.mxu0 0
    %796 = vmatpush1.bf16.msra.mxu0 0
    %797 = vmatprep.subr.bf16.mxu0 0
    %798 = vmatpush1.bf16.msra.mxu0 0
    %799 = vmatprep.subr.bf16.mxu0 0
    %800 = vmatpush1.bf16.msra.mxu0 0
    %801 = vmatprep.subr.bf16.mxu0 0
    %802 = vmatpush1.bf16.msra.mxu0 0
    %803 = vmatprep.subr.bf16.mxu0 0
    %804 = vmatpush1.bf16.msra.mxu0 0
    %805 = vmatprep.subr.bf16.mxu0 0
    %806 = vmatpush1.bf16.msra.mxu0 0
    %807 = vmatprep.subr.bf16.mxu0 0
    %808 = vmatpush1.bf16.msra.mxu0 0
    %809 = vmatprep.subr.bf16.mxu0 0
    %810 = vmatpush1.bf16.msra.mxu0 0
    %811 = vmatprep.subr.bf16.mxu0 0
    %812 = vmatpush1.bf16.msra.mxu0 0
    %813 = vmatprep.subr.bf16.mxu0 0
    %814 = vmatpush1.bf16.msra.mxu0 0
    %815 = vmatprep.subr.bf16.mxu0 0
    %816 = vmatpush1.bf16.msra.mxu0 0
    %817 = vmatprep.subr.bf16.mxu0 0
    %818 = vmatpush1.bf16.msra.mxu0 0
    %819 = vmatprep.subr.bf16.mxu0 0
    %820 = vmatpush1.bf16.msra.mxu0 0
    %821 = vmatprep.subr.bf16.mxu0 0
    %822 = vmatpush1.bf16.msra.mxu0 0
    %823 = vmatprep.mubr.bf16.mxu0 0
    %824 = vmatmul.mubr.bf16.gmra.mrb[0].mxu0 %v786
    %v825 = vpop.f32.mrb[0].mxu0
    %v826 = vadd.f32 0.0, %v825
    %v827 = vpop.f32.mrb[0].mxu0
    %v828 = vpop.f32.mrb[0].mxu0
    %v829 = vpop.f32.mrb[0].mxu0
    %830 = vdwg.mxu0
    %831 = vrot.lane.b32.xlu0 %v114, 48
    %v832 = vpop.permute.xlu0 %831
    %v834 = vsel %vm118, %v782, 0
    %v837 = vsel %vm245, %v832, 0
    %839 = vmatprep.subr.bf16.mxu0 0
    %840 = vmatpush1.bf16.msra.mxu0 %v837
    %841 = vmatprep.subr.bf16.mxu0 0
    %842 = vmatpush1.bf16.msra.mxu0 0
    %843 = vmatprep.subr.bf16.mxu0 0
    %844 = vmatpush1.bf16.msra.mxu0 0
    %845 = vmatprep.subr.bf16.mxu0 0
    %846 = vmatpush1.bf16.msra.mxu0 0
    %847 = vmatprep.subr.bf16.mxu0 0
    %848 = vmatpush1.bf16.msra.mxu0 0
    %849 = vmatprep.subr.bf16.mxu0 0
    %850 = vmatpush1.bf16.msra.mxu0 0
    %851 = vmatprep.subr.bf16.mxu0 0
    %852 = vmatpush1.bf16.msra.mxu0 0
    %853 = vmatprep.subr.bf16.mxu0 0
    %854 = vmatpush1.bf16.msra.mxu0 0
    %855 = vmatprep.subr.bf16.mxu0 0
    %856 = vmatpush1.bf16.msra.mxu0 0
    %857 = vmatprep.subr.bf16.mxu0 0
    %858 = vmatpush1.bf16.msra.mxu0 0
    %859 = vmatprep.subr.bf16.mxu0 0
    %860 = vmatpush1.bf16.msra.mxu0 0
    %861 = vmatprep.subr.bf16.mxu0 0
    %862 = vmatpush1.bf16.msra.mxu0 0
    %863 = vmatprep.subr.bf16.mxu0 0
    %864 = vmatpush1.bf16.msra.mxu0 0
    %865 = vmatprep.subr.bf16.mxu0 0
    %866 = vmatpush1.bf16.msra.mxu0 0
    %867 = vmatprep.subr.bf16.mxu0 0
    %868 = vmatpush1.bf16.msra.mxu0 0
    %869 = vmatprep.subr.bf16.mxu0 0
    %870 = vmatpush1.bf16.msra.mxu0 0
    %871 = vmatprep.mubr.bf16.mxu0 0
    %872 = vmatmul.mubr.bf16.gmra.mrb[0].mxu0 %v834
    %v873 = vpop.f32.mrb[0].mxu0
    %v874 = vadd.f32 0.0, %v873
    %v875 = vpop.f32.mrb[0].mxu0
    %v876 = vpop.f32.mrb[0].mxu0
    %v877 = vpop.f32.mrb[0].mxu0
    %878 = vdwg.mxu0
    %v879 = vpack.c.bf16 %v874, %v826
    %v881 = vsel %vm118, %v879, 0
    %v884 = vsel %vm245, %v108, 0
    %886 = vmatprep.subr.bf16.mxu0 0
    %887 = vmatpush1.bf16.msra.mxu0 %v884
    %888 = vmatprep.subr.bf16.mxu0 0
    %889 = vmatpush1.bf16.msra.mxu0 0
    %890 = vmatprep.subr.bf16.mxu0 0
    %891 = vmatpush1.bf16.msra.mxu0 0
    %892 = vmatprep.subr.bf16.mxu0 0
    %893 = vmatpush1.bf16.msra.mxu0 0
    %894 = vmatprep.subr.bf16.mxu0 0
    %895 = vmatpush1.bf16.msra.mxu0 0
    %896 = vmatprep.subr.bf16.mxu0 0
    %897 = vmatpush1.bf16.msra.mxu0 0
    %898 = vmatprep.subr.bf16.mxu0 0
    %899 = vmatpush1.bf16.msra.mxu0 0
    %900 = vmatprep.subr.bf16.mxu0 0
    %901 = vmatpush1.bf16.msra.mxu0 0
    %902 = vmatprep.subr.bf16.mxu0 0
    %903 = vmatpush1.bf16.msra.mxu0 0
    %904 = vmatprep.subr.bf16.mxu0 0
    %905 = vmatpush1.bf16.msra.mxu0 0
    %906 = vmatprep.subr.bf16.mxu0 0
    %907 = vmatpush1.bf16.msra.mxu0 0
    %908 = vmatprep.subr.bf16.mxu0 0
    %909 = vmatpush1.bf16.msra.mxu0 0
    %910 = vmatprep.subr.bf16.mxu0 0
    %911 = vmatpush1.bf16.msra.mxu0 0
    %912 = vmatprep.subr.bf16.mxu0 0
    %913 = vmatpush1.bf16.msra.mxu0 0
    %914 = vmatprep.subr.bf16.mxu0 0
    %915 = vmatpush1.bf16.msra.mxu0 0
    %916 = vmatprep.subr.bf16.mxu0 0
    %917 = vmatpush1.bf16.msra.mxu0 0
    %918 = vmatprep.mubr.bf16.mxu0 0
    %919 = vmatmul.mubr.bf16.gmra.mrb[0].mxu0 %v881
    %v920 = vpop.f32.mrb[0].mxu0
    %v921 = vadd.f32 0.0, %v920
    %v922 = vpop.f32.mrb[0].mxu0
    %v923 = vpop.f32.mrb[0].mxu0
    %v924 = vadd.f32 0.0, %v923
    %v925 = vpop.f32.mrb[0].mxu0
    %926 = vdwg.mxu0
    %v927 = vadd.f32 %v650, %v921
    %v928 = vadd.f32 %v653, %v924
    %929 = vrot.lane.b32.xlu0 %v113, 104
    %v930 = vpop.permute.xlu0 %929
    %931 = vrot.lane.b32.xlu0 %v113, 72
    %v932 = vpop.permute.xlu0 %931
    %v934 = vsel %vm118, %v930, 0
    %v937 = vsel %vm118, %v932, 0
    %939 = vmatprep.subr.bf16.mxu0 0
    %940 = vmatpush1.bf16.xpose.msra.mxu0 %v937
    %941 = vmatprep.subr.bf16.mxu0 0
    %942 = vmatpush1.bf16.xpose.msra.mxu0 0
    %943 = vmatprep.subr.bf16.mxu0 0
    %944 = vmatpush1.bf16.xpose.msra.mxu0 0
    %945 = vmatprep.subr.bf16.mxu0 0
    %946 = vmatpush1.bf16.xpose.msra.mxu0 0
    %947 = vmatprep.subr.bf16.mxu0 0
    %948 = vmatpush1.bf16.xpose.msra.mxu0 0
    %949 = vmatprep.subr.bf16.mxu0 0
    %950 = vmatpush1.bf16.xpose.msra.mxu0 0
    %951 = vmatprep.subr.bf16.mxu0 0
    %952 = vmatpush1.bf16.xpose.msra.mxu0 0
    %953 = vmatprep.subr.bf16.mxu0 0
    %954 = vmatpush1.bf16.xpose.msra.mxu0 0
    %955 = vmatprep.subr.bf16.mxu0 0
    %956 = vmatpush1.bf16.xpose.msra.mxu0 0
    %957 = vmatprep.subr.bf16.mxu0 0
    %958 = vmatpush1.bf16.xpose.msra.mxu0 0
    %959 = vmatprep.subr.bf16.mxu0 0
    %960 = vmatpush1.bf16.xpose.msra.mxu0 0
    %961 = vmatprep.subr.bf16.mxu0 0
    %962 = vmatpush1.bf16.xpose.msra.mxu0 0
    %963 = vmatprep.subr.bf16.mxu0 0
    %964 = vmatpush1.bf16.xpose.msra.mxu0 0
    %965 = vmatprep.subr.bf16.mxu0 0
    %966 = vmatpush1.bf16.xpose.msra.mxu0 0
    %967 = vmatprep.subr.bf16.mxu0 0
    %968 = vmatpush1.bf16.xpose.msra.mxu0 0
    %969 = vmatprep.subr.bf16.mxu0 0
    %970 = vmatpush1.bf16.xpose.msra.mxu0 0
    %971 = vmatprep.mubr.bf16.mxu0 0
    %972 = vmatmul.mubr.bf16.gmra.mrb[0].mxu0 %v934
    %v973 = vpop.f32.mrb[0].mxu0
    %v974 = vadd.f32 %v104, %v973
    %v975 = vpop.f32.mrb[0].mxu0
    %v976 = vpop.f32.mrb[0].mxu0
    %v977 = vpop.f32.mrb[0].mxu0
    %978 = vdwg.mxu0
    %979 = vrot.lane.b32.xlu0 %v114, 104
    %v980 = vpop.permute.xlu0 %979
    %981 = vrot.lane.b32.xlu0 %v114, 72
    %v982 = vpop.permute.xlu0 %981
    %v984 = vsel %vm118, %v980, 0
    %v987 = vsel %vm118, %v982, 0
    %989 = vmatprep.subr.bf16.mxu0 0
    %990 = vmatpush1.bf16.xpose.msra.mxu0 %v987
    %991 = vmatprep.subr.bf16.mxu0 0
    %992 = vmatpush1.bf16.xpose.msra.mxu0 0
    %993 = vmatprep.subr.bf16.mxu0 0
    %994 = vmatpush1.bf16.xpose.msra.mxu0 0
    %995 = vmatprep.subr.bf16.mxu0 0
    %996 = vmatpush1.bf16.xpose.msra.mxu0 0
    %997 = vmatprep.subr.bf16.mxu0 0
    %998 = vmatpush1.bf16.xpose.msra.mxu0 0
    %999 = vmatprep.subr.bf16.mxu0 0
    %1000 = vmatpush1.bf16.xpose.msra.mxu0 0
    %1001 = vmatprep.subr.bf16.mxu0 0
    %1002 = vmatpush1.bf16.xpose.msra.mxu0 0
    %1003 = vmatprep.subr.bf16.mxu0 0
    %1004 = vmatpush1.bf16.xpose.msra.mxu0 0
    %1005 = vmatprep.subr.bf16.mxu0 0
    %1006 = vmatpush1.bf16.xpose.msra.mxu0 0
    %1007 = vmatprep.subr.bf16.mxu0 0
    %1008 = vmatpush1.bf16.xpose.msra.mxu0 0
    %1009 = vmatprep.subr.bf16.mxu0 0
    %1010 = vmatpush1.bf16.xpose.msra.mxu0 0
    %1011 = vmatprep.subr.bf16.mxu0 0
    %1012 = vmatpush1.bf16.xpose.msra.mxu0 0
    %1013 = vmatprep.subr.bf16.mxu0 0
    %1014 = vmatpush1.bf16.xpose.msra.mxu0 0
    %1015 = vmatprep.subr.bf16.mxu0 0
    %1016 = vmatpush1.bf16.xpose.msra.mxu0 0
    %1017 = vmatprep.subr.bf16.mxu0 0
    %1018 = vmatpush1.bf16.xpose.msra.mxu0 0
    %1019 = vmatprep.subr.bf16.mxu0 0
    %1020 = vmatpush1.bf16.xpose.msra.mxu0 0
    %1021 = vmatprep.mubr.bf16.mxu0 0
    %1022 = vmatmul.mubr.bf16.gmra.mrb[0].mxu0 %v984
    %v1023 = vpop.f32.mrb[0].mxu0
    %v1024 = vadd.f32 %v105, %v1023
    %v1025 = vpop.f32.mrb[0].mxu0
    %v1026 = vpop.f32.mrb[0].mxu0
    %v1027 = vpop.f32.mrb[0].mxu0
    %1028 = vdwg.mxu0
    %v1029 = vsel %vm118, %v974, -inf
    %1030 = vmax.xlane.f32.xlu0 %v1029
    %v1031 = vpop.xlane.xlu0 %1030
    %v1032 = vsel %vm118, %v1024, -inf
    %1033 = vmax.xlane.f32.xlu0 %v1032
    %v1034 = vpop.xlane.xlu0 %1033
    %v1035 = vsub.f32 %v974, %v1031
    %v1036 = vsub.f32 %v1024, %v1034
    %v1037 = vmul.f32 %v1035, 1.442695
    %v1038 = vpow.pop %v1037
    %v1039 = vmul.f32 %v1036, 1.442695
    %v1040 = vpow.pop %v1039
    %v1041 = vsel %vm118, %v1038, 0.0
    %1042 = vadd.xlane.f32.xlu0 %v1041
    %v1043 = vpop.xlane.xlu0 %1042
    %v1044 = vsel %vm118, %v1040, 0.0
    %1045 = vadd.xlane.f32.xlu0 %v1044
    %v1046 = vpop.xlane.xlu0 %1045
    %v1047 = vrcp.pop %v1043
    %v1048 = vmul.f32 %v1038, %v1047
    %v1049 = vrcp.pop %v1046
    %v1050 = vmul.f32 %v1040, %v1049
    %s1051 = scalar_lea.vmem [#allocation2], 24
    %1052 = vst.msk [vmem:[%s1051] sm:$0xff] %vm118, %v1048
    %1053 = vst.msk [vmem:[%s1051 + $0x20] sm:$0xff] %vm118, %v1050
    %v1054 = vpack.c.bf16 %v1048, %v1048
    %v1055 = vpack.c.bf16 %v1050, %v1050
    %1056 = vrot.lane.b32.xlu0 %v113, 40
    %v1057 = vpop.permute.xlu0 %1056
    %v1059 = vsel %vm118, %v1054, 0
    %v1062 = vsel %vm245, %v1057, 0
    %1064 = vmatprep.subr.bf16.mxu0 0
    %1065 = vmatpush1.bf16.msra.mxu0 %v1062
    %1066 = vmatprep.subr.bf16.mxu0 0
    %1067 = vmatpush1.bf16.msra.mxu0 0
    %1068 = vmatprep.subr.bf16.mxu0 0
    %1069 = vmatpush1.bf16.msra.mxu0 0
    %1070 = vmatprep.subr.bf16.mxu0 0
    %1071 = vmatpush1.bf16.msra.mxu0 0
    %1072 = vmatprep.subr.bf16.mxu0 0
    %1073 = vmatpush1.bf16.msra.mxu0 0
    %1074 = vmatprep.subr.bf16.mxu0 0
    %1075 = vmatpush1.bf16.msra.mxu0 0
    %1076 = vmatprep.subr.bf16.mxu0 0
    %1077 = vmatpush1.bf16.msra.mxu0 0
    %1078 = vmatprep.subr.bf16.mxu0 0
    %1079 = vmatpush1.bf16.msra.mxu0 0
    %1080 = vmatprep.subr.bf16.mxu0 0
    %1081 = vmatpush1.bf16.msra.mxu0 0
    %1082 = vmatprep.subr.bf16.mxu0 0
    %1083 = vmatpush1.bf16.msra.mxu0 0
    %1084 = vmatprep.subr.bf16.mxu0 0
    %1085 = vmatpush1.bf16.msra.mxu0 0
    %1086 = vmatprep.subr.bf16.mxu0 0
    %1087 = vmatpush1.bf16.msra.mxu0 0
    %1088 = vmatprep.subr.bf16.mxu0 0
    %1089 = vmatpush1.bf16.msra.mxu0 0
    %1090 = vmatprep.subr.bf16.mxu0 0
    %1091 = vmatpush1.bf16.msra.mxu0 0
    %1092 = vmatprep.subr.bf16.mxu0 0
    %1093 = vmatpush1.bf16.msra.mxu0 0
    %1094 = vmatprep.subr.bf16.mxu0 0
    %1095 = vmatpush1.bf16.msra.mxu0 0
    %1096 = vmatprep.mubr.bf16.mxu0 0
    %1097 = vmatmul.mubr.bf16.gmra.mrb[0].mxu0 %v1059
    %v1098 = vpop.f32.mrb[0].mxu0
    %v1099 = vadd.f32 0.0, %v1098
    %v1100 = vpop.f32.mrb[0].mxu0
    %v1101 = vpop.f32.mrb[0].mxu0
    %v1102 = vpop.f32.mrb[0].mxu0
    %1103 = vdwg.mxu0
    %1104 = vrot.lane.b32.xlu0 %v114, 40
    %v1105 = vpop.permute.xlu0 %1104
    %v1107 = vsel %vm118, %v1055, 0
    %v1110 = vsel %vm245, %v1105, 0
    %1112 = vmatprep.subr.bf16.mxu0 0
    %1113 = vmatpush1.bf16.msra.mxu0 %v1110
    %1114 = vmatprep.subr.bf16.mxu0 0
    %1115 = vmatpush1.bf16.msra.mxu0 0
    %1116 = vmatprep.subr.bf16.mxu0 0
    %1117 = vmatpush1.bf16.msra.mxu0 0
    %1118 = vmatprep.subr.bf16.mxu0 0
    %1119 = vmatpush1.bf16.msra.mxu0 0
    %1120 = vmatprep.subr.bf16.mxu0 0
    %1121 = vmatpush1.bf16.msra.mxu0 0
    %1122 = vmatprep.subr.bf16.mxu0 0
    %1123 = vmatpush1.bf16.msra.mxu0 0
    %1124 = vmatprep.subr.bf16.mxu0 0
    %1125 = vmatpush1.bf16.msra.mxu0 0
    %1126 = vmatprep.subr.bf16.mxu0 0
    %1127 = vmatpush1.bf16.msra.mxu0 0
    %1128 = vmatprep.subr.bf16.mxu0 0
    %1129 = vmatpush1.bf16.msra.mxu0 0
    %1130 = vmatprep.subr.bf16.mxu0 0
    %1131 = vmatpush1.bf16.msra.mxu0 0
    %1132 = vmatprep.subr.bf16.mxu0 0
    %1133 = vmatpush1.bf16.msra.mxu0 0
    %1134 = vmatprep.subr.bf16.mxu0 0
    %1135 = vmatpush1.bf16.msra.mxu0 0
    %1136 = vmatprep.subr.bf16.mxu0 0
    %1137 = vmatpush1.bf16.msra.mxu0 0
    %1138 = vmatprep.subr.bf16.mxu0 0
    %1139 = vmatpush1.bf16.msra.mxu0 0
    %1140 = vmatprep.subr.bf16.mxu0 0
    %1141 = vmatpush1.bf16.msra.mxu0 0
    %1142 = vmatprep.subr.bf16.mxu0 0
    %1143 = vmatpush1.bf16.msra.mxu0 0
    %1144 = vmatprep.mubr.bf16.mxu0 0
    %1145 = vmatmul.mubr.bf16.gmra.mrb[0].mxu0 %v1107
    %v1146 = vpop.f32.mrb[0].mxu0
    %v1147 = vadd.f32 0.0, %v1146
    %v1148 = vpop.f32.mrb[0].mxu0
    %v1149 = vpop.f32.mrb[0].mxu0
    %v1150 = vpop.f32.mrb[0].mxu0
    %1151 = vdwg.mxu0
    %v1152 = vpack.c.bf16 %v1147, %v1099
    %v1154 = vsel %vm118, %v1152, 0
    %v1157 = vsel %vm245, %v109, 0
    %1159 = vmatprep.subr.bf16.mxu0 0
    %1160 = vmatpush1.bf16.msra.mxu0 %v1157
    %1161 = vmatprep.subr.bf16.mxu0 0
    %1162 = vmatpush1.bf16.msra.mxu0 0
    %1163 = vmatprep.subr.bf16.mxu0 0
    %1164 = vmatpush1.bf16.msra.mxu0 0
    %1165 = vmatprep.subr.bf16.mxu0 0
    %1166 = vmatpush1.bf16.msra.mxu0 0
    %1167 = vmatprep.subr.bf16.mxu0 0
    %1168 = vmatpush1.bf16.msra.mxu0 0
    %1169 = vmatprep.subr.bf16.mxu0 0
    %1170 = vmatpush1.bf16.msra.mxu0 0
    %1171 = vmatprep.subr.bf16.mxu0 0
    %1172 = vmatpush1.bf16.msra.mxu0 0
    %1173 = vmatprep.subr.bf16.mxu0 0
    %1174 = vmatpush1.bf16.msra.mxu0 0
    %1175 = vmatprep.subr.bf16.mxu0 0
    %1176 = vmatpush1.bf16.msra.mxu0 0
    %1177 = vmatprep.subr.bf16.mxu0 0
    %1178 = vmatpush1.bf16.msra.mxu0 0
    %1179 = vmatprep.subr.bf16.mxu0 0
    %1180 = vmatpush1.bf16.msra.mxu0 0
    %1181 = vmatprep.subr.bf16.mxu0 0
    %1182 = vmatpush1.bf16.msra.mxu0 0
    %1183 = vmatprep.subr.bf16.mxu0 0
    %1184 = vmatpush1.bf16.msra.mxu0 0
    %1185 = vmatprep.subr.bf16.mxu0 0
    %1186 = vmatpush1.bf16.msra.mxu0 0
    %1187 = vmatprep.subr.bf16.mxu0 0
    %1188 = vmatpush1.bf16.msra.mxu0 0
    %1189 = vmatprep.subr.bf16.mxu0 0
    %1190 = vmatpush1.bf16.msra.mxu0 0
    %1191 = vmatprep.mubr.bf16.mxu0 0
    %1192 = vmatmul.mubr.bf16.gmra.mrb[0].mxu0 %v1154
    %v1193 = vpop.f32.mrb[0].mxu0
    %v1194 = vadd.f32 0.0, %v1193
    %v1195 = vpop.f32.mrb[0].mxu0
    %v1196 = vpop.f32.mrb[0].mxu0
    %v1197 = vadd.f32 0.0, %v1196
    %v1198 = vpop.f32.mrb[0].mxu0
    %1199 = vdwg.mxu0
    %v1200 = vadd.f32 %v927, %v1194
    %v1201 = vadd.f32 %v928, %v1197
    %v1203 = vlaneseq
    %v1204 = vshrl.u32 %v1203, 7
    %v1205 = vsub.s32 0, %v1204
    %v1206 = vrot.slane %v110, %v1205
    %v1208 = vadd.f32 %v1200, %v1206
    %v1209 = vadd.f32 %v1201, %v1206
    %v1210 = vadd.f32 %v1208, %v33
    %v1211 = vadd.f32 %v1209, %v34
    %v1212 = vsel %vm59, %v1210, 0.0
    %1213 = vadd.xlane.f32.xlu0 %v1212
    %v1214 = vpop.xlane.xlu0 %1213
    %v1215 = vsel %vm59, %v1211, 0.0
    %1216 = vadd.xlane.f32.xlu0 %v1215
    %v1217 = vpop.xlane.xlu0 %1216
    %v1218 = vrcp.pop 32.0
    %v1219 = vmul.f32 %v1214, %v1218
    %v1220 = vmul.f32 %v1217, %v1218
    %v1221 = vsub.f32 %v1210, %v1219
    %v1222 = vsub.f32 %v1211, %v1220
    %v1223 = vmul.f32 %v1221, %v1221
    %v1224 = vmul.f32 %v1222, %v1222
    %v1225 = vsel %vm59, %v1223, 0.0
    %1226 = vadd.xlane.f32.xlu0 %v1225
    %v1227 = vpop.xlane.xlu0 %1226
    %v1228 = vsel %vm59, %v1224, 0.0
    %1229 = vadd.xlane.f32.xlu0 %v1228
    %v1230 = vpop.xlane.xlu0 %1229
    %v1231 = vmul.f32 %v1227, %v1218
    %v1232 = vmul.f32 %v1230, %v1218
    %v1233 = vadd.f32 %v1231, 1e-05
    %v1234 = vadd.f32 %v1232, 1e-05
    %v1235 = vrsqrt.pop %v1233
    %v1236 = vrsqrt.pop %v1234
    %v1237 = vmul.f32 %v1221, %v1235
    %v1238 = vmul.f32 %v1222, %v1236
    %v1240 = vlaneseq
    %v1241 = vshrl.u32 %v1240, 7
    %v1242 = vsub.s32 0, %v1241
    %v1243 = vrot.slane %v111, %v1242
    %v1245 = vmul.f32 %v1237, %v1243
    %v1246 = vmul.f32 %v1238, %v1243
    %v1248 = vlaneseq
    %v1249 = vshrl.u32 %v1248, 7
    %v1250 = vsub.s32 0, %v1249
    %v1251 = vrot.slane %v112, %v1250
    %v1253 = vadd.f32 %v1245, %v1251
    %v1254 = vadd.f32 %v1246, %v1251
    %1255 = vst.msk [vmem:[%s8] sm:$0xff] %vm59, %v1253
    %1256 = vst.msk [vmem:[%s8 + $0x8] sm:$0xff] %vm59, %v1254
    // Predicated region
    $region34: #{decoder_forward.6} parent=1 // pred_check
      _
    $region35: #{decoder_forward.6} parent=1 // pred_check_branch
      %1258 = sbr.rel (0) target = $region37
    $region36: #{decoder_forward.6} parent=1 // pred_region
      _
    $region37: #{decoder_forward.6} parent=1 // pred_fallthru
      _
    // Predicated region
    $region38: #{decoder_forward.6} parent=1 // pred_check
      _
    $region39: #{decoder_forward.6} parent=1 // pred_check_branch
      %1260 = sbr.rel (0) target = $region41
    $region40: #{decoder_forward.6} parent=1 // pred_region
      %s1262 = ssub.s32 1024, 1024
      %1263 = vsyncadd [#allocation3], %s1262
      %s1264 = sshll.u32 [#allocation2], 4
      %s1265 = int_to_ptr.vmem [resolvable:$true] %s1264
      %1270 = dma.vmem_to_hbm [thread:$0]  %s1265, 1024, %s9, [#allocation3], 128, 128, 8
    $region41: #{decoder_forward.6} parent=1 // pred_fallthru
      _
    // Predicated region
    $region42: #{decoder_forward.6} parent=1 // pred_check
      _
    $region43: #{decoder_forward.6} parent=1 // pred_check_branch
      %1272 = sbr.rel (0) target = $region45
    $region44: #{decoder_forward.6} parent=1 // pred_region
      _
    $region45: #{decoder_forward.6} parent=1 // pred_fallthru
      _
    // Predicated region
    $region46: #{decoder_forward.6} parent=1 // pred_check
      _
    $region47: #{decoder_forward.6} parent=1 // pred_check_branch
      %1274 = sbr.rel (0) target = $region49
    $region48: #{decoder_forward.6} parent=1 // pred_region
      %1275 = dma.done [#allocation3], 1024
    $region49: #{decoder_forward.6} parent=1 // pred_fallthru
      _
    %1276 = vsyncpa [#allocation3], 1

// kernel: decoder_forward.7
$region0: #{decoder_forward.7}
  #allocation0 [shape = 'u32[]', space=smem, size = 0x4, offset = 0x4, fixed_abs, tag = 'smem constant byte address 0x4 - core index']
  #allocation1 [shape = 'u32[144,128]{1,0:T(1,128)}', space=vmem, size = 0x12000, scoped, tag = 'internal scratch']
  %s0 = inlined_call_operand.vmem [shape: f32[2,8,32], index: 0, kind: input, shape index: {}]
  %s1 = inlined_call_operand.vmem [shape: f32[2,8,32], index: 1, kind: input, shape index: {}]
  %s2 = inlined_call_operand.vmem [shape: f32[2,8,8], index: 2, kind: input, shape index: {}]
  %s3 = inlined_call_operand.vmem [shape: bf16[32,32], index: 3, kind: input, shape index: {}]
  %s4 = inlined_call_operand.vmem [shape: f32[1,32], index: 4, kind: input, shape index: {}]
  %s5 = inlined_call_operand.vmem [shape: bf16[32,64], index: 5, kind: input, shape index: {}]
  %s6 = inlined_call_operand.vmem [shape: f32[1,64], index: 6, kind: input, shape index: {}]
  %s7 = inlined_call_operand.vmem [shape: bf16[32,32], index: 7, kind: input, shape index: {}]
  %s8 = inlined_call_operand.vmem [shape: f32[1,32], index: 8, kind: input, shape index: {}]
  %s9 = inlined_call_operand.vmem [shape: f32[1,32], index: 9, kind: input, shape index: {}]
  %s10 = inlined_call_operand.vmem [shape: f32[1,32], index: 10, kind: input, shape index: {}]
  %s11 = inlined_call_operand.vmem [shape: f32[2,8,32], index: 11, kind: output, shape index: {0}]
  %s12 = inlined_call_operand.hbm [shape: f32[2,4,8,8], index: 12, kind: output, shape index: {1}]
  %13 = xla_tuple %s11, %s12
  %s14 = sld [smem:[#allocation0]]
  $region62: #{decoder_forward.7} parent=0
    _
  %s16 = ssub.s32 1, %s14
  %s17 = scalar_select 0, %s16, %s14
  $region1: #{decoder_forward.7} parent=0
    #allocation2 [shape = 'u8[32768]{0}', space=vmem, size = 0x8000, scoped, tag = 'output window, operand 1, single buffered']
    #allocation3 [shape = 's32[1]{0}', space=sflag, size = 0x4, scoped, tag = 'scoped memory for decoder_forward.7']
    %18 = vsyncpa [#allocation3], 0
    // Predicated region
    $region2: #{decoder_forward.7} parent=1 // pred_check
      _
    $region3: #{decoder_forward.7} parent=1 // pred_check_branch
      %20 = sbr.rel (0) target = $region5
    $region4: #{decoder_forward.7} parent=1 // pred_region
      _
    $region5: #{decoder_forward.7} parent=1 // pred_fallthru
      _
    // Predicated region
    $region6: #{decoder_forward.7} parent=1 // pred_check
      _
    $region7: #{decoder_forward.7} parent=1 // pred_check_branch
      %22 = sbr.rel (0) target = $region9
    $region8: #{decoder_forward.7} parent=1 // pred_region
      _
    $region9: #{decoder_forward.7} parent=1 // pred_fallthru
      _
    // Predicated region
    $region10: #{decoder_forward.7} parent=1 // pred_check
      _
    $region11: #{decoder_forward.7} parent=1 // pred_check_branch
      %24 = sbr.rel (0) target = $region13
    $region12: #{decoder_forward.7} parent=1 // pred_region
      _
    $region13: #{decoder_forward.7} parent=1 // pred_fallthru
      _
    // Predicated region
    $region14: #{decoder_forward.7} parent=1 // pred_check
      _
    $region15: #{decoder_forward.7} parent=1 // pred_check_branch
      %26 = sbr.rel (0) target = $region17
    $region16: #{decoder_forward.7} parent=1 // pred_region
      _
    $region17: #{decoder_forward.7} parent=1 // pred_fallthru
      _
    // Predicated region
    $region18: #{decoder_forward.7} parent=1 // pred_check
      _
    $region19: #{decoder_forward.7} parent=1 // pred_check_branch
      %28 = sbr.rel (0) target = $region21
    $region20: #{decoder_forward.7} parent=1 // pred_region
      _
    $region21: #{decoder_forward.7} parent=1 // pred_fallthru
      _
    // Predicated region
    $region22: #{decoder_forward.7} parent=1 // pred_check
      _
    $region23: #{decoder_forward.7} parent=1 // pred_check_branch
      %30 = sbr.rel (0) target = $region25
    $region24: #{decoder_forward.7} parent=1 // pred_region
      _
    $region25: #{decoder_forward.7} parent=1 // pred_fallthru
      _
    // Predicated region
    $region26: #{decoder_forward.7} parent=1 // pred_check
      _
    $region27: #{decoder_forward.7} parent=1 // pred_check_branch
      %32 = sbr.rel (0) target = $region29
    $region28: #{decoder_forward.7} parent=1 // pred_region
      _
    $region29: #{decoder_forward.7} parent=1 // pred_fallthru
      _
    // Predicated region
    $region30: #{decoder_forward.7} parent=1 // pred_check
      _
    $region31: #{decoder_forward.7} parent=1 // pred_check_branch
      %34 = sbr.rel (0) target = $region33
    $region32: #{decoder_forward.7} parent=1 // pred_region
      _
    $region33: #{decoder_forward.7} parent=1 // pred_fallthru
      _
    // Predicated region
    $region34: #{decoder_forward.7} parent=1 // pred_check
      _
    $region35: #{decoder_forward.7} parent=1 // pred_check_branch
      %36 = sbr.rel (0) target = $region37
    $region36: #{decoder_forward.7} parent=1 // pred_region
      _
    $region37: #{decoder_forward.7} parent=1 // pred_fallthru
      _
    // Predicated region
    $region38: #{decoder_forward.7} parent=1 // pred_check
      _
    $region39: #{decoder_forward.7} parent=1 // pred_check_branch
      %38 = sbr.rel (0) target = $region41
    $region40: #{decoder_forward.7} parent=1 // pred_region
      _
    $region41: #{decoder_forward.7} parent=1 // pred_fallthru
      _
    // Predicated region
    $region42: #{decoder_forward.7} parent=1 // pred_check
      _
    $region43: #{decoder_forward.7} parent=1 // pred_check_branch
      %40 = sbr.rel (0) target = $region45
    $region44: #{decoder_forward.7} parent=1 // pred_region
      _
    $region45: #{decoder_forward.7} parent=1 // pred_fallthru
      _
    %v42 = vld [vmem:[%s0] sm:$0xff]
    %v43 = vld [vmem:[%s0 + $0x8] sm:$0xff]
    %v44 = vld [vmem:[%s1] sm:$0xff]
    %v45 = vld [vmem:[%s1 + $0x8] sm:$0xff]
    %v46 = vld [vmem:[%s3] sm:$0xf]
    %v47 = vld [vmem:[%s3 + $0x4] sm:$0xf]
    %v48 = vld [vmem:[%s3 + $0x8] sm:$0xf]
    %v49 = vld [vmem:[%s3 + $0xc] sm:$0xf]
    %v50 = vpack.c.bf16 %v43, %v42
    %v51 = vld [vmem:[%s4] sm:$0x1]
    %v53 = vlaneseq
    %v54 = vshrl.u32 %v53, 7
    %v55 = vsub.s32 0, %v54
    %v56 = vrot.slane %v51, %v55
    %v62 = vunpack.c.l.b16 %v46
    %v63 = vunpack.c.l.b16 %v47
    %v64 = vunpack.c.l.b16 %v48
    %v65 = vunpack.c.l.b16 %v49
    %v66 = vpack.c.b16 %v63, %v62
    %v67 = vpack.c.b16 %v65, %v64
    %vm70 = vcmask 261120
    %v72 = vsel %vm70, %v50, 0
    %74 = vmatprep.subr.bf16.mxu0 0
    %75 = vmatpush1.bf16.msra.mxu0 %v66
    %76 = vmatprep.subr.bf16.mxu0 0
    %77 = vmatpush1.bf16.msra.mxu0 %v67
    %78 = vmatprep.subr.bf16.mxu0 0
    %79 = vmatpush1.bf16.msra.mxu0 0
    %80 = vmatprep.subr.bf16.mxu0 0
    %81 = vmatpush1.bf16.msra.mxu0 0
    %82 = vmatprep.subr.bf16.mxu0 0
    %83 = vmatpush1.bf16.msra.mxu0 0
    %84 = vmatprep.subr.bf16.mxu0 0
    %85 = vmatpush1.bf16.msra.mxu0 0
    %86 = vmatprep.subr.bf16.mxu0 0
    %87 = vmatpush1.bf16.msra.mxu0 0
    %88 = vmatprep.subr.bf16.mxu0 0
    %89 = vmatpush1.bf16.msra.mxu0 0
    %90 = vmatprep.subr.bf16.mxu0 0
    %91 = vmatpush1.bf16.msra.mxu0 0
    %92 = vmatprep.subr.bf16.mxu0 0
    %93 = vmatpush1.bf16.msra.mxu0 0
    %94 = vmatprep.subr.bf16.mxu0 0
    %95 = vmatpush1.bf16.msra.mxu0 0
    %96 = vmatprep.subr.bf16.mxu0 0
    %97 = vmatpush1.bf16.msra.mxu0 0
    %98 = vmatprep.subr.bf16.mxu0 0
    %99 = vmatpush1.bf16.msra.mxu0 0
    %100 = vmatprep.subr.bf16.mxu0 0
    %101 = vmatpush1.bf16.msra.mxu0 0
    %102 = vmatprep.subr.bf16.mxu0 0
    %103 = vmatpush1.bf16.msra.mxu0 0
    %104 = vmatprep.subr.bf16.mxu0 0
    %105 = vmatpush1.bf16.msra.mxu0 0
    %106 = vmatprep.mubr.bf16.mxu0 0
    %107 = vmatmul.mubr.bf16.gmra.mrb[0].mxu0 %v72
    %v108 = vpop.f32.mrb[0].mxu0
    %v109 = vadd.f32 %v56, %v108
    %v110 = vpop.f32.mrb[0].mxu0
    %v111 = vpop.f32.mrb[0].mxu0
    %v112 = vadd.f32 %v56, %v111
    %v113 = vpop.f32.mrb[0].mxu0
    %114 = vdwg.mxu0
    %v115 = vld [vmem:[%s5] sm:$0xf]
    %v116 = vld [vmem:[%s5 + $0x4] sm:$0xf]
    %v117 = vld [vmem:[%s5 + $0x8] sm:$0xf]
    %v118 = vld [vmem:[%s5 + $0xc] sm:$0xf]
    %v119 = vpack.c.bf16 %v45, %v44
    %v120 = vld [vmem:[%s6] sm:$0x1]
    %v122 = vlaneseq
    %v123 = vshrl.u32 %v122, 7
    %v124 = vsub.s32 0, %v123
    %v125 = vrot.slane %v120, %v124
    %v131 = vunpack.c.l.b16 %v115
    %v132 = vunpack.c.l.b16 %v116
    %v133 = vunpack.c.l.b16 %v117
    %v134 = vunpack.c.l.b16 %v118
    %v135 = vpack.c.b16 %v132, %v131
    %v136 = vpack.c.b16 %v134, %v133
    %v140 = vsel %vm70, %v119, 0
    %142 = vmatprep.subr.bf16.mxu0 0
    %143 = vmatpush1.bf16.msra.mxu0 %v135
    %144 = vmatprep.subr.bf16.mxu0 0
    %145 = vmatpush1.bf16.msra.mxu0 %v136
    %146 = vmatprep.subr.bf16.mxu0 0
    %147 = vmatpush1.bf16.msra.mxu0 0
    %148 = vmatprep.subr.bf16.mxu0 0
    %149 = vmatpush1.bf16.msra.mxu0 0
    %150 = vmatprep.subr.bf16.mxu0 0
    %151 = vmatpush1.bf16.msra.mxu0 0
    %152 = vmatprep.subr.bf16.mxu0 0
    %153 = vmatpush1.bf16.msra.mxu0 0
    %154 = vmatprep.subr.bf16.mxu0 0
    %155 = vmatpush1.bf16.msra.mxu0 0
    %156 = vmatprep.subr.bf16.mxu0 0
    %157 = vmatpush1.bf16.msra.mxu0 0
    %158 = vmatprep.subr.bf16.mxu0 0
    %159 = vmatpush1.bf16.msra.mxu0 0
    %160 = vmatprep.subr.bf16.mxu0 0
    %161 = vmatpush1.bf16.msra.mxu0 0
    %162 = vmatprep.subr.bf16.mxu0 0
    %163 = vmatpush1.bf16.msra.mxu0 0
    %164 = vmatprep.subr.bf16.mxu0 0
    %165 = vmatpush1.bf16.msra.mxu0 0
    %166 = vmatprep.subr.bf16.mxu0 0
    %167 = vmatpush1.bf16.msra.mxu0 0
    %168 = vmatprep.subr.bf16.mxu0 0
    %169 = vmatpush1.bf16.msra.mxu0 0
    %170 = vmatprep.subr.bf16.mxu0 0
    %171 = vmatpush1.bf16.msra.mxu0 0
    %172 = vmatprep.subr.bf16.mxu0 0
    %173 = vmatpush1.bf16.msra.mxu0 0
    %174 = vmatprep.mubr.bf16.mxu0 0
    %175 = vmatmul.mubr.bf16.gmra.mrb[0].mxu0 %v140
    %v176 = vpop.f32.mrb[0].mxu0
    %v177 = vadd.f32 %v125, %v176
    %v178 = vpop.f32.mrb[0].mxu0
    %v179 = vpop.f32.mrb[0].mxu0
    %v180 = vadd.f32 %v125, %v179
    %v181 = vpop.f32.mrb[0].mxu0
    %182 = vdwg.mxu0
    %v183 = vld [vmem:[%s2] sm:$0xff]
    %v184 = vld [vmem:[%s2 + $0x8] sm:$0xff]
    %v185 = vld [vmem:[%s7] sm:$0xf]
    %v186 = vld [vmem:[%s7 + $0x4] sm:$0xf]
    %v187 = vld [vmem:[%s7 + $0x8] sm:$0xf]
    %v188 = vld [vmem:[%s7 + $0xc] sm:$0xf]
    %v189 = vld [vmem:[%s8] sm:$0x1]
    %v190 = vld [vmem:[%s9] sm:$0x1]
    %v191 = vld [vmem:[%s10] sm:$0x1]
    %v192 = vpack.c.bf16 %v109, %v109
    %v193 = vpack.c.bf16 %v112, %v112
    %v194 = vpack.c.bf16 %v177, %v177
    %v195 = vpack.c.bf16 %v180, %v180
    %vm196 = vcmask 64512
    %v198 = vsel %vm196, %v192, 0
    %v201 = vsel %vm196, %v194, 0
    %203 = vmatprep.subr.bf16.mxu0 0
    %204 = vmatpush1.bf16.xpose.msra.mxu0 %v201
    %205 = vmatprep.subr.bf16.mxu0 0
    %206 = vmatpush1.bf16.xpose.msra.mxu0 0
    %207 = vmatprep.subr.bf16.mxu0 0
    %208 = vmatpush1.bf16.xpose.msra.mxu0 0
    %209 = vmatprep.subr.bf16.mxu0 0
    %210 = vmatpush1.bf16.xpose.msra.mxu0 0
    %211 = vmatprep.subr.bf16.mxu0 0
    %212 = vmatpush1.bf16.xpose.msra.mxu0 0
    %213 = vmatprep.subr.bf16.mxu0 0
    %214 = vmatpush1.bf16.xpose.msra.mxu0 0
    %215 = vmatprep.subr.bf16.mxu0 0
    %216 = vmatpush1.bf16.xpose.msra.mxu0 0
    %217 = vmatprep.subr.bf16.mxu0 0
    %218 = vmatpush1.bf16.xpose.msra.mxu0 0
    %219 = vmatprep.subr.bf16.mxu0 0
    %220 = vmatpush1.bf16.xpose.msra.mxu0 0
    %221 = vmatprep.subr.bf16.mxu0 0
    %222 = vmatpush1.bf16.xpose.msra.mxu0 0
    %223 = vmatprep.subr.bf16.mxu0 0
    %224 = vmatpush1.bf16.xpose.msra.mxu0 0
    %225 = vmatprep.subr.bf16.mxu0 0
    %226 = vmatpush1.bf16.xpose.msra.mxu0 0
    %227 = vmatprep.subr.bf16.mxu0 0
    %228 = vmatpush1.bf16.xpose.msra.mxu0 0
    %229 = vmatprep.subr.bf16.mxu0 0
    %230 = vmatpush1.bf16.xpose.msra.mxu0 0
    %231 = vmatprep.subr.bf16.mxu0 0
    %232 = vmatpush1.bf16.xpose.msra.mxu0 0
    %233 = vmatprep.subr.bf16.mxu0 0
    %234 = vmatpush1.bf16.xpose.msra.mxu0 0
    %235 = vmatprep.mubr.bf16.mxu0 0
    %236 = vmatmul.mubr.bf16.gmra.mrb[0].mxu0 %v198
    %v237 = vpop.f32.mrb[0].mxu0
    %v238 = vadd.f32 %v183, %v237
    %v239 = vpop.f32.mrb[0].mxu0
    %v240 = vpop.f32.mrb[0].mxu0
    %v241 = vpop.f32.mrb[0].mxu0
    %242 = vdwg.mxu0
    %v244 = vsel %vm196, %v193, 0
    %v247 = vsel %vm196, %v195, 0
    %249 = vmatprep.subr.bf16.mxu0 0
    %250 = vmatpush1.bf16.xpose.msra.mxu0 %v247
    %251 = vmatprep.subr.bf16.mxu0 0
    %252 = vmatpush1.bf16.xpose.msra.mxu0 0
    %253 = vmatprep.subr.bf16.mxu0 0
    %254 = vmatpush1.bf16.xpose.msra.mxu0 0
    %255 = vmatprep.subr.bf16.mxu0 0
    %256 = vmatpush1.bf16.xpose.msra.mxu0 0
    %257 = vmatprep.subr.bf16.mxu0 0
    %258 = vmatpush1.bf16.xpose.msra.mxu0 0
    %259 = vmatprep.subr.bf16.mxu0 0
    %260 = vmatpush1.bf16.xpose.msra.mxu0 0
    %261 = vmatprep.subr.bf16.mxu0 0
    %262 = vmatpush1.bf16.xpose.msra.mxu0 0
    %263 = vmatprep.subr.bf16.mxu0 0
    %264 = vmatpush1.bf16.xpose.msra.mxu0 0
    %265 = vmatprep.subr.bf16.mxu0 0
    %266 = vmatpush1.bf16.xpose.msra.mxu0 0
    %267 = vmatprep.subr.bf16.mxu0 0
    %268 = vmatpush1.bf16.xpose.msra.mxu0 0
    %269 = vmatprep.subr.bf16.mxu0 0
    %270 = vmatpush1.bf16.xpose.msra.mxu0 0
    %271 = vmatprep.subr.bf16.mxu0 0
    %272 = vmatpush1.bf16.xpose.msra.mxu0 0
    %273 = vmatprep.subr.bf16.mxu0 0
    %274 = vmatpush1.bf16.xpose.msra.mxu0 0
    %275 = vmatprep.subr.bf16.mxu0 0
    %276 = vmatpush1.bf16.xpose.msra.mxu0 0
    %277 = vmatprep.subr.bf16.mxu0 0
    %278 = vmatpush1.bf16.xpose.msra.mxu0 0
    %279 = vmatprep.subr.bf16.mxu0 0
    %280 = vmatpush1.bf16.xpose.msra.mxu0 0
    %281 = vmatprep.mubr.bf16.mxu0 0
    %282 = vmatmul.mubr.bf16.gmra.mrb[0].mxu0 %v244
    %v283 = vpop.f32.mrb[0].mxu0
    %v284 = vadd.f32 %v184, %v283
    %v285 = vpop.f32.mrb[0].mxu0
    %v286 = vpop.f32.mrb[0].mxu0
    %v287 = vpop.f32.mrb[0].mxu0
    %288 = vdwg.mxu0
    %v289 = vsel %vm196, %v238, -inf
    %290 = vmax.xlane.f32.xlu0 %v289
    %v291 = vpop.xlane.xlu0 %290
    %v292 = vsel %vm196, %v284, -inf
    %293 = vmax.xlane.f32.xlu0 %v292
    %v294 = vpop.xlane.xlu0 %293
    %v295 = vsub.f32 %v238, %v291
    %v296 = vsub.f32 %v284, %v294
    %v297 = vmul.f32 %v295, 1.442695
    %v298 = vpow.pop %v297
    %v299 = vmul.f32 %v296, 1.442695
    %v300 = vpow.pop %v299
    %v301 = vsel %vm196, %v298, 0.0
    %302 = vadd.xlane.f32.xlu0 %v301
    %v303 = vpop.xlane.xlu0 %302
    %v304 = vsel %vm196, %v300, 0.0
    %305 = vadd.xlane.f32.xlu0 %v304
    %v306 = vpop.xlane.xlu0 %305
    %v307 = vrcp.pop %v303
    %v308 = vmul.f32 %v298, %v307
    %v309 = vrcp.pop %v306
    %v310 = vmul.f32 %v300, %v309
    %311 = vst.msk [vmem:[#allocation2] sm:$0xff] %vm196, %v308
    %312 = vst.msk [vmem:[#allocation2 + $0x20] sm:$0xff] %vm196, %v310
    %v313 = vpack.c.bf16 %v308, %v308
    %v314 = vpack.c.bf16 %v310, %v310
    %316 = vrot.lane.b32.xlu0 %v194, 96
    %v317 = vpop.permute.xlu0 %316
    %v319 = vsel %vm196, %v313, 0
    %vm321 = vcmask 1043456
    %v323 = vsel %vm321, %v317, 0
    %325 = vmatprep.subr.bf16.mxu0 0
    %326 = vmatpush1.bf16.msra.mxu0 %v323
    %327 = vmatprep.subr.bf16.mxu0 0
    %328 = vmatpush1.bf16.msra.mxu0 0
    %329 = vmatprep.subr.bf16.mxu0 0
    %330 = vmatpush1.bf16.msra.mxu0 0
    %331 = vmatprep.subr.bf16.mxu0 0
    %332 = vmatpush1.bf16.msra.mxu0 0
    %333 = vmatprep.subr.bf16.mxu0 0
    %334 = vmatpush1.bf16.msra.mxu0 0
    %335 = vmatprep.subr.bf16.mxu0 0
    %336 = vmatpush1.bf16.msra.mxu0 0
    %337 = vmatprep.subr.bf16.mxu0 0
    %338 = vmatpush1.bf16.msra.mxu0 0
    %339 = vmatprep.subr.bf16.mxu0 0
    %340 = vmatpush1.bf16.msra.mxu0 0
    %341 = vmatprep.subr.bf16.mxu0 0
    %342 = vmatpush1.bf16.msra.mxu0 0
    %343 = vmatprep.subr.bf16.mxu0 0
    %344 = vmatpush1.bf16.msra.mxu0 0
    %345 = vmatprep.subr.bf16.mxu0 0
    %346 = vmatpush1.bf16.msra.mxu0 0
    %347 = vmatprep.subr.bf16.mxu0 0
    %348 = vmatpush1.bf16.msra.mxu0 0
    %349 = vmatprep.subr.bf16.mxu0 0
    %350 = vmatpush1.bf16.msra.mxu0 0
    %351 = vmatprep.subr.bf16.mxu0 0
    %352 = vmatpush1.bf16.msra.mxu0 0
    %353 = vmatprep.subr.bf16.mxu0 0
    %354 = vmatpush1.bf16.msra.mxu0 0
    %355 = vmatprep.subr.bf16.mxu0 0
    %356 = vmatpush1.bf16.msra.mxu0 0
    %357 = vmatprep.mubr.bf16.mxu0 0
    %358 = vmatmul.mubr.bf16.gmra.mrb[0].mxu0 %v319
    %v359 = vpop.f32.mrb[0].mxu0
    %v360 = vadd.f32 0.0, %v359
    %v361 = vpop.f32.mrb[0].mxu0
    %v362 = vpop.f32.mrb[0].mxu0
    %v363 = vpop.f32.mrb[0].mxu0
    %364 = vdwg.mxu0
    %366 = vrot.lane.b32.xlu0 %v195, 96
    %v367 = vpop.permute.xlu0 %366
    %v369 = vsel %vm196, %v314, 0
    %v372 = vsel %vm321, %v367, 0
    %374 = vmatprep.subr.bf16.mxu0 0
    %375 = vmatpush1.bf16.msra.mxu0 %v372
    %376 = vmatprep.subr.bf16.mxu0 0
    %377 = vmatpush1.bf16.msra.mxu0 0
    %378 = vmatprep.subr.bf16.mxu0 0
    %379 = vmatpush1.bf16.msra.mxu0 0
    %380 = vmatprep.subr.bf16.mxu0 0
    %381 = vmatpush1.bf16.msra.mxu0 0
    %382 = vmatprep.subr.bf16.mxu0 0
    %383 = vmatpush1.bf16.msra.mxu0 0
    %384 = vmatprep.subr.bf16.mxu0 0
    %385 = vmatpush1.bf16.msra.mxu0 0
    %386 = vmatprep.subr.bf16.mxu0 0
    %387 = vmatpush1.bf16.msra.mxu0 0
    %388 = vmatprep.subr.bf16.mxu0 0
    %389 = vmatpush1.bf16.msra.mxu0 0
    %390 = vmatprep.subr.bf16.mxu0 0
    %391 = vmatpush1.bf16.msra.mxu0 0
    %392 = vmatprep.subr.bf16.mxu0 0
    %393 = vmatpush1.bf16.msra.mxu0 0
    %394 = vmatprep.subr.bf16.mxu0 0
    %395 = vmatpush1.bf16.msra.mxu0 0
    %396 = vmatprep.subr.bf16.mxu0 0
    %397 = vmatpush1.bf16.msra.mxu0 0
    %398 = vmatprep.subr.bf16.mxu0 0
    %399 = vmatpush1.bf16.msra.mxu0 0
    %400 = vmatprep.subr.bf16.mxu0 0
    %401 = vmatpush1.bf16.msra.mxu0 0
    %402 = vmatprep.subr.bf16.mxu0 0
    %403 = vmatpush1.bf16.msra.mxu0 0
    %404 = vmatprep.subr.bf16.mxu0 0
    %405 = vmatpush1.bf16.msra.mxu0 0
    %406 = vmatprep.mubr.bf16.mxu0 0
    %407 = vmatmul.mubr.bf16.gmra.mrb[0].mxu0 %v369
    %v408 = vpop.f32.mrb[0].mxu0
    %v409 = vadd.f32 0.0, %v408
    %v410 = vpop.f32.mrb[0].mxu0
    %v411 = vpop.f32.mrb[0].mxu0
    %v412 = vpop.f32.mrb[0].mxu0
    %413 = vdwg.mxu0
    %v414 = vpack.c.bf16 %v409, %v360
    %416 = vrot.lane.b32.xlu0 %v192, 120
    %v417 = vpop.permute.xlu0 %416
    %418 = vrot.lane.b32.xlu0 %v194, 120
    %v419 = vpop.permute.xlu0 %418
    %v421 = vsel %vm196, %v417, 0
    %v424 = vsel %vm196, %v419, 0
    %426 = vmatprep.subr.bf16.mxu0 0
    %427 = vmatpush1.bf16.xpose.msra.mxu0 %v424
    %428 = vmatprep.subr.bf16.mxu0 0
    %429 = vmatpush1.bf16.xpose.msra.mxu0 0
    %430 = vmatprep.subr.bf16.mxu0 0
    %431 = vmatpush1.bf16.xpose.msra.mxu0 0
    %432 = vmatprep.subr.bf16.mxu0 0
    %433 = vmatpush1.bf16.xpose.msra.mxu0 0
    %434 = vmatprep.subr.bf16.mxu0 0
    %435 = vmatpush1.bf16.xpose.msra.mxu0 0
    %436 = vmatprep.subr.bf16.mxu0 0
    %437 = vmatpush1.bf16.xpose.msra.mxu0 0
    %438 = vmatprep.subr.bf16.mxu0 0
    %439 = vmatpush1.bf16.xpose.msra.mxu0 0
    %440 = vmatprep.subr.bf16.mxu0 0
    %441 = vmatpush1.bf16.xpose.msra.mxu0 0
    %442 = vmatprep.subr.bf16.mxu0 0
    %443 = vmatpush1.bf16.xpose.msra.mxu0 0
    %444 = vmatprep.subr.bf16.mxu0 0
    %445 = vmatpush1.bf16.xpose.msra.mxu0 0
    %446 = vmatprep.subr.bf16.mxu0 0
    %447 = vmatpush1.bf16.xpose.msra.mxu0 0
    %448 = vmatprep.subr.bf16.mxu0 0
    %449 = vmatpush1.bf16.xpose.msra.mxu0 0
    %450 = vmatprep.subr.bf16.mxu0 0
    %451 = vmatpush1.bf16.xpose.msra.mxu0 0
    %452 = vmatprep.subr.bf16.mxu0 0
    %453 = vmatpush1.bf16.xpose.msra.mxu0 0
    %454 = vmatprep.subr.bf16.mxu0 0
    %455 = vmatpush1.bf16.xpose.msra.mxu0 0
    %456 = vmatprep.subr.bf16.mxu0 0
    %457 = vmatpush1.bf16.xpose.msra.mxu0 0
    %458 = vmatprep.mubr.bf16.mxu0 0
    %459 = vmatmul.mubr.bf16.gmra.mrb[0].mxu0 %v421
    %v460 = vpop.f32.mrb[0].mxu0
    %v461 = vadd.f32 %v183, %v460
    %v462 = vpop.f32.mrb[0].mxu0
    %v463 = vpop.f32.mrb[0].mxu0
    %v464 = vpop.f32.mrb[0].mxu0
    %465 = vdwg.mxu0
    %467 = vrot.lane.b32.xlu0 %v193, 120
    %v468 = vpop.permute.xlu0 %467
    %469 = vrot.lane.b32.xlu0 %v195, 120
    %v470 = vpop.permute.xlu0 %469
    %v472 = vsel %vm196, %v468, 0
    %v475 = vsel %vm196, %v470, 0
    %477 = vmatprep.subr.bf16.mxu0 0
    %478 = vmatpush1.bf16.xpose.msra.mxu0 %v475
    %479 = vmatprep.subr.bf16.mxu0 0
    %480 = vmatpush1.bf16.xpose.msra.mxu0 0
    %481 = vmatprep.subr.bf16.mxu0 0
    %482 = vmatpush1.bf16.xpose.msra.mxu0 0
    %483 = vmatprep.subr.bf16.mxu0 0
    %484 = vmatpush1.bf16.xpose.msra.mxu0 0
    %485 = vmatprep.subr.bf16.mxu0 0
    %486 = vmatpush1.bf16.xpose.msra.mxu0 0
    %487 = vmatprep.subr.bf16.mxu0 0
    %488 = vmatpush1.bf16.xpose.msra.mxu0 0
    %489 = vmatprep.subr.bf16.mxu0 0
    %490 = vmatpush1.bf16.xpose.msra.mxu0 0
    %491 = vmatprep.subr.bf16.mxu0 0
    %492 = vmatpush1.bf16.xpose.msra.mxu0 0
    %493 = vmatprep.subr.bf16.mxu0 0
    %494 = vmatpush1.bf16.xpose.msra.mxu0 0
    %495 = vmatprep.subr.bf16.mxu0 0
    %496 = vmatpush1.bf16.xpose.msra.mxu0 0
    %497 = vmatprep.subr.bf16.mxu0 0
    %498 = vmatpush1.bf16.xpose.msra.mxu0 0
    %499 = vmatprep.subr.bf16.mxu0 0
    %500 = vmatpush1.bf16.xpose.msra.mxu0 0
    %501 = vmatprep.subr.bf16.mxu0 0
    %502 = vmatpush1.bf16.xpose.msra.mxu0 0
    %503 = vmatprep.subr.bf16.mxu0 0
    %504 = vmatpush1.bf16.xpose.msra.mxu0 0
    %505 = vmatprep.subr.bf16.mxu0 0
    %506 = vmatpush1.bf16.xpose.msra.mxu0 0
    %507 = vmatprep.subr.bf16.mxu0 0
    %508 = vmatpush1.bf16.xpose.msra.mxu0 0
    %509 = vmatprep.mubr.bf16.mxu0 0
    %510 = vmatmul.mubr.bf16.gmra.mrb[0].mxu0 %v472
    %v511 = vpop.f32.mrb[0].mxu0
    %v512 = vadd.f32 %v184, %v511
    %v513 = vpop.f32.mrb[0].mxu0
    %v514 = vpop.f32.mrb[0].mxu0
    %v515 = vpop.f32.mrb[0].mxu0
    %516 = vdwg.mxu0
    %v517 = vsel %vm196, %v461, -inf
    %518 = vmax.xlane.f32.xlu0 %v517
    %v519 = vpop.xlane.xlu0 %518
    %v520 = vsel %vm196, %v512, -inf
    %521 = vmax.xlane.f32.xlu0 %v520
    %v522 = vpop.xlane.xlu0 %521
    %v523 = vsub.f32 %v461, %v519
    %v524 = vsub.f32 %v512, %v522
    %v525 = vmul.f32 %v523, 1.442695
    %v526 = vpow.pop %v525
    %v527 = vmul.f32 %v524, 1.442695
    %v528 = vpow.pop %v527
    %v529 = vsel %vm196, %v526, 0.0
    %530 = vadd.xlane.f32.xlu0 %v529
    %v531 = vpop.xlane.xlu0 %530
    %v532 = vsel %vm196, %v528, 0.0
    %533 = vadd.xlane.f32.xlu0 %v532
    %v534 = vpop.xlane.xlu0 %533
    %v535 = vrcp.pop %v531
    %v536 = vmul.f32 %v526, %v535
    %v537 = vrcp.pop %v534
    %v538 = vmul.f32 %v528, %v537
    %s539 = scalar_lea.vmem [#allocation2], 8
    %540 = vst.msk [vmem:[%s539] sm:$0xff] %vm196, %v536
    %541 = vst.msk [vmem:[%s539 + $0x20] sm:$0xff] %vm196, %v538
    %v542 = vpack.c.bf16 %v536, %v536
    %v543 = vpack.c.bf16 %v538, %v538
    %544 = vrot.lane.b32.xlu0 %v194, 88
    %v545 = vpop.permute.xlu0 %544
    %v547 = vsel %vm196, %v542, 0
    %v550 = vsel %vm321, %v545, 0
    %552 = vmatprep.subr.bf16.mxu0 0
    %553 = vmatpush1.bf16.msra.mxu0 %v550
    %554 = vmatprep.subr.bf16.mxu0 0
    %555 = vmatpush1.bf16.msra.mxu0 0
    %556 = vmatprep.subr.bf16.mxu0 0
    %557 = vmatpush1.bf16.msra.mxu0 0
    %558 = vmatprep.subr.bf16.mxu0 0
    %559 = vmatpush1.bf16.msra.mxu0 0
    %560 = vmatprep.subr.bf16.mxu0 0
    %561 = vmatpush1.bf16.msra.mxu0 0
    %562 = vmatprep.subr.bf16.mxu0 0
    %563 = vmatpush1.bf16.msra.mxu0 0
    %564 = vmatprep.subr.bf16.mxu0 0
    %565 = vmatpush1.bf16.msra.mxu0 0
    %566 = vmatprep.subr.bf16.mxu0 0
    %567 = vmatpush1.bf16.msra.mxu0 0
    %568 = vmatprep.subr.bf16.mxu0 0
    %569 = vmatpush1.bf16.msra.mxu0 0
    %570 = vmatprep.subr.bf16.mxu0 0
    %571 = vmatpush1.bf16.msra.mxu0 0
    %572 = vmatprep.subr.bf16.mxu0 0
    %573 = vmatpush1.bf16.msra.mxu0 0
    %574 = vmatprep.subr.bf16.mxu0 0
    %575 = vmatpush1.bf16.msra.mxu0 0
    %576 = vmatprep.subr.bf16.mxu0 0
    %577 = vmatpush1.bf16.msra.mxu0 0
    %578 = vmatprep.subr.bf16.mxu0 0
    %579 = vmatpush1.bf16.msra.mxu0 0
    %580 = vmatprep.subr.bf16.mxu0 0
    %581 = vmatpush1.bf16.msra.mxu0 0
    %582 = vmatprep.subr.bf16.mxu0 0
    %583 = vmatpush1.bf16.msra.mxu0 0
    %584 = vmatprep.mubr.bf16.mxu0 0
    %585 = vmatmul.mubr.bf16.gmra.mrb[0].mxu0 %v547
    %v586 = vpop.f32.mrb[0].mxu0
    %v587 = vadd.f32 0.0, %v586
    %v588 = vpop.f32.mrb[0].mxu0
    %v589 = vpop.f32.mrb[0].mxu0
    %v590 = vpop.f32.mrb[0].mxu0
    %591 = vdwg.mxu0
    %592 = vrot.lane.b32.xlu0 %v195, 88
    %v593 = vpop.permute.xlu0 %592
    %v595 = vsel %vm196, %v543, 0
    %v598 = vsel %vm321, %v593, 0
    %600 = vmatprep.subr.bf16.mxu0 0
    %601 = vmatpush1.bf16.msra.mxu0 %v598
    %602 = vmatprep.subr.bf16.mxu0 0
    %603 = vmatpush1.bf16.msra.mxu0 0
    %604 = vmatprep.subr.bf16.mxu0 0
    %605 = vmatpush1.bf16.msra.mxu0 0
    %606 = vmatprep.subr.bf16.mxu0 0
    %607 = vmatpush1.bf16.msra.mxu0 0
    %608 = vmatprep.subr.bf16.mxu0 0
    %609 = vmatpush1.bf16.msra.mxu0 0
    %610 = vmatprep.subr.bf16.mxu0 0
    %611 = vmatpush1.bf16.msra.mxu0 0
    %612 = vmatprep.subr.bf16.mxu0 0
    %613 = vmatpush1.bf16.msra.mxu0 0
    %614 = vmatprep.subr.bf16.mxu0 0
    %615 = vmatpush1.bf16.msra.mxu0 0
    %616 = vmatprep.subr.bf16.mxu0 0
    %617 = vmatpush1.bf16.msra.mxu0 0
    %618 = vmatprep.subr.bf16.mxu0 0
    %619 = vmatpush1.bf16.msra.mxu0 0
    %620 = vmatprep.subr.bf16.mxu0 0
    %621 = vmatpush1.bf16.msra.mxu0 0
    %622 = vmatprep.subr.bf16.mxu0 0
    %623 = vmatpush1.bf16.msra.mxu0 0
    %624 = vmatprep.subr.bf16.mxu0 0
    %625 = vmatpush1.bf16.msra.mxu0 0
    %626 = vmatprep.subr.bf16.mxu0 0
    %627 = vmatpush1.bf16.msra.mxu0 0
    %628 = vmatprep.subr.bf16.mxu0 0
    %629 = vmatpush1.bf16.msra.mxu0 0
    %630 = vmatprep.subr.bf16.mxu0 0
    %631 = vmatpush1.bf16.msra.mxu0 0
    %632 = vmatprep.mubr.bf16.mxu0 0
    %633 = vmatmul.mubr.bf16.gmra.mrb[0].mxu0 %v595
    %v634 = vpop.f32.mrb[0].mxu0
    %v635 = vadd.f32 0.0, %v634
    %v636 = vpop.f32.mrb[0].mxu0
    %v637 = vpop.f32.mrb[0].mxu0
    %v638 = vpop.f32.mrb[0].mxu0
    %639 = vdwg.mxu0
    %v640 = vpack.c.bf16 %v635, %v587
    %v642 = vsel %vm196, %v640, 0
    %v645 = vsel %vm321, %v186, 0
    %647 = vmatprep.subr.bf16.mxu0 0
    %648 = vmatpush1.bf16.msra.mxu0 %v645
    %649 = vmatprep.subr.bf16.mxu0 0
    %650 = vmatpush1.bf16.msra.mxu0 0
    %651 = vmatprep.subr.bf16.mxu0 0
    %652 = vmatpush1.bf16.msra.mxu0 0
    %653 = vmatprep.subr.bf16.mxu0 0
    %654 = vmatpush1.bf16.msra.mxu0 0
    %655 = vmatprep.subr.bf16.mxu0 0
    %656 = vmatpush1.bf16.msra.mxu0 0
    %657 = vmatprep.subr.bf16.mxu0 0
    %658 = vmatpush1.bf16.msra.mxu0 0
    %659 = vmatprep.subr.bf16.mxu0 0
    %660 = vmatpush1.bf16.msra.mxu0 0
    %661 = vmatprep.subr.bf16.mxu0 0
    %662 = vmatpush1.bf16.msra.mxu0 0
    %663 = vmatprep.subr.bf16.mxu0 0
    %664 = vmatpush1.bf16.msra.mxu0 0
    %665 = vmatprep.subr.bf16.mxu0 0
    %666 = vmatpush1.bf16.msra.mxu0 0
    %667 = vmatprep.subr.bf16.mxu0 0
    %668 = vmatpush1.bf16.msra.mxu0 0
    %669 = vmatprep.subr.bf16.mxu0 0
    %670 = vmatpush1.bf16.msra.mxu0 0
    %671 = vmatprep.subr.bf16.mxu0 0
    %672 = vmatpush1.bf16.msra.mxu0 0
    %673 = vmatprep.subr.bf16.mxu0 0
    %674 = vmatpush1.bf16.msra.mxu0 0
    %675 = vmatprep.subr.bf16.mxu0 0
    %676 = vmatpush1.bf16.msra.mxu0 0
    %677 = vmatprep.subr.bf16.mxu0 0
    %678 = vmatpush1.bf16.msra.mxu0 0
    %679 = vmatprep.mubr.bf16.mxu0 0
    %680 = vmatmul.mubr.bf16.gmra.mrb[0].mxu0 %v642
    %v681 = vpop.f32.mrb[0].mxu0
    %v682 = vadd.f32 0.0, %v681
    %v683 = vpop.f32.mrb[0].mxu0
    %v684 = vpop.f32.mrb[0].mxu0
    %v685 = vadd.f32 0.0, %v684
    %v686 = vpop.f32.mrb[0].mxu0
    %687 = vdwg.mxu0
    %v689 = vsel %vm196, %v414, 0
    %v692 = vsel %vm321, %v185, 0
    %694 = vmatprep.subr.bf16.mxu0 0
    %695 = vmatpush1.bf16.msra.mxu0 %v692
    %696 = vmatprep.subr.bf16.mxu0 0
    %697 = vmatpush1.bf16.msra.mxu0 0
    %698 = vmatprep.subr.bf16.mxu0 0
    %699 = vmatpush1.bf16.msra.mxu0 0
    %700 = vmatprep.subr.bf16.mxu0 0
    %701 = vmatpush1.bf16.msra.mxu0 0
    %702 = vmatprep.subr.bf16.mxu0 0
    %703 = vmatpush1.bf16.msra.mxu0 0
    %704 = vmatprep.subr.bf16.mxu0 0
    %705 = vmatpush1.bf16.msra.mxu0 0
    %706 = vmatprep.subr.bf16.mxu0 0
    %707 = vmatpush1.bf16.msra.mxu0 0
    %708 = vmatprep.subr.bf16.mxu0 0
    %709 = vmatpush1.bf16.msra.mxu0 0
    %710 = vmatprep.subr.bf16.mxu0 0
    %711 = vmatpush1.bf16.msra.mxu0 0
    %712 = vmatprep.subr.bf16.mxu0 0
    %713 = vmatpush1.bf16.msra.mxu0 0
    %714 = vmatprep.subr.bf16.mxu0 0
    %715 = vmatpush1.bf16.msra.mxu0 0
    %716 = vmatprep.subr.bf16.mxu0 0
    %717 = vmatpush1.bf16.msra.mxu0 0
    %718 = vmatprep.subr.bf16.mxu0 0
    %719 = vmatpush1.bf16.msra.mxu0 0
    %720 = vmatprep.subr.bf16.mxu0 0
    %721 = vmatpush1.bf16.msra.mxu0 0
    %722 = vmatprep.subr.bf16.mxu0 0
    %723 = vmatpush1.bf16.msra.mxu0 0
    %724 = vmatprep.subr.bf16.mxu0 0
    %725 = vmatpush1.bf16.msra.mxu0 0
    %726 = vmatprep.mubr.bf16.mxu0 0
    %727 = vmatmul.mubr.bf16.gmra.mrb[0].mxu0 %v689
    %v728 = vpop.f32.mrb[0].mxu0
    %v729 = vadd.f32 %v682, %v728
    %v730 = vpop.f32.mrb[0].mxu0
    %v731 = vpop.f32.mrb[0].mxu0
    %v732 = vadd.f32 %v685, %v731
    %v733 = vpop.f32.mrb[0].mxu0
    %734 = vdwg.mxu0
    %735 = vrot.lane.b32.xlu0 %v192, 112
    %v736 = vpop.permute.xlu0 %735
    %737 = vrot.lane.b32.xlu0 %v194, 112
    %v738 = vpop.permute.xlu0 %737
    %v740 = vsel %vm196, %v736, 0
    %v743 = vsel %vm196, %v738, 0
    %745 = vmatprep.subr.bf16.mxu0 0
    %746 = vmatpush1.bf16.xpose.msra.mxu0 %v743
    %747 = vmatprep.subr.bf16.mxu0 0
    %748 = vmatpush1.bf16.xpose.msra.mxu0 0
    %749 = vmatprep.subr.bf16.mxu0 0
    %750 = vmatpush1.bf16.xpose.msra.mxu0 0
    %751 = vmatprep.subr.bf16.mxu0 0
    %752 = vmatpush1.bf16.xpose.msra.mxu0 0
    %753 = vmatprep.subr.bf16.mxu0 0
    %754 = vmatpush1.bf16.xpose.msra.mxu0 0
    %755 = vmatprep.subr.bf16.mxu0 0
    %756 = vmatpush1.bf16.xpose.msra.mxu0 0
    %757 = vmatprep.subr.bf16.mxu0 0
    %758 = vmatpush1.bf16.xpose.msra.mxu0 0
    %759 = vmatprep.subr.bf16.mxu0 0
    %760 = vmatpush1.bf16.xpose.msra.mxu0 0
    %761 = vmatprep.subr.bf16.mxu0 0
    %762 = vmatpush1.bf16.xpose.msra.mxu0 0
    %763 = vmatprep.subr.bf16.mxu0 0
    %764 = vmatpush1.bf16.xpose.msra.mxu0 0
    %765 = vmatprep.subr.bf16.mxu0 0
    %766 = vmatpush1.bf16.xpose.msra.mxu0 0
    %767 = vmatprep.subr.bf16.mxu0 0
    %768 = vmatpush1.bf16.xpose.msra.mxu0 0
    %769 = vmatprep.subr.bf16.mxu0 0
    %770 = vmatpush1.bf16.xpose.msra.mxu0 0
    %771 = vmatprep.subr.bf16.mxu0 0
    %772 = vmatpush1.bf16.xpose.msra.mxu0 0
    %773 = vmatprep.subr.bf16.mxu0 0
    %774 = vmatpush1.bf16.xpose.msra.mxu0 0
    %775 = vmatprep.subr.bf16.mxu0 0
    %776 = vmatpush1.bf16.xpose.msra.mxu0 0
    %777 = vmatprep.mubr.bf16.mxu0 0
    %778 = vmatmul.mubr.bf16.gmra.mrb[0].mxu0 %v740
    %v779 = vpop.f32.mrb[0].mxu0
    %v780 = vadd.f32 %v183, %v779
    %v781 = vpop.f32.mrb[0].mxu0
    %v782 = vpop.f32.mrb[0].mxu0
    %v783 = vpop.f32.mrb[0].mxu0
    %784 = vdwg.mxu0
    %785 = vrot.lane.b32.xlu0 %v193, 112
    %v786 = vpop.permute.xlu0 %785
    %787 = vrot.lane.b32.xlu0 %v195, 112
    %v788 = vpop.permute.xlu0 %787
    %v790 = vsel %vm196, %v786, 0
    %v793 = vsel %vm196, %v788, 0
    %795 = vmatprep.subr.bf16.mxu0 0
    %796 = vmatpush1.bf16.xpose.msra.mxu0 %v793
    %797 = vmatprep.subr.bf16.mxu0 0
    %798 = vmatpush1.bf16.xpose.msra.mxu0 0
    %799 = vmatprep.subr.bf16.mxu0 0
    %800 = vmatpush1.bf16.xpose.msra.mxu0 0
    %801 = vmatprep.subr.bf16.mxu0 0
    %802 = vmatpush1.bf16.xpose.msra.mxu0 0
    %803 = vmatprep.subr.bf16.mxu0 0
    %804 = vmatpush1.bf16.xpose.msra.mxu0 0
    %805 = vmatprep.subr.bf16.mxu0 0
    %806 = vmatpush1.bf16.xpose.msra.mxu0 0
    %807 = vmatprep.subr.bf16.mxu0 0
    %808 = vmatpush1.bf16.xpose.msra.mxu0 0
    %809 = vmatprep.subr.bf16.mxu0 0
    %810 = vmatpush1.bf16.xpose.msra.mxu0 0
    %811 = vmatprep.subr.bf16.mxu0 0
    %812 = vmatpush1.bf16.xpose.msra.mxu0 0
    %813 = vmatprep.subr.bf16.mxu0 0
    %814 = vmatpush1.bf16.xpose.msra.mxu0 0
    %815 = vmatprep.subr.bf16.mxu0 0
    %816 = vmatpush1.bf16.xpose.msra.mxu0 0
    %817 = vmatprep.subr.bf16.mxu0 0
    %818 = vmatpush1.bf16.xpose.msra.mxu0 0
    %819 = vmatprep.subr.bf16.mxu0 0
    %820 = vmatpush1.bf16.xpose.msra.mxu0 0
    %821 = vmatprep.subr.bf16.mxu0 0
    %822 = vmatpush1.bf16.xpose.msra.mxu0 0
    %823 = vmatprep.subr.bf16.mxu0 0
    %824 = vmatpush1.bf16.xpose.msra.mxu0 0
    %825 = vmatprep.subr.bf16.mxu0 0
    %826 = vmatpush1.bf16.xpose.msra.mxu0 0
    %827 = vmatprep.mubr.bf16.mxu0 0
    %828 = vmatmul.mubr.bf16.gmra.mrb[0].mxu0 %v790
    %v829 = vpop.f32.mrb[0].mxu0
    %v830 = vadd.f32 %v184, %v829
    %v831 = vpop.f32.mrb[0].mxu0
    %v832 = vpop.f32.mrb[0].mxu0
    %v833 = vpop.f32.mrb[0].mxu0
    %834 = vdwg.mxu0
    %v835 = vsel %vm196, %v780, -inf
    %836 = vmax.xlane.f32.xlu0 %v835
    %v837 = vpop.xlane.xlu0 %836
    %v838 = vsel %vm196, %v830, -inf
    %839 = vmax.xlane.f32.xlu0 %v838
    %v840 = vpop.xlane.xlu0 %839
    %v841 = vsub.f32 %v780, %v837
    %v842 = vsub.f32 %v830, %v840
    %v843 = vmul.f32 %v841, 1.442695
    %v844 = vpow.pop %v843
    %v845 = vmul.f32 %v842, 1.442695
    %v846 = vpow.pop %v845
    %v847 = vsel %vm196, %v844, 0.0
    %848 = vadd.xlane.f32.xlu0 %v847
    %v849 = vpop.xlane.xlu0 %848
    %v850 = vsel %vm196, %v846, 0.0
    %851 = vadd.xlane.f32.xlu0 %v850
    %v852 = vpop.xlane.xlu0 %851
    %v853 = vrcp.pop %v849
    %v854 = vmul.f32 %v844, %v853
    %v855 = vrcp.pop %v852
    %v856 = vmul.f32 %v846, %v855
    %s857 = scalar_lea.vmem [#allocation2], 16
    %858 = vst.msk [vmem:[%s857] sm:$0xff] %vm196, %v854
    %859 = vst.msk [vmem:[%s857 + $0x20] sm:$0xff] %vm196, %v856
    %v860 = vpack.c.bf16 %v854, %v854
    %v861 = vpack.c.bf16 %v856, %v856
    %862 = vrot.lane.b32.xlu0 %v194, 80
    %v863 = vpop.permute.xlu0 %862
    %v865 = vsel %vm196, %v860, 0
    %v868 = vsel %vm321, %v863, 0
    %870 = vmatprep.subr.bf16.mxu0 0
    %871 = vmatpush1.bf16.msra.mxu0 %v868
    %872 = vmatprep.subr.bf16.mxu0 0
    %873 = vmatpush1.bf16.msra.mxu0 0
    %874 = vmatprep.subr.bf16.mxu0 0
    %875 = vmatpush1.bf16.msra.mxu0 0
    %876 = vmatprep.subr.bf16.mxu0 0
    %877 = vmatpush1.bf16.msra.mxu0 0
    %878 = vmatprep.subr.bf16.mxu0 0
    %879 = vmatpush1.bf16.msra.mxu0 0
    %880 = vmatprep.subr.bf16.mxu0 0
    %881 = vmatpush1.bf16.msra.mxu0 0
    %882 = vmatprep.subr.bf16.mxu0 0
    %883 = vmatpush1.bf16.msra.mxu0 0
    %884 = vmatprep.subr.bf16.mxu0 0
    %885 = vmatpush1.bf16.msra.mxu0 0
    %886 = vmatprep.subr.bf16.mxu0 0
    %887 = vmatpush1.bf16.msra.mxu0 0
    %888 = vmatprep.subr.bf16.mxu0 0
    %889 = vmatpush1.bf16.msra.mxu0 0
    %890 = vmatprep.subr.bf16.mxu0 0
    %891 = vmatpush1.bf16.msra.mxu0 0
    %892 = vmatprep.subr.bf16.mxu0 0
    %893 = vmatpush1.bf16.msra.mxu0 0
    %894 = vmatprep.subr.bf16.mxu0 0
    %895 = vmatpush1.bf16.msra.mxu0 0
    %896 = vmatprep.subr.bf16.mxu0 0
    %897 = vmatpush1.bf16.msra.mxu0 0
    %898 = vmatprep.subr.bf16.mxu0 0
    %899 = vmatpush1.bf16.msra.mxu0 0
    %900 = vmatprep.subr.bf16.mxu0 0
    %901 = vmatpush1.bf16.msra.mxu0 0
    %902 = vmatprep.mubr.bf16.mxu0 0
    %903 = vmatmul.mubr.bf16.gmra.mrb[0].mxu0 %v865
    %v904 = vpop.f32.mrb[0].mxu0
    %v905 = vadd.f32 0.0, %v904
    %v906 = vpop.f32.mrb[0].mxu0
    %v907 = vpop.f32.mrb[0].mxu0
    %v908 = vpop.f32.mrb[0].mxu0
    %909 = vdwg.mxu0
    %910 = vrot.lane.b32.xlu0 %v195, 80
    %v911 = vpop.permute.xlu0 %910
    %v913 = vsel %vm196, %v861, 0
    %v916 = vsel %vm321, %v911, 0
    %918 = vmatprep.subr.bf16.mxu0 0
    %919 = vmatpush1.bf16.msra.mxu0 %v916
    %920 = vmatprep.subr.bf16.mxu0 0
    %921 = vmatpush1.bf16.msra.mxu0 0
    %922 = vmatprep.subr.bf16.mxu0 0
    %923 = vmatpush1.bf16.msra.mxu0 0
    %924 = vmatprep.subr.bf16.mxu0 0
    %925 = vmatpush1.bf16.msra.mxu0 0
    %926 = vmatprep.subr.bf16.mxu0 0
    %927 = vmatpush1.bf16.msra.mxu0 0
    %928 = vmatprep.subr.bf16.mxu0 0
    %929 = vmatpush1.bf16.msra.mxu0 0
    %930 = vmatprep.subr.bf16.mxu0 0
    %931 = vmatpush1.bf16.msra.mxu0 0
    %932 = vmatprep.subr.bf16.mxu0 0
    %933 = vmatpush1.bf16.msra.mxu0 0
    %934 = vmatprep.subr.bf16.mxu0 0
    %935 = vmatpush1.bf16.msra.mxu0 0
    %936 = vmatprep.subr.bf16.mxu0 0
    %937 = vmatpush1.bf16.msra.mxu0 0
    %938 = vmatprep.subr.bf16.mxu0 0
    %939 = vmatpush1.bf16.msra.mxu0 0
    %940 = vmatprep.subr.bf16.mxu0 0
    %941 = vmatpush1.bf16.msra.mxu0 0
    %942 = vmatprep.subr.bf16.mxu0 0
    %943 = vmatpush1.bf16.msra.mxu0 0
    %944 = vmatprep.subr.bf16.mxu0 0
    %945 = vmatpush1.bf16.msra.mxu0 0
    %946 = vmatprep.subr.bf16.mxu0 0
    %947 = vmatpush1.bf16.msra.mxu0 0
    %948 = vmatprep.subr.bf16.mxu0 0
    %949 = vmatpush1.bf16.msra.mxu0 0
    %950 = vmatprep.mubr.bf16.mxu0 0
    %951 = vmatmul.mubr.bf16.gmra.mrb[0].mxu0 %v913
    %v952 = vpop.f32.mrb[0].mxu0
    %v953 = vadd.f32 0.0, %v952
    %v954 = vpop.f32.mrb[0].mxu0
    %v955 = vpop.f32.mrb[0].mxu0
    %v956 = vpop.f32.mrb[0].mxu0
    %957 = vdwg.mxu0
    %v958 = vpack.c.bf16 %v953, %v905
    %v960 = vsel %vm196, %v958, 0
    %v963 = vsel %vm321, %v187, 0
    %965 = vmatprep.subr.bf16.mxu0 0
    %966 = vmatpush1.bf16.msra.mxu0 %v963
    %967 = vmatprep.subr.bf16.mxu0 0
    %968 = vmatpush1.bf16.msra.mxu0 0
    %969 = vmatprep.subr.bf16.mxu0 0
    %970 = vmatpush1.bf16.msra.mxu0 0
    %971 = vmatprep.subr.bf16.mxu0 0
    %972 = vmatpush1.bf16.msra.mxu0 0
    %973 = vmatprep.subr.bf16.mxu0 0
    %974 = vmatpush1.bf16.msra.mxu0 0
    %975 = vmatprep.subr.bf16.mxu0 0
    %976 = vmatpush1.bf16.msra.mxu0 0
    %977 = vmatprep.subr.bf16.mxu0 0
    %978 = vmatpush1.bf16.msra.mxu0 0
    %979 = vmatprep.subr.bf16.mxu0 0
    %980 = vmatpush1.bf16.msra.mxu0 0
    %981 = vmatprep.subr.bf16.mxu0 0
    %982 = vmatpush1.bf16.msra.mxu0 0
    %983 = vmatprep.subr.bf16.mxu0 0
    %984 = vmatpush1.bf16.msra.mxu0 0
    %985 = vmatprep.subr.bf16.mxu0 0
    %986 = vmatpush1.bf16.msra.mxu0 0
    %987 = vmatprep.subr.bf16.mxu0 0
    %988 = vmatpush1.bf16.msra.mxu0 0
    %989 = vmatprep.subr.bf16.mxu0 0
    %990 = vmatpush1.bf16.msra.mxu0 0
    %991 = vmatprep.subr.bf16.mxu0 0
    %992 = vmatpush1.bf16.msra.mxu0 0
    %993 = vmatprep.subr.bf16.mxu0 0
    %994 = vmatpush1.bf16.msra.mxu0 0
    %995 = vmatprep.subr.bf16.mxu0 0
    %996 = vmatpush1.bf16.msra.mxu0 0
    %997 = vmatprep.mubr.bf16.mxu0 0
    %998 = vmatmul.mubr.bf16.gmra.mrb[0].mxu0 %v960
    %v999 = vpop.f32.mrb[0].mxu0
    %v1000 = vadd.f32 0.0, %v999
    %v1001 = vpop.f32.mrb[0].mxu0
    %v1002 = vpop.f32.mrb[0].mxu0
    %v1003 = vadd.f32 0.0, %v1002
    %v1004 = vpop.f32.mrb[0].mxu0
    %1005 = vdwg.mxu0
    %v1006 = vadd.f32 %v729, %v1000
    %v1007 = vadd.f32 %v732, %v1003
    %1008 = vrot.lane.b32.xlu0 %v192, 104
    %v1009 = vpop.permute.xlu0 %1008
    %1010 = vrot.lane.b32.xlu0 %v194, 104
    %v1011 = vpop.permute.xlu0 %1010
    %v1013 = vsel %vm196, %v1009, 0
    %v1016 = vsel %vm196, %v1011, 0
    %1018 = vmatprep.subr.bf16.mxu0 0
    %1019 = vmatpush1.bf16.xpose.msra.mxu0 %v1016
    %1020 = vmatprep.subr.bf16.mxu0 0
    %1021 = vmatpush1.bf16.xpose.msra.mxu0 0
    %1022 = vmatprep.subr.bf16.mxu0 0
    %1023 = vmatpush1.bf16.xpose.msra.mxu0 0
    %1024 = vmatprep.subr.bf16.mxu0 0
    %1025 = vmatpush1.bf16.xpose.msra.mxu0 0
    %1026 = vmatprep.subr.bf16.mxu0 0
    %1027 = vmatpush1.bf16.xpose.msra.mxu0 0
    %1028 = vmatprep.subr.bf16.mxu0 0
    %1029 = vmatpush1.bf16.xpose.msra.mxu0 0
    %1030 = vmatprep.subr.bf16.mxu0 0
    %1031 = vmatpush1.bf16.xpose.msra.mxu0 0
    %1032 = vmatprep.subr.bf16.mxu0 0
    %1033 = vmatpush1.bf16.xpose.msra.mxu0 0
    %1034 = vmatprep.subr.bf16.mxu0 0
    %1035 = vmatpush1.bf16.xpose.msra.mxu0 0
    %1036 = vmatprep.subr.bf16.mxu0 0
    %1037 = vmatpush1.bf16.xpose.msra.mxu0 0
    %1038 = vmatprep.subr.bf16.mxu0 0
    %1039 = vmatpush1.bf16.xpose.msra.mxu0 0
    %1040 = vmatprep.subr.bf16.mxu0 0
    %1041 = vmatpush1.bf16.xpose.msra.mxu0 0
    %1042 = vmatprep.subr.bf16.mxu0 0
    %1043 = vmatpush1.bf16.xpose.msra.mxu0 0
    %1044 = vmatprep.subr.bf16.mxu0 0
    %1045 = vmatpush1.bf16.xpose.msra.mxu0 0
    %1046 = vmatprep.subr.bf16.mxu0 0
    %1047 = vmatpush1.bf16.xpose.msra.mxu0 0
    %1048 = vmatprep.subr.bf16.mxu0 0
    %1049 = vmatpush1.bf16.xpose.msra.mxu0 0
    %1050 = vmatprep.mubr.bf16.mxu0 0
    %1051 = vmatmul.mubr.bf16.gmra.mrb[0].mxu0 %v1013
    %v1052 = vpop.f32.mrb[0].mxu0
    %v1053 = vadd.f32 %v183, %v1052
    %v1054 = vpop.f32.mrb[0].mxu0
    %v1055 = vpop.f32.mrb[0].mxu0
    %v1056 = vpop.f32.mrb[0].mxu0
    %1057 = vdwg.mxu0
    %1058 = vrot.lane.b32.xlu0 %v193, 104
    %v1059 = vpop.permute.xlu0 %1058
    %1060 = vrot.lane.b32.xlu0 %v195, 104
    %v1061 = vpop.permute.xlu0 %1060
    %v1063 = vsel %vm196, %v1059, 0
    %v1066 = vsel %vm196, %v1061, 0
    %1068 = vmatprep.subr.bf16.mxu0 0
    %1069 = vmatpush1.bf16.xpose.msra.mxu0 %v1066
    %1070 = vmatprep.subr.bf16.mxu0 0
    %1071 = vmatpush1.bf16.xpose.msra.mxu0 0
    %1072 = vmatprep.subr.bf16.mxu0 0
    %1073 = vmatpush1.bf16.xpose.msra.mxu0 0
    %1074 = vmatprep.subr.bf16.mxu0 0
    %1075 = vmatpush1.bf16.xpose.msra.mxu0 0
    %1076 = vmatprep.subr.bf16.mxu0 0
    %1077 = vmatpush1.bf16.xpose.msra.mxu0 0
    %1078 = vmatprep.subr.bf16.mxu0 0
    %1079 = vmatpush1.bf16.xpose.msra.mxu0 0
    %1080 = vmatprep.subr.bf16.mxu0 0
    %1081 = vmatpush1.bf16.xpose.msra.mxu0 0
    %1082 = vmatprep.subr.bf16.mxu0 0
    %1083 = vmatpush1.bf16.xpose.msra.mxu0 0
    %1084 = vmatprep.subr.bf16.mxu0 0
    %1085 = vmatpush1.bf16.xpose.msra.mxu0 0
    %1086 = vmatprep.subr.bf16.mxu0 0
    %1087 = vmatpush1.bf16.xpose.msra.mxu0 0
    %1088 = vmatprep.subr.bf16.mxu0 0
    %1089 = vmatpush1.bf16.xpose.msra.mxu0 0
    %1090 = vmatprep.subr.bf16.mxu0 0
    %1091 = vmatpush1.bf16.xpose.msra.mxu0 0
    %1092 = vmatprep.subr.bf16.mxu0 0
    %1093 = vmatpush1.bf16.xpose.msra.mxu0 0
    %1094 = vmatprep.subr.bf16.mxu0 0
    %1095 = vmatpush1.bf16.xpose.msra.mxu0 0
    %1096 = vmatprep.subr.bf16.mxu0 0
    %1097 = vmatpush1.bf16.xpose.msra.mxu0 0
    %1098 = vmatprep.subr.bf16.mxu0 0
    %1099 = vmatpush1.bf16.xpose.msra.mxu0 0
    %1100 = vmatprep.mubr.bf16.mxu0 0
    %1101 = vmatmul.mubr.bf16.gmra.mrb[0].mxu0 %v1063
    %v1102 = vpop.f32.mrb[0].mxu0
    %v1103 = vadd.f32 %v184, %v1102
    %v1104 = vpop.f32.mrb[0].mxu0
    %v1105 = vpop.f32.mrb[0].mxu0
    %v1106 = vpop.f32.mrb[0].mxu0
    %1107 = vdwg.mxu0
    %v1108 = vsel %vm196, %v1053, -inf
    %1109 = vmax.xlane.f32.xlu0 %v1108
    %v1110 = vpop.xlane.xlu0 %1109
    %v1111 = vsel %vm196, %v1103, -inf
    %1112 = vmax.xlane.f32.xlu0 %v1111
    %v1113 = vpop.xlane.xlu0 %1112
    %v1114 = vsub.f32 %v1053, %v1110
    %v1115 = vsub.f32 %v1103, %v1113
    %v1116 = vmul.f32 %v1114, 1.442695
    %v1117 = vpow.pop %v1116
    %v1118 = vmul.f32 %v1115, 1.442695
    %v1119 = vpow.pop %v1118
    %v1120 = vsel %vm196, %v1117, 0.0
    %1121 = vadd.xlane.f32.xlu0 %v1120
    %v1122 = vpop.xlane.xlu0 %1121
    %v1123 = vsel %vm196, %v1119, 0.0
    %1124 = vadd.xlane.f32.xlu0 %v1123
    %v1125 = vpop.xlane.xlu0 %1124
    %v1126 = vrcp.pop %v1122
    %v1127 = vmul.f32 %v1117, %v1126
    %v1128 = vrcp.pop %v1125
    %v1129 = vmul.f32 %v1119, %v1128
    %s1130 = scalar_lea.vmem [#allocation2], 24
    %1131 = vst.msk [vmem:[%s1130] sm:$0xff] %vm196, %v1127
    %1132 = vst.msk [vmem:[%s1130 + $0x20] sm:$0xff] %vm196, %v1129
    %v1133 = vpack.c.bf16 %v1127, %v1127
    %v1134 = vpack.c.bf16 %v1129, %v1129
    %1135 = vrot.lane.b32.xlu0 %v194, 72
    %v1136 = vpop.permute.xlu0 %1135
    %v1138 = vsel %vm196, %v1133, 0
    %v1141 = vsel %vm321, %v1136, 0
    %1143 = vmatprep.subr.bf16.mxu0 0
    %1144 = vmatpush1.bf16.msra.mxu0 %v1141
    %1145 = vmatprep.subr.bf16.mxu0 0
    %1146 = vmatpush1.bf16.msra.mxu0 0
    %1147 = vmatprep.subr.bf16.mxu0 0
    %1148 = vmatpush1.bf16.msra.mxu0 0
    %1149 = vmatprep.subr.bf16.mxu0 0
    %1150 = vmatpush1.bf16.msra.mxu0 0
    %1151 = vmatprep.subr.bf16.mxu0 0
    %1152 = vmatpush1.bf16.msra.mxu0 0
    %1153 = vmatprep.subr.bf16.mxu0 0
    %1154 = vmatpush1.bf16.msra.mxu0 0
    %1155 = vmatprep.subr.bf16.mxu0 0
    %1156 = vmatpush1.bf16.msra.mxu0 0
    %1157 = vmatprep.subr.bf16.mxu0 0
    %1158 = vmatpush1.bf16.msra.mxu0 0
    %1159 = vmatprep.subr.bf16.mxu0 0
    %1160 = vmatpush1.bf16.msra.mxu0 0
    %1161 = vmatprep.subr.bf16.mxu0 0
    %1162 = vmatpush1.bf16.msra.mxu0 0
    %1163 = vmatprep.subr.bf16.mxu0 0
    %1164 = vmatpush1.bf16.msra.mxu0 0
    %1165 = vmatprep.subr.bf16.mxu0 0
    %1166 = vmatpush1.bf16.msra.mxu0 0
    %1167 = vmatprep.subr.bf16.mxu0 0
    %1168 = vmatpush1.bf16.msra.mxu0 0
    %1169 = vmatprep.subr.bf16.mxu0 0
    %1170 = vmatpush1.bf16.msra.mxu0 0
    %1171 = vmatprep.subr.bf16.mxu0 0
    %1172 = vmatpush1.bf16.msra.mxu0 0
    %1173 = vmatprep.subr.bf16.mxu0 0
    %1174 = vmatpush1.bf16.msra.mxu0 0
    %1175 = vmatprep.mubr.bf16.mxu0 0
    %1176 = vmatmul.mubr.bf16.gmra.mrb[0].mxu0 %v1138
    %v1177 = vpop.f32.mrb[0].mxu0
    %v1178 = vadd.f32 0.0, %v1177
    %v1179 = vpop.f32.mrb[0].mxu0
    %v1180 = vpop.f32.mrb[0].mxu0
    %v1181 = vpop.f32.mrb[0].mxu0
    %1182 = vdwg.mxu0
    %1183 = vrot.lane.b32.xlu0 %v195, 72
    %v1184 = vpop.permute.xlu0 %1183
    %v1186 = vsel %vm196, %v1134, 0
    %v1189 = vsel %vm321, %v1184, 0
    %1191 = vmatprep.subr.bf16.mxu0 0
    %1192 = vmatpush1.bf16.msra.mxu0 %v1189
    %1193 = vmatprep.subr.bf16.mxu0 0
    %1194 = vmatpush1.bf16.msra.mxu0 0
    %1195 = vmatprep.subr.bf16.mxu0 0
    %1196 = vmatpush1.bf16.msra.mxu0 0
    %1197 = vmatprep.subr.bf16.mxu0 0
    %1198 = vmatpush1.bf16.msra.mxu0 0
    %1199 = vmatprep.subr.bf16.mxu0 0
    %1200 = vmatpush1.bf16.msra.mxu0 0
    %1201 = vmatprep.subr.bf16.mxu0 0
    %1202 = vmatpush1.bf16.msra.mxu0 0
    %1203 = vmatprep.subr.bf16.mxu0 0
    %1204 = vmatpush1.bf16.msra.mxu0 0
    %1205 = vmatprep.subr.bf16.mxu0 0
    %1206 = vmatpush1.bf16.msra.mxu0 0
    %1207 = vmatprep.subr.bf16.mxu0 0
    %1208 = vmatpush1.bf16.msra.mxu0 0
    %1209 = vmatprep.subr.bf16.mxu0 0
    %1210 = vmatpush1.bf16.msra.mxu0 0
    %1211 = vmatprep.subr.bf16.mxu0 0
    %1212 = vmatpush1.bf16.msra.mxu0 0
    %1213 = vmatprep.subr.bf16.mxu0 0
    %1214 = vmatpush1.bf16.msra.mxu0 0
    %1215 = vmatprep.subr.bf16.mxu0 0
    %1216 = vmatpush1.bf16.msra.mxu0 0
    %1217 = vmatprep.subr.bf16.mxu0 0
    %1218 = vmatpush1.bf16.msra.mxu0 0
    %1219 = vmatprep.subr.bf16.mxu0 0
    %1220 = vmatpush1.bf16.msra.mxu0 0
    %1221 = vmatprep.subr.bf16.mxu0 0
    %1222 = vmatpush1.bf16.msra.mxu0 0
    %1223 = vmatprep.mubr.bf16.mxu0 0
    %1224 = vmatmul.mubr.bf16.gmra.mrb[0].mxu0 %v1186
    %v1225 = vpop.f32.mrb[0].mxu0
    %v1226 = vadd.f32 0.0, %v1225
    %v1227 = vpop.f32.mrb[0].mxu0
    %v1228 = vpop.f32.mrb[0].mxu0
    %v1229 = vpop.f32.mrb[0].mxu0
    %1230 = vdwg.mxu0
    %v1231 = vpack.c.bf16 %v1226, %v1178
    %v1233 = vsel %vm196, %v1231, 0
    %v1236 = vsel %vm321, %v188, 0
    %1238 = vmatprep.subr.bf16.mxu0 0
    %1239 = vmatpush1.bf16.msra.mxu0 %v1236
    %1240 = vmatprep.subr.bf16.mxu0 0
    %1241 = vmatpush1.bf16.msra.mxu0 0
    %1242 = vmatprep.subr.bf16.mxu0 0
    %1243 = vmatpush1.bf16.msra.mxu0 0
    %1244 = vmatprep.subr.bf16.mxu0 0
    %1245 = vmatpush1.bf16.msra.mxu0 0
    %1246 = vmatprep.subr.bf16.mxu0 0
    %1247 = vmatpush1.bf16.msra.mxu0 0
    %1248 = vmatprep.subr.bf16.mxu0 0
    %1249 = vmatpush1.bf16.msra.mxu0 0
    %1250 = vmatprep.subr.bf16.mxu0 0
    %1251 = vmatpush1.bf16.msra.mxu0 0
    %1252 = vmatprep.subr.bf16.mxu0 0
    %1253 = vmatpush1.bf16.msra.mxu0 0
    %1254 = vmatprep.subr.bf16.mxu0 0
    %1255 = vmatpush1.bf16.msra.mxu0 0
    %1256 = vmatprep.subr.bf16.mxu0 0
    %1257 = vmatpush1.bf16.msra.mxu0 0
    %1258 = vmatprep.subr.bf16.mxu0 0
    %1259 = vmatpush1.bf16.msra.mxu0 0
    %1260 = vmatprep.subr.bf16.mxu0 0
    %1261 = vmatpush1.bf16.msra.mxu0 0
    %1262 = vmatprep.subr.bf16.mxu0 0
    %1263 = vmatpush1.bf16.msra.mxu0 0
    %1264 = vmatprep.subr.bf16.mxu0 0
    %1265 = vmatpush1.bf16.msra.mxu0 0
    %1266 = vmatprep.subr.bf16.mxu0 0
    %1267 = vmatpush1.bf16.msra.mxu0 0
    %1268 = vmatprep.subr.bf16.mxu0 0
    %1269 = vmatpush1.bf16.msra.mxu0 0
    %1270 = vmatprep.mubr.bf16.mxu0 0
    %1271 = vmatmul.mubr.bf16.gmra.mrb[0].mxu0 %v1233
    %v1272 = vpop.f32.mrb[0].mxu0
    %v1273 = vadd.f32 0.0, %v1272
    %v1274 = vpop.f32.mrb[0].mxu0
    %v1275 = vpop.f32.mrb[0].mxu0
    %v1276 = vadd.f32 0.0, %v1275
    %v1277 = vpop.f32.mrb[0].mxu0
    %1278 = vdwg.mxu0
    %v1279 = vadd.f32 %v1006, %v1273
    %v1280 = vadd.f32 %v1007, %v1276
    %v1282 = vlaneseq
    %v1283 = vshrl.u32 %v1282, 7
    %v1284 = vsub.s32 0, %v1283
    %v1285 = vrot.slane %v189, %v1284
    %v1287 = vadd.f32 %v1279, %v1285
    %v1288 = vadd.f32 %v1280, %v1285
    %v1289 = vadd.f32 %v1287, %v42
    %v1290 = vadd.f32 %v1288, %v43
    %v1291 = vsel %vm70, %v1289, 0.0
    %1292 = vadd.xlane.f32.xlu0 %v1291
    %v1293 = vpop.xlane.xlu0 %1292
    %v1294 = vsel %vm70, %v1290, 0.0
    %1295 = vadd.xlane.f32.xlu0 %v1294
    %v1296 = vpop.xlane.xlu0 %1295
    %v1297 = vrcp.pop 32.0
    %v1298 = vmul.f32 %v1293, %v1297
    %v1299 = vmul.f32 %v1296, %v1297
    %v1300 = vsub.f32 %v1289, %v1298
    %v1301 = vsub.f32 %v1290, %v1299
    %v1302 = vmul.f32 %v1300, %v1300
    %v1303 = vmul.f32 %v1301, %v1301
    %v1304 = vsel %vm70, %v1302, 0.0
    %1305 = vadd.xlane.f32.xlu0 %v1304
    %v1306 = vpop.xlane.xlu0 %1305
    %v1307 = vsel %vm70, %v1303, 0.0
    %1308 = vadd.xlane.f32.xlu0 %v1307
    %v1309 = vpop.xlane.xlu0 %1308
    %v1310 = vmul.f32 %v1306, %v1297
    %v1311 = vmul.f32 %v1309, %v1297
    %v1312 = vadd.f32 %v1310, 1e-05
    %v1313 = vadd.f32 %v1311, 1e-05
    %v1314 = vrsqrt.pop %v1312
    %v1315 = vrsqrt.pop %v1313
    %v1316 = vmul.f32 %v1300, %v1314
    %v1317 = vmul.f32 %v1301, %v1315
    %v1319 = vlaneseq
    %v1320 = vshrl.u32 %v1319, 7
    %v1321 = vsub.s32 0, %v1320
    %v1322 = vrot.slane %v190, %v1321
    %v1324 = vmul.f32 %v1316, %v1322
    %v1325 = vmul.f32 %v1317, %v1322
    %v1327 = vlaneseq
    %v1328 = vshrl.u32 %v1327, 7
    %v1329 = vsub.s32 0, %v1328
    %v1330 = vrot.slane %v191, %v1329
    %v1332 = vadd.f32 %v1324, %v1330
    %v1333 = vadd.f32 %v1325, %v1330
    %1334 = vst.msk [vmem:[%s11] sm:$0xff] %vm70, %v1332
    %1335 = vst.msk [vmem:[%s11 + $0x8] sm:$0xff] %vm70, %v1333
    // Predicated region
    $region46: #{decoder_forward.7} parent=1 // pred_check
      _
    $region47: #{decoder_forward.7} parent=1 // pred_check_branch
      %1337 = sbr.rel (0) target = $region49
    $region48: #{decoder_forward.7} parent=1 // pred_region
      _
    $region49: #{decoder_forward.7} parent=1 // pred_fallthru
      _
    // Predicated region
    $region50: #{decoder_forward.7} parent=1 // pred_check
      _
    $region51: #{decoder_forward.7} parent=1 // pred_check_branch
      %1339 = sbr.rel (0) target = $region53
    $region52: #{decoder_forward.7} parent=1 // pred_region
      %s1341 = ssub.s32 1024, 1024
      %1342 = vsyncadd [#allocation3], %s1341
      %s1343 = sshll.u32 [#allocation2], 4
      %s1344 = int_to_ptr.vmem [resolvable:$true] %s1343
      %1349 = dma.vmem_to_hbm [thread:$0]  %s1344, 1024, %s12, [#allocation3], 128, 128, 8
    $region53: #{decoder_forward.7} parent=1 // pred_fallthru
      _
    // Predicated region
    $region54: #{decoder_forward.7} parent=1 // pred_check
      _
    $region55: #{decoder_forward.7} parent=1 // pred_check_branch
      %1351 = sbr.rel (0) target = $region57
    $region56: #{decoder_forward.7} parent=1 // pred_region
      _
    $region57: #{decoder_forward.7} parent=1 // pred_fallthru
      _
    // Predicated region
    $region58: #{decoder_forward.7} parent=1 // pred_check
      _
    $region59: #{decoder_forward.7} parent=1 // pred_check_branch
      %1353 = sbr.rel (0) target = $region61
    $region60: #{decoder_forward.7} parent=1 // pred_region
      %1354 = dma.done [#allocation3], 1024
    $region61: #{decoder_forward.7} parent=1 // pred_fallthru
      _
    %1355 = vsyncpa [#allocation3], 1

</llo_original>
